<compile_context>
chip_gen: v7x
topology: tpu7x:2x2x1
jax: 0.10.0
libtpu: 0.0.40
codegen_flags: <defaults>
</compile_context>

<pallas_src>
import jax
import jax.numpy as jnp
from jax import lax
from jax.experimental import pallas as pl
from jax.experimental.pallas import tpu as pltpu


# ----------------------------------------------------------------------------
# Pallas kernel
# ----------------------------------------------------------------------------
def attention_sent_rnn_kernel(
    x_ref,            # (T, Bt, D)   time-major sentence vectors (batch tile)
    h0_ref,           # (2, Bt, H)   initial hidden (fwd, bwd)
    wih_ref,          # (D, 6H)      [W_ih_fwd | W_ih_bwd], pre-transposed
    bih_ref,          # (1, 6H)      [b_ih_fwd | b_ih_bwd]
    whh_f_ref,        # (H, 3H)
    bhh_f_ref,        # (1, 3H)
    whh_b_ref,        # (H, 3H)
    bhh_b_ref,        # (1, 3H)
    w_sent_ref,       # (2H, 2H)
    b_sent_ref,       # (1, 2H)
    proj_ref,         # (1, 2H)      context vector as a row
    doc_ref,          # out: (Bt, 2H)
    state_ref,        # out: (2, Bt, H)
    attn_ref,         # out: (Bt, T)
    gxf_ref,          # scratch: (T, Bt, 3H) precomputed input gates, forward dir
    gxb_ref,          # scratch: (T, Bt, 3H) precomputed input gates, backward dir
    out_ref,          # scratch: (T, Bt, 2H) fused bi-GRU outputs
):
    T, Bt, D = x_ref.shape
    H = h0_ref.shape[2]
    H2, H3 = 2 * H, 3 * H
    f32 = jnp.float32

    # ---- (1) hoisted input-side gate matmul, both directions, one MXU call ----
    x2d = x_ref[...].reshape(T * Bt, D)
    gx_all = jnp.dot(x2d, wih_ref[...], preferred_element_type=f32) + bih_ref[...]
    gxf_ref[...] = gx_all[:, 0:H3].reshape(T, Bt, H3)
    gxb_ref[...] = gx_all[:, H3:2 * H3].reshape(T, Bt, H3)

    # ---- (2) loop-invariant hoists (JAX does not CSE broadcast_in_dim) --------
    whh_f = whh_f_ref[...]
    whh_b = whh_b_ref[...]
    bhh_f = jnp.broadcast_to(bhh_f_ref[...], (Bt, H3))
    bhh_b = jnp.broadcast_to(bhh_b_ref[...], (Bt, H3))

    def cell(gx, gh, h_prev):
        # PyTorch GRU gate semantics (r, z, n ordering; b_hn stays inside r*(...)).
        r = jax.nn.sigmoid(gx[:, 0:H] + gh[:, 0:H])
        z = jax.nn.sigmoid(gx[:, H:H2] + gh[:, H:H2])
        n = jnp.tanh(gx[:, H2:H3] + r * gh[:, H2:H3])
        return (1.0 - z) * n + z * h_prev

    # ---- (3) fused fwd/bwd recurrence: two independent chains per iteration ---
    def step(s, carry):
        h_f, h_b = carry
        tb = T - 1 - s
        gh_f = jnp.dot(h_f, whh_f, preferred_element_type=f32) + bhh_f
        gh_b = jnp.dot(h_b, whh_b, preferred_element_type=f32) + bhh_b
        h_f = cell(gxf_ref[s], gh_f, h_f)
        h_b = cell(gxb_ref[tb], gh_b, h_b)
        out_ref[s, :, pl.ds(0, H)] = h_f          # fused scratch: no concat later
        out_ref[tb, :, pl.ds(H, H)] = h_b
        return (h_f, h_b)

    unroll = True if T <= 32 else False
    h_f, h_b = lax.fori_loop(0, T, step, (h0_ref[0], h0_ref[1]), unroll=unroll)

    state_ref[0] = h_f
    state_ref[1] = h_b

    # ---- (4) attention: tanh-linear, lane-reduce context score, (B,T) softmax -
    out = out_ref[...]                                            # (T, Bt, 2H) f32
    out_mm = out.astype(w_sent_ref.dtype)                         # bf16 on v6e/v7x if requested
    u = jnp.tanh(
        jnp.dot(out_mm.reshape(T * Bt, H2), w_sent_ref[...],
                preferred_element_type=f32) + b_sent_ref[...])    # (T*Bt, 2H)
    # context projection as elementwise mul + lane reduce (avoids an N=1 matmul)
    scores_tb = jnp.sum(u.reshape(T, Bt, H2) * proj_ref[...], axis=-1)   # (T, Bt)
    scores_bt = scores_tb.T                                       # (Bt, T) lane-dense
    m = jnp.max(scores_bt, axis=-1, keepdims=True)
    e = jnp.exp(scores_bt - m)
    attn_bt = e / jnp.sum(e, axis=-1, keepdims=True)              # (Bt, T)
    attn_ref[...] = attn_bt

    doc_ref[...] = jnp.sum(attn_bt.T[:, :, None] * out, axis=0)   # (Bt, 2H)


# ----------------------------------------------------------------------------
# Wrapper
# ----------------------------------------------------------------------------
def _round_up(x, m):
    return ((x + m - 1) // m) * m


def attention_sent_rnn(sent_vectors, state_sent, params, *, matmul_dtype=jnp.float32):
    """sent_vectors: (B, T, D) float32, state_sent: (2, B, H) float32.

    matmul_dtype: set to jnp.bfloat16 on v6e/v7x for the two large batched matmuls
    (input-gate precompute and attention projection); re-validate tolerance if used.
    """
    B, T, D = sent_vectors.shape
    H = state_sent.shape[2]
    H2, H3 = 2 * H, 3 * H

    # Batch is the sublane axis everywhere: pad to a multiple of 8 and tile it so the
    # grid axis is 'parallel' (second TC on v7x) and per-step stores are sublane-dense.
    # Padded rows compute garbage independently and are sliced off below.
    b_tile = 64 if B > 64 else _round_up(B, 8)
    b_pad = _round_up(B, b_tile)
    n_tiles = b_pad // b_tile

    x_tm = jnp.transpose(sent_vectors, (1, 0, 2))                 # (T, B, D) time-major
    if b_pad != B:
        x_tm = jnp.pad(x_tm, ((0, 0), (0, b_pad - B), (0, 0)))
        h0 = jnp.pad(state_sent, ((0, 0), (0, b_pad - B), (0, 0)))
    else:
        h0 = state_sent
    x_tm = x_tm.astype(matmul_dtype)
    h0 = h0.astype(jnp.float32)

    # Pre-fuse / pre-transpose parameters.
    wih_all = jnp.concatenate([params["wih_f"], params["wih_b"]], axis=1).astype(matmul_dtype)
    bih_all = jnp.concatenate([params["bih_f"], params["bih_b"]], axis=1).astype(jnp.float32)
    whh_f = params["whh_f"].astype(jnp.float32)
    whh_b = params["whh_b"].astype(jnp.float32)
    bhh_f = params["bhh_f"].astype(jnp.float32)
    bhh_b = params["bhh_b"].astype(jnp.float32)
    w_sent = params["w_sent"].astype(matmul_dtype)
    b_sent = params["b_sent"].astype(jnp.float32)
    proj_row = jnp.transpose(params["proj"]).astype(jnp.float32)  # (1, 2H)

    inputs = (x_tm, h0, wih_all, bih_all, whh_f, bhh_f, whh_b, bhh_b,
              w_sent, b_sent, proj_row)

    def rep_spec(shape):
        n = len(shape)
        return pl.BlockSpec(shape, lambda b, n=n: (0,) * n)

    in_specs = [
        pl.BlockSpec((T, b_tile, D), lambda b: (0, b, 0)),        # x, batch-tiled
        pl.BlockSpec((2, b_tile, H), lambda b: (0, b, 0)),        # h0, batch-tiled
    ] + [rep_spec(a.shape) for a in inputs[2:]]                   # weights, replicated

    out_specs = (
        pl.BlockSpec((b_tile, H2), lambda b: (b, 0)),             # document vectors
        pl.BlockSpec((2, b_tile, H), lambda b: (0, b, 0)),        # final GRU states
        pl.BlockSpec((b_tile, T), lambda b: (b, 0)),              # attention weights
    )
    out_shape = (
        jax.ShapeDtypeStruct((b_pad, H2), jnp.float32),
        jax.ShapeDtypeStruct((2, b_pad, H), jnp.float32),
        jax.ShapeDtypeStruct((b_pad, T), jnp.float32),
    )
    scratch_shapes = [
        pltpu.VMEM((T, b_tile, H3), jnp.float32),                 # precomputed gx (fwd)
        pltpu.VMEM((T, b_tile, H3), jnp.float32),                 # precomputed gx (bwd)
        pltpu.VMEM((T, b_tile, H2), jnp.float32),                 # fused bi-GRU outputs
    ]

    doc, state, attn = pl.pallas_call(
        attention_sent_rnn_kernel,
        out_shape=out_shape,
        grid=(n_tiles,),
        in_specs=in_specs,
        out_specs=out_specs,
        scratch_shapes=scratch_shapes,
        compiler_params=pltpu.CompilerParams(
            dimension_semantics=("parallel",),        # batch tiles are independent
            vmem_limit_bytes=32 * 1024 * 1024,        # explicit budget (v7x 64 MiB aware)
        ),
    )(*inputs)

    return doc[:B], state[:, :B, :], attn[:B]


# ----------------------------------------------------------------------------
# Deterministic parameter init (shapes mirror nn.GRU + the attention Parameters)
# ----------------------------------------------------------------------------
def init_params(key, D, H):
    ks = jax.random.split(key, 11)
    s_gru = 1.0 / (H ** 0.5)

    def u(k, shape, s):
        return jax.random.uniform(k, shape, jnp.float32, -s, s)

    return {
        # forward-direction GRU (pre-transposed: x @ W)
        "wih_f": u(ks[0], (D, 3 * H), s_gru),
        "whh_f": u(ks[1], (H, 3 * H), s_gru),
        "bih_f": u(ks[2], (1, 3 * H), s_gru),
        "bhh_f": u(ks[3], (1, 3 * H), s_gru),
        # backward-direction GRU
        "wih_b": u(ks[4], (D, 3 * H), s_gru),
        "whh_b": u(ks[5], (H, 3 * H), s_gru),
        "bih_b": u(ks[6], (1, 3 * H), s_gru),
        "bhh_b": u(ks[7], (1, 3 * H), s_gru),
        # attention params (module uses uniform(-0.1, 0.1))
        "w_sent": u(ks[8], (2 * H, 2 * H), 0.1),
        "b_sent": u(ks[9], (1, 2 * H), 0.1),
        "proj": u(ks[10], (2 * H, 1), 0.1),
    }


# ----------------------------------------------------------------------------
# Pure-JAX reference (for correctness check)
# ----------------------------------------------------------------------------
def _gru_dir_ref(x, h0, w_ih, w_hh, b_ih, b_hh, reverse):
    H = h0.shape[-1]

    def step(h, x_t):
        gx = x_t @ w_ih + b_ih
        gh = h @ w_hh + b_hh
        r = jax.nn.sigmoid(gx[:, :H] + gh[:, :H])
        z = jax.nn.sigmoid(gx[:, H:2 * H] + gh[:, H:2 * H])
        n = jnp.tanh(gx[:, 2 * H:] + r * gh[:, 2 * H:])
        h_new = (1.0 - z) * n + z * h
        return h_new, h_new

    xs = jnp.swapaxes(x, 0, 1)
    if reverse:
        xs = xs[::-1]
    h_final, ys = lax.scan(step, h0, xs)
    if reverse:
        ys = ys[::-1]
    return jnp.swapaxes(ys, 0, 1), h_final


def reference_forward(x, h0, p):
    out_f, hf = _gru_dir_ref(x, h0[0], p["wih_f"], p["whh_f"], p["bih_f"], p["bhh_f"], False)
    out_b, hb = _gru_dir_ref(x, h0[1], p["wih_b"], p["whh_b"], p["bih_b"], p["bhh_b"], True)
    out = jnp.concatenate([out_f, out_b], axis=-1)               # (B, T, 2H)
    u = jnp.tanh(out @ p["w_sent"] + p["b_sent"])
    scores = (u @ p["proj"])[..., 0]                             # (B, T)
    attn = jax.nn.softmax(scores, axis=1)
    doc = jnp.sum(attn[:, :, None] * out, axis=1)                # (B, 2H)
    return doc, jnp.stack([hf, hb], 0), attn


# ----------------------------------------------------------------------------
if __name__ == "__main__":
    B, T, D, H = 2, 8, 32, 16   # batch, sentences-per-doc, word_result_hidden_num, sent_gru_hidden

    key = jax.random.PRNGKey(0)
    kx, kh, kp = jax.random.split(key, 3)
    sent_vectors = jax.random.normal(kx, (B, T, D), jnp.float32)
    state_sent = jax.random.normal(kh, (2, B, H), jnp.float32)
    params = init_params(kp, D, H)

    doc, state, attn = attention_sent_rnn(sent_vectors, state_sent, params)
    jax.block_until_ready((doc, state, attn))

    doc_r, state_r, attn_r = reference_forward(sent_vectors, state_sent, params)
    assert doc.shape == (B, 2 * H) and state.shape == (2, B, H) and attn.shape == (B, T)
    assert jnp.allclose(doc, doc_r, atol=1e-4), "document_vectors mismatch"
    assert jnp.allclose(state, state_r, atol=1e-4), "state_sent mismatch"
    assert jnp.allclose(attn, attn_r, atol=1e-4), "sent_attn_norm mismatch"
    assert jnp.allclose(jnp.sum(attn, axis=1), jnp.ones((B,)), atol=1e-5)

    print("KERNEL_OK")
</pallas_src>

<mosaic_0001>
module attributes {stable_mosaic.version = 11 : i64} {
  func.func @attention_sent_rnn_kernel(%arg0: i32, %arg1: memref<8x8x32xf32, #tpu.memory_space<vmem>>, %arg2: memref<2x8x16xf32, #tpu.memory_space<vmem>>, %arg3: memref<32x96xf32, #tpu.memory_space<vmem>>, %arg4: memref<1x96xf32, #tpu.memory_space<vmem>>, %arg5: memref<16x48xf32, #tpu.memory_space<vmem>>, %arg6: memref<1x48xf32, #tpu.memory_space<vmem>>, %arg7: memref<16x48xf32, #tpu.memory_space<vmem>>, %arg8: memref<1x48xf32, #tpu.memory_space<vmem>>, %arg9: memref<32x32xf32, #tpu.memory_space<vmem>>, %arg10: memref<1x32xf32, #tpu.memory_space<vmem>>, %arg11: memref<1x32xf32, #tpu.memory_space<vmem>>, %arg12: memref<8x32xf32, #tpu.memory_space<vmem>>, %arg13: memref<2x8x16xf32, #tpu.memory_space<vmem>>, %arg14: memref<8x8xf32, #tpu.memory_space<vmem>>, %arg15: memref<8x8x48xf32, #tpu.memory_space<vmem>>, %arg16: memref<8x8x48xf32, #tpu.memory_space<vmem>>, %arg17: memref<8x8x32xf32, #tpu.memory_space<vmem>>) attributes {dimension_semantics = [#tpu.dimension_semantics<parallel>], iteration_bounds = array<i64: 1>, scalar_prefetch = 0 : i64, scratch_operands = 3 : i64, tpu.core_type = #tpu.core_type<tc>, window_params = [{transform_indices = @transform_0, window_bounds = array<i64: 8, 8, 32>}, {transform_indices = @transform_1, window_bounds = array<i64: 2, 8, 16>}, {pipeline_mode = #tpu.pipeline_mode<synchronous>, transform_indices = @transform_2, window_bounds = array<i64: 32, 96>}, {pipeline_mode = #tpu.pipeline_mode<synchronous>, transform_indices = @transform_3, window_bounds = array<i64: 1, 96>}, {pipeline_mode = #tpu.pipeline_mode<synchronous>, transform_indices = @transform_4, window_bounds = array<i64: 16, 48>}, {pipeline_mode = #tpu.pipeline_mode<synchronous>, transform_indices = @transform_5, window_bounds = array<i64: 1, 48>}, {pipeline_mode = #tpu.pipeline_mode<synchronous>, transform_indices = @transform_6, window_bounds = array<i64: 16, 48>}, {pipeline_mode = #tpu.pipeline_mode<synchronous>, transform_indices = @transform_7, window_bounds = array<i64: 1, 48>}, {pipeline_mode = #tpu.pipeline_mode<synchronous>, transform_indices = @transform_8, window_bounds = array<i64: 32, 32>}, {pipeline_mode = #tpu.pipeline_mode<synchronous>, transform_indices = @transform_9, window_bounds = array<i64: 1, 32>}, {pipeline_mode = #tpu.pipeline_mode<synchronous>, transform_indices = @transform_10, window_bounds = array<i64: 1, 32>}, {transform_indices = @transform_11, window_bounds = array<i64: 8, 32>}, {transform_indices = @transform_12, window_bounds = array<i64: 2, 8, 16>}, {transform_indices = @transform_13, window_bounds = array<i64: 8, 8>}]} {
    %c0 = arith.constant 0 : index
    %c0_0 = arith.constant 0 : index
    %c0_1 = arith.constant 0 : index
    %0 = vector.load %arg1[%c0, %c0_0, %c0_1] : memref<8x8x32xf32, #tpu.memory_space<vmem>>, vector<8x8x32xf32>
    %1 = vector.shape_cast %0 : vector<8x8x32xf32> to vector<64x32xf32>
    %c0_2 = arith.constant 0 : index
    %c0_3 = arith.constant 0 : index
    %2 = vector.load %arg3[%c0_2, %c0_3] : memref<32x96xf32, #tpu.memory_space<vmem>>, vector<32x96xf32>
    %cst = arith.constant dense<0.000000e+00> : vector<64x96xf32>
    %3 = tpu.matmul %1, %2, %cst {dimension_numbers = #tpu.dot_dimension_numbers<[1], [0], [0], [1], [0, 0, 1, 1], [], []>} : vector<64x32xf32>, vector<32x96xf32>, vector<64x96xf32> -> vector<64x96xf32>
    %c0_4 = arith.constant 0 : index
    %c0_5 = arith.constant 0 : index
    %4 = vector.load %arg4[%c0_4, %c0_5] : memref<1x96xf32, #tpu.memory_space<vmem>>, vector<1x96xf32>
    %5 = vector.broadcast %4 : vector<1x96xf32> to vector<64x96xf32>
    %6 = arith.addf %3, %5 : vector<64x96xf32>
    %7 = vector.extract_strided_slice %6 {offsets = [0, 0], sizes = [64, 48], strides = [1, 1]} : vector<64x96xf32> to vector<64x48xf32>
    %8 = vector.shape_cast %7 : vector<64x48xf32> to vector<8x8x48xf32>
    %c0_6 = arith.constant 0 : index
    %c0_7 = arith.constant 0 : index
    %c0_8 = arith.constant 0 : index
    %9 = vector.load %arg15[%c0_6, %c0_7, %c0_8] : memref<8x8x48xf32, #tpu.memory_space<vmem>>, vector<8x8x48xf32>
    tpu.vector_store %arg15[%c0_6, %c0_7, %c0_8], %8 {strides = array<i32>} : memref<8x8x48xf32, #tpu.memory_space<vmem>>, vector<8x8x48xf32>,
    %10 = vector.extract_strided_slice %6 {offsets = [0, 48], sizes = [64, 48], strides = [1, 1]} : vector<64x96xf32> to vector<64x48xf32>
    %11 = vector.shape_cast %10 : vector<64x48xf32> to vector<8x8x48xf32>
    %c0_9 = arith.constant 0 : index
    %c0_10 = arith.constant 0 : index
    %c0_11 = arith.constant 0 : index
    %12 = vector.load %arg16[%c0_9, %c0_10, %c0_11] : memref<8x8x48xf32, #tpu.memory_space<vmem>>, vector<8x8x48xf32>
    tpu.vector_store %arg16[%c0_9, %c0_10, %c0_11], %11 {strides = array<i32>} : memref<8x8x48xf32, #tpu.memory_space<vmem>>, vector<8x8x48xf32>,
    %c0_12 = arith.constant 0 : index
    %c0_13 = arith.constant 0 : index
    %13 = vector.load %arg5[%c0_12, %c0_13] : memref<16x48xf32, #tpu.memory_space<vmem>>, vector<16x48xf32>
    %c0_14 = arith.constant 0 : index
    %c0_15 = arith.constant 0 : index
    %14 = vector.load %arg7[%c0_14, %c0_15] : memref<16x48xf32, #tpu.memory_space<vmem>>, vector<16x48xf32>
    %c0_16 = arith.constant 0 : index
    %c0_17 = arith.constant 0 : index
    %15 = vector.load %arg6[%c0_16, %c0_17] : memref<1x48xf32, #tpu.memory_space<vmem>>, vector<1x48xf32>
    %16 = vector.shape_cast %15 : vector<1x48xf32> to vector<1x48xf32>
    %17 = vector.broadcast %16 : vector<1x48xf32> to vector<8x48xf32>
    %c0_18 = arith.constant 0 : index
    %c0_19 = arith.constant 0 : index
    %18 = vector.load %arg8[%c0_18, %c0_19] : memref<1x48xf32, #tpu.memory_space<vmem>>, vector<1x48xf32>
    %19 = vector.shape_cast %18 : vector<1x48xf32> to vector<1x48xf32>
    %20 = vector.broadcast %19 : vector<1x48xf32> to vector<8x48xf32>
    %c0_20 = arith.constant 0 : index
    %c0_21 = arith.constant 0 : index
    %c0_22 = arith.constant 0 : index
    %21 = vector.load %arg2[%c0_20, %c0_21, %c0_22] : memref<2x8x16xf32, #tpu.memory_space<vmem>>, vector<1x8x16xf32>
    %22 = vector.shape_cast %21 : vector<1x8x16xf32> to vector<8x16xf32>
    %c1 = arith.constant 1 : index
    %c0_23 = arith.constant 0 : index
    %c0_24 = arith.constant 0 : index
    %23 = vector.load %arg2[%c1, %c0_23, %c0_24] : memref<2x8x16xf32, #tpu.memory_space<vmem>>, vector<1x8x16xf32>
    %24 = vector.shape_cast %23 : vector<1x8x16xf32> to vector<8x16xf32>
    %c0_i32 = arith.constant 0 : i32
    %c7_i32 = arith.constant 7 : i32
    %25 = arith.subi %c7_i32, %c0_i32 : i32
    %cst_25 = arith.constant dense<0.000000e+00> : vector<8x48xf32>
    %26 = tpu.matmul %22, %13, %cst_25 {dimension_numbers = #tpu.dot_dimension_numbers<[1], [0], [0], [1], [0, 0, 1, 1], [], []>} : vector<8x16xf32>, vector<16x48xf32>, vector<8x48xf32> -> vector<8x48xf32>
    %27 = arith.addf %26, %17 : vector<8x48xf32>
    %cst_26 = arith.constant dense<0.000000e+00> : vector<8x48xf32>
    %28 = tpu.matmul %24, %14, %cst_26 {dimension_numbers = #tpu.dot_dimension_numbers<[1], [0], [0], [1], [0, 0, 1, 1], [], []>} : vector<8x16xf32>, vector<16x48xf32>, vector<8x48xf32> -> vector<8x48xf32>
    %29 = arith.addf %28, %20 : vector<8x48xf32>
    %30 = arith.index_cast %c0_i32 : i32 to index
    %c0_27 = arith.constant 0 : index
    %c0_28 = arith.constant 0 : index
    %31 = vector.load %arg15[%30, %c0_27, %c0_28] : memref<8x8x48xf32, #tpu.memory_space<vmem>>, vector<1x8x48xf32>
    %32 = vector.shape_cast %31 : vector<1x8x48xf32> to vector<8x48xf32>
    %33 = vector.extract_strided_slice %32 {offsets = [0, 0], sizes = [8, 16], strides = [1, 1]} : vector<8x48xf32> to vector<8x16xf32>
    %34 = vector.extract_strided_slice %27 {offsets = [0, 0], sizes = [8, 16], strides = [1, 1]} : vector<8x48xf32> to vector<8x16xf32>
    %35 = arith.addf %33, %34 : vector<8x16xf32>
    %36 = arith.negf %35 : vector<8x16xf32>
    %37 = math.exp %36 : vector<8x16xf32>
    %cst_29 = arith.constant 1.000000e+00 : f32
    %38 = vector.broadcast %cst_29 : f32 to vector<8x16xf32>
    %39 = arith.addf %38, %37 : vector<8x16xf32>
    %40 = arith.divf %38, %39 : vector<8x16xf32>
    %41 = vector.extract_strided_slice %32 {offsets = [0, 16], sizes = [8, 16], strides = [1, 1]} : vector<8x48xf32> to vector<8x16xf32>
    %42 = vector.extract_strided_slice %27 {offsets = [0, 16], sizes = [8, 16], strides = [1, 1]} : vector<8x48xf32> to vector<8x16xf32>
    %43 = arith.addf %41, %42 : vector<8x16xf32>
    %44 = arith.negf %43 : vector<8x16xf32>
    %45 = math.exp %44 : vector<8x16xf32>
    %cst_30 = arith.constant 1.000000e+00 : f32
    %46 = vector.broadcast %cst_30 : f32 to vector<8x16xf32>
    %47 = arith.addf %46, %45 : vector<8x16xf32>
    %48 = arith.divf %46, %47 : vector<8x16xf32>
    %49 = vector.extract_strided_slice %32 {offsets = [0, 32], sizes = [8, 16], strides = [1, 1]} : vector<8x48xf32> to vector<8x16xf32>
    %50 = vector.extract_strided_slice %27 {offsets = [0, 32], sizes = [8, 16], strides = [1, 1]} : vector<8x48xf32> to vector<8x16xf32>
    %51 = arith.mulf %40, %50 : vector<8x16xf32>
    %52 = arith.addf %49, %51 : vector<8x16xf32>
    %53 = math.tanh %52 : vector<8x16xf32>
    %cst_31 = arith.constant 1.000000e+00 : f32
    %54 = vector.broadcast %cst_31 : f32 to vector<8x16xf32>
    %55 = arith.subf %54, %48 : vector<8x16xf32>
    %56 = arith.mulf %55, %53 : vector<8x16xf32>
    %57 = arith.mulf %48, %22 : vector<8x16xf32>
    %58 = arith.addf %56, %57 : vector<8x16xf32>
    %59 = arith.index_cast %25 : i32 to index
    %c0_32 = arith.constant 0 : index
    %c0_33 = arith.constant 0 : index
    %60 = vector.load %arg16[%59, %c0_32, %c0_33] : memref<8x8x48xf32, #tpu.memory_space<vmem>>, vector<1x8x48xf32>
    %61 = vector.shape_cast %60 : vector<1x8x48xf32> to vector<8x48xf32>
    %62 = vector.extract_strided_slice %61 {offsets = [0, 0], sizes = [8, 16], strides = [1, 1]} : vector<8x48xf32> to vector<8x16xf32>
    %63 = vector.extract_strided_slice %29 {offsets = [0, 0], sizes = [8, 16], strides = [1, 1]} : vector<8x48xf32> to vector<8x16xf32>
    %64 = arith.addf %62, %63 : vector<8x16xf32>
    %65 = arith.negf %64 : vector<8x16xf32>
    %66 = math.exp %65 : vector<8x16xf32>
    %cst_34 = arith.constant 1.000000e+00 : f32
    %67 = vector.broadcast %cst_34 : f32 to vector<8x16xf32>
    %68 = arith.addf %67, %66 : vector<8x16xf32>
    %69 = arith.divf %67, %68 : vector<8x16xf32>
    %70 = vector.extract_strided_slice %61 {offsets = [0, 16], sizes = [8, 16], strides = [1, 1]} : vector<8x48xf32> to vector<8x16xf32>
    %71 = vector.extract_strided_slice %29 {offsets = [0, 16], sizes = [8, 16], strides = [1, 1]} : vector<8x48xf32> to vector<8x16xf32>
    %72 = arith.addf %70, %71 : vector<8x16xf32>
    %73 = arith.negf %72 : vector<8x16xf32>
    %74 = math.exp %73 : vector<8x16xf32>
    %cst_35 = arith.constant 1.000000e+00 : f32
    %75 = vector.broadcast %cst_35 : f32 to vector<8x16xf32>
    %76 = arith.addf %75, %74 : vector<8x16xf32>
    %77 = arith.divf %75, %76 : vector<8x16xf32>
    %78 = vector.extract_strided_slice %61 {offsets = [0, 32], sizes = [8, 16], strides = [1, 1]} : vector<8x48xf32> to vector<8x16xf32>
    %79 = vector.extract_strided_slice %29 {offsets = [0, 32], sizes = [8, 16], strides = [1, 1]} : vector<8x48xf32> to vector<8x16xf32>
    %80 = arith.mulf %69, %79 : vector<8x16xf32>
    %81 = arith.addf %78, %80 : vector<8x16xf32>
    %82 = math.tanh %81 : vector<8x16xf32>
    %cst_36 = arith.constant 1.000000e+00 : f32
    %83 = vector.broadcast %cst_36 : f32 to vector<8x16xf32>
    %84 = arith.subf %83, %77 : vector<8x16xf32>
    %85 = arith.mulf %84, %82 : vector<8x16xf32>
    %86 = arith.mulf %77, %24 : vector<8x16xf32>
    %87 = arith.addf %85, %86 : vector<8x16xf32>
    %88 = arith.index_cast %c0_i32 : i32 to index
    %c0_37 = arith.constant 0 : index
    %c0_38 = arith.constant 0 : index
    %89 = vector.load %arg17[%88, %c0_37, %c0_38] : memref<8x8x32xf32, #tpu.memory_space<vmem>>, vector<1x8x16xf32>
    %90 = vector.shape_cast %89 : vector<1x8x16xf32> to vector<8x16xf32>
    %91 = vector.shape_cast %58 : vector<8x16xf32> to vector<1x8x16xf32>
    tpu.vector_store %arg17[%88, %c0_37, %c0_38], %91 {strides = array<i32>} : memref<8x8x32xf32, #tpu.memory_space<vmem>>, vector<1x8x16xf32>,
    %92 = arith.index_cast %25 : i32 to index
    %c0_39 = arith.constant 0 : index
    %c16 = arith.constant 16 : index
    %93 = vector.load %arg17[%92, %c0_39, %c16] : memref<8x8x32xf32, #tpu.memory_space<vmem>>, vector<1x8x16xf32>
    %94 = vector.shape_cast %93 : vector<1x8x16xf32> to vector<8x16xf32>
    %95 = vector.shape_cast %87 : vector<8x16xf32> to vector<1x8x16xf32>
    tpu.vector_store %arg17[%92, %c0_39, %c16], %95 {strides = array<i32>} : memref<8x8x32xf32, #tpu.memory_space<vmem>>, vector<1x8x16xf32>,
    %c1_i32 = arith.constant 1 : i32
    %c7_i32_40 = arith.constant 7 : i32
    %96 = arith.subi %c7_i32_40, %c1_i32 : i32
    %cst_41 = arith.constant dense<0.000000e+00> : vector<8x48xf32>
    %97 = tpu.matmul %58, %13, %cst_41 {dimension_numbers = #tpu.dot_dimension_numbers<[1], [0], [0], [1], [0, 0, 1, 1], [], []>} : vector<8x16xf32>, vector<16x48xf32>, vector<8x48xf32> -> vector<8x48xf32>
    %98 = arith.addf %97, %17 : vector<8x48xf32>
    %cst_42 = arith.constant dense<0.000000e+00> : vector<8x48xf32>
    %99 = tpu.matmul %87, %14, %cst_42 {dimension_numbers = #tpu.dot_dimension_numbers<[1], [0], [0], [1], [0, 0, 1, 1], [], []>} : vector<8x16xf32>, vector<16x48xf32>, vector<8x48xf32> -> vector<8x48xf32>
    %100 = arith.addf %99, %20 : vector<8x48xf32>
    %101 = arith.index_cast %c1_i32 : i32 to index
    %c0_43 = arith.constant 0 : index
    %c0_44 = arith.constant 0 : index
    %102 = vector.load %arg15[%101, %c0_43, %c0_44] : memref<8x8x48xf32, #tpu.memory_space<vmem>>, vector<1x8x48xf32>
    %103 = vector.shape_cast %102 : vector<1x8x48xf32> to vector<8x48xf32>
    %104 = vector.extract_strided_slice %103 {offsets = [0, 0], sizes = [8, 16], strides = [1, 1]} : vector<8x48xf32> to vector<8x16xf32>
    %105 = vector.extract_strided_slice %98 {offsets = [0, 0], sizes = [8, 16], strides = [1, 1]} : vector<8x48xf32> to vector<8x16xf32>
    %106 = arith.addf %104, %105 : vector<8x16xf32>
    %107 = arith.negf %106 : vector<8x16xf32>
    %108 = math.exp %107 : vector<8x16xf32>
    %cst_45 = arith.constant 1.000000e+00 : f32
    %109 = vector.broadcast %cst_45 : f32 to vector<8x16xf32>
    %110 = arith.addf %109, %108 : vector<8x16xf32>
    %111 = arith.divf %109, %110 : vector<8x16xf32>
    %112 = vector.extract_strided_slice %103 {offsets = [0, 16], sizes = [8, 16], strides = [1, 1]} : vector<8x48xf32> to vector<8x16xf32>
    %113 = vector.extract_strided_slice %98 {offsets = [0, 16], sizes = [8, 16], strides = [1, 1]} : vector<8x48xf32> to vector<8x16xf32>
    %114 = arith.addf %112, %113 : vector<8x16xf32>
    %115 = arith.negf %114 : vector<8x16xf32>
    %116 = math.exp %115 : vector<8x16xf32>
    %cst_46 = arith.constant 1.000000e+00 : f32
    %117 = vector.broadcast %cst_46 : f32 to vector<8x16xf32>
    %118 = arith.addf %117, %116 : vector<8x16xf32>
    %119 = arith.divf %117, %118 : vector<8x16xf32>
    %120 = vector.extract_strided_slice %103 {offsets = [0, 32], sizes = [8, 16], strides = [1, 1]} : vector<8x48xf32> to vector<8x16xf32>
    %121 = vector.extract_strided_slice %98 {offsets = [0, 32], sizes = [8, 16], strides = [1, 1]} : vector<8x48xf32> to vector<8x16xf32>
    %122 = arith.mulf %111, %121 : vector<8x16xf32>
    %123 = arith.addf %120, %122 : vector<8x16xf32>
    %124 = math.tanh %123 : vector<8x16xf32>
    %cst_47 = arith.constant 1.000000e+00 : f32
    %125 = vector.broadcast %cst_47 : f32 to vector<8x16xf32>
    %126 = arith.subf %125, %119 : vector<8x16xf32>
    %127 = arith.mulf %126, %124 : vector<8x16xf32>
    %128 = arith.mulf %119, %58 : vector<8x16xf32>
    %129 = arith.addf %127, %128 : vector<8x16xf32>
    %130 = arith.index_cast %96 : i32 to index
    %c0_48 = arith.constant 0 : index
    %c0_49 = arith.constant 0 : index
    %131 = vector.load %arg16[%130, %c0_48, %c0_49] : memref<8x8x48xf32, #tpu.memory_space<vmem>>, vector<1x8x48xf32>
    %132 = vector.shape_cast %131 : vector<1x8x48xf32> to vector<8x48xf32>
    %133 = vector.extract_strided_slice %132 {offsets = [0, 0], sizes = [8, 16], strides = [1, 1]} : vector<8x48xf32> to vector<8x16xf32>
    %134 = vector.extract_strided_slice %100 {offsets = [0, 0], sizes = [8, 16], strides = [1, 1]} : vector<8x48xf32> to vector<8x16xf32>
    %135 = arith.addf %133, %134 : vector<8x16xf32>
    %136 = arith.negf %135 : vector<8x16xf32>
    %137 = math.exp %136 : vector<8x16xf32>
    %cst_50 = arith.constant 1.000000e+00 : f32
    %138 = vector.broadcast %cst_50 : f32 to vector<8x16xf32>
    %139 = arith.addf %138, %137 : vector<8x16xf32>
    %140 = arith.divf %138, %139 : vector<8x16xf32>
    %141 = vector.extract_strided_slice %132 {offsets = [0, 16], sizes = [8, 16], strides = [1, 1]} : vector<8x48xf32> to vector<8x16xf32>
    %142 = vector.extract_strided_slice %100 {offsets = [0, 16], sizes = [8, 16], strides = [1, 1]} : vector<8x48xf32> to vector<8x16xf32>
    %143 = arith.addf %141, %142 : vector<8x16xf32>
    %144 = arith.negf %143 : vector<8x16xf32>
    %145 = math.exp %144 : vector<8x16xf32>
    %cst_51 = arith.constant 1.000000e+00 : f32
    %146 = vector.broadcast %cst_51 : f32 to vector<8x16xf32>
    %147 = arith.addf %146, %145 : vector<8x16xf32>
    %148 = arith.divf %146, %147 : vector<8x16xf32>
    %149 = vector.extract_strided_slice %132 {offsets = [0, 32], sizes = [8, 16], strides = [1, 1]} : vector<8x48xf32> to vector<8x16xf32>
    %150 = vector.extract_strided_slice %100 {offsets = [0, 32], sizes = [8, 16], strides = [1, 1]} : vector<8x48xf32> to vector<8x16xf32>
    %151 = arith.mulf %140, %150 : vector<8x16xf32>
    %152 = arith.addf %149, %151 : vector<8x16xf32>
    %153 = math.tanh %152 : vector<8x16xf32>
    %cst_52 = arith.constant 1.000000e+00 : f32
    %154 = vector.broadcast %cst_52 : f32 to vector<8x16xf32>
    %155 = arith.subf %154, %148 : vector<8x16xf32>
    %156 = arith.mulf %155, %153 : vector<8x16xf32>
    %157 = arith.mulf %148, %87 : vector<8x16xf32>
    %158 = arith.addf %156, %157 : vector<8x16xf32>
    %159 = arith.index_cast %c1_i32 : i32 to index
    %c0_53 = arith.constant 0 : index
    %c0_54 = arith.constant 0 : index
    %160 = vector.load %arg17[%159, %c0_53, %c0_54] : memref<8x8x32xf32, #tpu.memory_space<vmem>>, vector<1x8x16xf32>
    %161 = vector.shape_cast %160 : vector<1x8x16xf32> to vector<8x16xf32>
    %162 = vector.shape_cast %129 : vector<8x16xf32> to vector<1x8x16xf32>
    tpu.vector_store %arg17[%159, %c0_53, %c0_54], %162 {strides = array<i32>} : memref<8x8x32xf32, #tpu.memory_space<vmem>>, vector<1x8x16xf32>,
    %163 = arith.index_cast %96 : i32 to index
    %c0_55 = arith.constant 0 : index
    %c16_56 = arith.constant 16 : index
    %164 = vector.load %arg17[%163, %c0_55, %c16_56] : memref<8x8x32xf32, #tpu.memory_space<vmem>>, vector<1x8x16xf32>
    %165 = vector.shape_cast %164 : vector<1x8x16xf32> to vector<8x16xf32>
    %166 = vector.shape_cast %158 : vector<8x16xf32> to vector<1x8x16xf32>
    tpu.vector_store %arg17[%163, %c0_55, %c16_56], %166 {strides = array<i32>} : memref<8x8x32xf32, #tpu.memory_space<vmem>>, vector<1x8x16xf32>,
    %c2_i32 = arith.constant 2 : i32
    %c7_i32_57 = arith.constant 7 : i32
    %167 = arith.subi %c7_i32_57, %c2_i32 : i32
    %cst_58 = arith.constant dense<0.000000e+00> : vector<8x48xf32>
    %168 = tpu.matmul %129, %13, %cst_58 {dimension_numbers = #tpu.dot_dimension_numbers<[1], [0], [0], [1], [0, 0, 1, 1], [], []>} : vector<8x16xf32>, vector<16x48xf32>, vector<8x48xf32> -> vector<8x48xf32>
    %169 = arith.addf %168, %17 : vector<8x48xf32>
    %cst_59 = arith.constant dense<0.000000e+00> : vector<8x48xf32>
    %170 = tpu.matmul %158, %14, %cst_59 {dimension_numbers = #tpu.dot_dimension_numbers<[1], [0], [0], [1], [0, 0, 1, 1], [], []>} : vector<8x16xf32>, vector<16x48xf32>, vector<8x48xf32> -> vector<8x48xf32>
    %171 = arith.addf %170, %20 : vector<8x48xf32>
    %172 = arith.index_cast %c2_i32 : i32 to index
    %c0_60 = arith.constant 0 : index
    %c0_61 = arith.constant 0 : index
    %173 = vector.load %arg15[%172, %c0_60, %c0_61] : memref<8x8x48xf32, #tpu.memory_space<vmem>>, vector<1x8x48xf32>
    %174 = vector.shape_cast %173 : vector<1x8x48xf32> to vector<8x48xf32>
    %175 = vector.extract_strided_slice %174 {offsets = [0, 0], sizes = [8, 16], strides = [1, 1]} : vector<8x48xf32> to vector<8x16xf32>
    %176 = vector.extract_strided_slice %169 {offsets = [0, 0], sizes = [8, 16], strides = [1, 1]} : vector<8x48xf32> to vector<8x16xf32>
    %177 = arith.addf %175, %176 : vector<8x16xf32>
    %178 = arith.negf %177 : vector<8x16xf32>
    %179 = math.exp %178 : vector<8x16xf32>
    %cst_62 = arith.constant 1.000000e+00 : f32
    %180 = vector.broadcast %cst_62 : f32 to vector<8x16xf32>
    %181 = arith.addf %180, %179 : vector<8x16xf32>
    %182 = arith.divf %180, %181 : vector<8x16xf32>
    %183 = vector.extract_strided_slice %174 {offsets = [0, 16], sizes = [8, 16], strides = [1, 1]} : vector<8x48xf32> to vector<8x16xf32>
    %184 = vector.extract_strided_slice %169 {offsets = [0, 16], sizes = [8, 16], strides = [1, 1]} : vector<8x48xf32> to vector<8x16xf32>
    %185 = arith.addf %183, %184 : vector<8x16xf32>
    %186 = arith.negf %185 : vector<8x16xf32>
    %187 = math.exp %186 : vector<8x16xf32>
    %cst_63 = arith.constant 1.000000e+00 : f32
    %188 = vector.broadcast %cst_63 : f32 to vector<8x16xf32>
    %189 = arith.addf %188, %187 : vector<8x16xf32>
    %190 = arith.divf %188, %189 : vector<8x16xf32>
    %191 = vector.extract_strided_slice %174 {offsets = [0, 32], sizes = [8, 16], strides = [1, 1]} : vector<8x48xf32> to vector<8x16xf32>
    %192 = vector.extract_strided_slice %169 {offsets = [0, 32], sizes = [8, 16], strides = [1, 1]} : vector<8x48xf32> to vector<8x16xf32>
    %193 = arith.mulf %182, %192 : vector<8x16xf32>
    %194 = arith.addf %191, %193 : vector<8x16xf32>
    %195 = math.tanh %194 : vector<8x16xf32>
    %cst_64 = arith.constant 1.000000e+00 : f32
    %196 = vector.broadcast %cst_64 : f32 to vector<8x16xf32>
    %197 = arith.subf %196, %190 : vector<8x16xf32>
    %198 = arith.mulf %197, %195 : vector<8x16xf32>
    %199 = arith.mulf %190, %129 : vector<8x16xf32>
    %200 = arith.addf %198, %199 : vector<8x16xf32>
    %201 = arith.index_cast %167 : i32 to index
    %c0_65 = arith.constant 0 : index
    %c0_66 = arith.constant 0 : index
    %202 = vector.load %arg16[%201, %c0_65, %c0_66] : memref<8x8x48xf32, #tpu.memory_space<vmem>>, vector<1x8x48xf32>
    %203 = vector.shape_cast %202 : vector<1x8x48xf32> to vector<8x48xf32>
    %204 = vector.extract_strided_slice %203 {offsets = [0, 0], sizes = [8, 16], strides = [1, 1]} : vector<8x48xf32> to vector<8x16xf32>
    %205 = vector.extract_strided_slice %171 {offsets = [0, 0], sizes = [8, 16], strides = [1, 1]} : vector<8x48xf32> to vector<8x16xf32>
    %206 = arith.addf %204, %205 : vector<8x16xf32>
    %207 = arith.negf %206 : vector<8x16xf32>
    %208 = math.exp %207 : vector<8x16xf32>
    %cst_67 = arith.constant 1.000000e+00 : f32
    %209 = vector.broadcast %cst_67 : f32 to vector<8x16xf32>
    %210 = arith.addf %209, %208 : vector<8x16xf32>
    %211 = arith.divf %209, %210 : vector<8x16xf32>
    %212 = vector.extract_strided_slice %203 {offsets = [0, 16], sizes = [8, 16], strides = [1, 1]} : vector<8x48xf32> to vector<8x16xf32>
    %213 = vector.extract_strided_slice %171 {offsets = [0, 16], sizes = [8, 16], strides = [1, 1]} : vector<8x48xf32> to vector<8x16xf32>
    %214 = arith.addf %212, %213 : vector<8x16xf32>
    %215 = arith.negf %214 : vector<8x16xf32>
    %216 = math.exp %215 : vector<8x16xf32>
    %cst_68 = arith.constant 1.000000e+00 : f32
    %217 = vector.broadcast %cst_68 : f32 to vector<8x16xf32>
    %218 = arith.addf %217, %216 : vector<8x16xf32>
    %219 = arith.divf %217, %218 : vector<8x16xf32>
    %220 = vector.extract_strided_slice %203 {offsets = [0, 32], sizes = [8, 16], strides = [1, 1]} : vector<8x48xf32> to vector<8x16xf32>
    %221 = vector.extract_strided_slice %171 {offsets = [0, 32], sizes = [8, 16], strides = [1, 1]} : vector<8x48xf32> to vector<8x16xf32>
    %222 = arith.mulf %211, %221 : vector<8x16xf32>
    %223 = arith.addf %220, %222 : vector<8x16xf32>
    %224 = math.tanh %223 : vector<8x16xf32>
    %cst_69 = arith.constant 1.000000e+00 : f32
    %225 = vector.broadcast %cst_69 : f32 to vector<8x16xf32>
    %226 = arith.subf %225, %219 : vector<8x16xf32>
    %227 = arith.mulf %226, %224 : vector<8x16xf32>
    %228 = arith.mulf %219, %158 : vector<8x16xf32>
    %229 = arith.addf %227, %228 : vector<8x16xf32>
    %230 = arith.index_cast %c2_i32 : i32 to index
    %c0_70 = arith.constant 0 : index
    %c0_71 = arith.constant 0 : index
    %231 = vector.load %arg17[%230, %c0_70, %c0_71] : memref<8x8x32xf32, #tpu.memory_space<vmem>>, vector<1x8x16xf32>
    %232 = vector.shape_cast %231 : vector<1x8x16xf32> to vector<8x16xf32>
    %233 = vector.shape_cast %200 : vector<8x16xf32> to vector<1x8x16xf32>
    tpu.vector_store %arg17[%230, %c0_70, %c0_71], %233 {strides = array<i32>} : memref<8x8x32xf32, #tpu.memory_space<vmem>>, vector<1x8x16xf32>,
    %234 = arith.index_cast %167 : i32 to index
    %c0_72 = arith.constant 0 : index
    %c16_73 = arith.constant 16 : index
    %235 = vector.load %arg17[%234, %c0_72, %c16_73] : memref<8x8x32xf32, #tpu.memory_space<vmem>>, vector<1x8x16xf32>
    %236 = vector.shape_cast %235 : vector<1x8x16xf32> to vector<8x16xf32>
    %237 = vector.shape_cast %229 : vector<8x16xf32> to vector<1x8x16xf32>
    tpu.vector_store %arg17[%234, %c0_72, %c16_73], %237 {strides = array<i32>} : memref<8x8x32xf32, #tpu.memory_space<vmem>>, vector<1x8x16xf32>,
    %c3_i32 = arith.constant 3 : i32
    %c7_i32_74 = arith.constant 7 : i32
    %238 = arith.subi %c7_i32_74, %c3_i32 : i32
    %cst_75 = arith.constant dense<0.000000e+00> : vector<8x48xf32>
    %239 = tpu.matmul %200, %13, %cst_75 {dimension_numbers = #tpu.dot_dimension_numbers<[1], [0], [0], [1], [0, 0, 1, 1], [], []>} : vector<8x16xf32>, vector<16x48xf32>, vector<8x48xf32> -> vector<8x48xf32>
    %240 = arith.addf %239, %17 : vector<8x48xf32>
    %cst_76 = arith.constant dense<0.000000e+00> : vector<8x48xf32>
    %241 = tpu.matmul %229, %14, %cst_76 {dimension_numbers = #tpu.dot_dimension_numbers<[1], [0], [0], [1], [0, 0, 1, 1], [], []>} : vector<8x16xf32>, vector<16x48xf32>, vector<8x48xf32> -> vector<8x48xf32>
    %242 = arith.addf %241, %20 : vector<8x48xf32>
    %243 = arith.index_cast %c3_i32 : i32 to index
    %c0_77 = arith.constant 0 : index
    %c0_78 = arith.constant 0 : index
    %244 = vector.load %arg15[%243, %c0_77, %c0_78] : memref<8x8x48xf32, #tpu.memory_space<vmem>>, vector<1x8x48xf32>
    %245 = vector.shape_cast %244 : vector<1x8x48xf32> to vector<8x48xf32>
    %246 = vector.extract_strided_slice %245 {offsets = [0, 0], sizes = [8, 16], strides = [1, 1]} : vector<8x48xf32> to vector<8x16xf32>
    %247 = vector.extract_strided_slice %240 {offsets = [0, 0], sizes = [8, 16], strides = [1, 1]} : vector<8x48xf32> to vector<8x16xf32>
    %248 = arith.addf %246, %247 : vector<8x16xf32>
    %249 = arith.negf %248 : vector<8x16xf32>
    %250 = math.exp %249 : vector<8x16xf32>
    %cst_79 = arith.constant 1.000000e+00 : f32
    %251 = vector.broadcast %cst_79 : f32 to vector<8x16xf32>
    %252 = arith.addf %251, %250 : vector<8x16xf32>
    %253 = arith.divf %251, %252 : vector<8x16xf32>
    %254 = vector.extract_strided_slice %245 {offsets = [0, 16], sizes = [8, 16], strides = [1, 1]} : vector<8x48xf32> to vector<8x16xf32>
    %255 = vector.extract_strided_slice %240 {offsets = [0, 16], sizes = [8, 16], strides = [1, 1]} : vector<8x48xf32> to vector<8x16xf32>
    %256 = arith.addf %254, %255 : vector<8x16xf32>
    %257 = arith.negf %256 : vector<8x16xf32>
    %258 = math.exp %257 : vector<8x16xf32>
    %cst_80 = arith.constant 1.000000e+00 : f32
    %259 = vector.broadcast %cst_80 : f32 to vector<8x16xf32>
    %260 = arith.addf %259, %258 : vector<8x16xf32>
    %261 = arith.divf %259, %260 : vector<8x16xf32>
    %262 = vector.extract_strided_slice %245 {offsets = [0, 32], sizes = [8, 16], strides = [1, 1]} : vector<8x48xf32> to vector<8x16xf32>
    %263 = vector.extract_strided_slice %240 {offsets = [0, 32], sizes = [8, 16], strides = [1, 1]} : vector<8x48xf32> to vector<8x16xf32>
    %264 = arith.mulf %253, %263 : vector<8x16xf32>
    %265 = arith.addf %262, %264 : vector<8x16xf32>
    %266 = math.tanh %265 : vector<8x16xf32>
    %cst_81 = arith.constant 1.000000e+00 : f32
    %267 = vector.broadcast %cst_81 : f32 to vector<8x16xf32>
    %268 = arith.subf %267, %261 : vector<8x16xf32>
    %269 = arith.mulf %268, %266 : vector<8x16xf32>
    %270 = arith.mulf %261, %200 : vector<8x16xf32>
    %271 = arith.addf %269, %270 : vector<8x16xf32>
    %272 = arith.index_cast %238 : i32 to index
    %c0_82 = arith.constant 0 : index
    %c0_83 = arith.constant 0 : index
    %273 = vector.load %arg16[%272, %c0_82, %c0_83] : memref<8x8x48xf32, #tpu.memory_space<vmem>>, vector<1x8x48xf32>
    %274 = vector.shape_cast %273 : vector<1x8x48xf32> to vector<8x48xf32>
    %275 = vector.extract_strided_slice %274 {offsets = [0, 0], sizes = [8, 16], strides = [1, 1]} : vector<8x48xf32> to vector<8x16xf32>
    %276 = vector.extract_strided_slice %242 {offsets = [0, 0], sizes = [8, 16], strides = [1, 1]} : vector<8x48xf32> to vector<8x16xf32>
    %277 = arith.addf %275, %276 : vector<8x16xf32>
    %278 = arith.negf %277 : vector<8x16xf32>
    %279 = math.exp %278 : vector<8x16xf32>
    %cst_84 = arith.constant 1.000000e+00 : f32
    %280 = vector.broadcast %cst_84 : f32 to vector<8x16xf32>
    %281 = arith.addf %280, %279 : vector<8x16xf32>
    %282 = arith.divf %280, %281 : vector<8x16xf32>
    %283 = vector.extract_strided_slice %274 {offsets = [0, 16], sizes = [8, 16], strides = [1, 1]} : vector<8x48xf32> to vector<8x16xf32>
    %284 = vector.extract_strided_slice %242 {offsets = [0, 16], sizes = [8, 16], strides = [1, 1]} : vector<8x48xf32> to vector<8x16xf32>
    %285 = arith.addf %283, %284 : vector<8x16xf32>
    %286 = arith.negf %285 : vector<8x16xf32>
    %287 = math.exp %286 : vector<8x16xf32>
    %cst_85 = arith.constant 1.000000e+00 : f32
    %288 = vector.broadcast %cst_85 : f32 to vector<8x16xf32>
    %289 = arith.addf %288, %287 : vector<8x16xf32>
    %290 = arith.divf %288, %289 : vector<8x16xf32>
    %291 = vector.extract_strided_slice %274 {offsets = [0, 32], sizes = [8, 16], strides = [1, 1]} : vector<8x48xf32> to vector<8x16xf32>
    %292 = vector.extract_strided_slice %242 {offsets = [0, 32], sizes = [8, 16], strides = [1, 1]} : vector<8x48xf32> to vector<8x16xf32>
    %293 = arith.mulf %282, %292 : vector<8x16xf32>
    %294 = arith.addf %291, %293 : vector<8x16xf32>
    %295 = math.tanh %294 : vector<8x16xf32>
    %cst_86 = arith.constant 1.000000e+00 : f32
    %296 = vector.broadcast %cst_86 : f32 to vector<8x16xf32>
    %297 = arith.subf %296, %290 : vector<8x16xf32>
    %298 = arith.mulf %297, %295 : vector<8x16xf32>
    %299 = arith.mulf %290, %229 : vector<8x16xf32>
    %300 = arith.addf %298, %299 : vector<8x16xf32>
    %301 = arith.index_cast %c3_i32 : i32 to index
    %c0_87 = arith.constant 0 : index
    %c0_88 = arith.constant 0 : index
    %302 = vector.load %arg17[%301, %c0_87, %c0_88] : memref<8x8x32xf32, #tpu.memory_space<vmem>>, vector<1x8x16xf32>
    %303 = vector.shape_cast %302 : vector<1x8x16xf32> to vector<8x16xf32>
    %304 = vector.shape_cast %271 : vector<8x16xf32> to vector<1x8x16xf32>
    tpu.vector_store %arg17[%301, %c0_87, %c0_88], %304 {strides = array<i32>} : memref<8x8x32xf32, #tpu.memory_space<vmem>>, vector<1x8x16xf32>,
    %305 = arith.index_cast %238 : i32 to index
    %c0_89 = arith.constant 0 : index
    %c16_90 = arith.constant 16 : index
    %306 = vector.load %arg17[%305, %c0_89, %c16_90] : memref<8x8x32xf32, #tpu.memory_space<vmem>>, vector<1x8x16xf32>
    %307 = vector.shape_cast %306 : vector<1x8x16xf32> to vector<8x16xf32>
    %308 = vector.shape_cast %300 : vector<8x16xf32> to vector<1x8x16xf32>
    tpu.vector_store %arg17[%305, %c0_89, %c16_90], %308 {strides = array<i32>} : memref<8x8x32xf32, #tpu.memory_space<vmem>>, vector<1x8x16xf32>,
    %c4_i32 = arith.constant 4 : i32
    %c7_i32_91 = arith.constant 7 : i32
    %309 = arith.subi %c7_i32_91, %c4_i32 : i32
    %cst_92 = arith.constant dense<0.000000e+00> : vector<8x48xf32>
    %310 = tpu.matmul %271, %13, %cst_92 {dimension_numbers = #tpu.dot_dimension_numbers<[1], [0], [0], [1], [0, 0, 1, 1], [], []>} : vector<8x16xf32>, vector<16x48xf32>, vector<8x48xf32> -> vector<8x48xf32>
    %311 = arith.addf %310, %17 : vector<8x48xf32>
    %cst_93 = arith.constant dense<0.000000e+00> : vector<8x48xf32>
    %312 = tpu.matmul %300, %14, %cst_93 {dimension_numbers = #tpu.dot_dimension_numbers<[1], [0], [0], [1], [0, 0, 1, 1], [], []>} : vector<8x16xf32>, vector<16x48xf32>, vector<8x48xf32> -> vector<8x48xf32>
    %313 = arith.addf %312, %20 : vector<8x48xf32>
    %314 = arith.index_cast %c4_i32 : i32 to index
    %c0_94 = arith.constant 0 : index
    %c0_95 = arith.constant 0 : index
    %315 = vector.load %arg15[%314, %c0_94, %c0_95] : memref<8x8x48xf32, #tpu.memory_space<vmem>>, vector<1x8x48xf32>
    %316 = vector.shape_cast %315 : vector<1x8x48xf32> to vector<8x48xf32>
    %317 = vector.extract_strided_slice %316 {offsets = [0, 0], sizes = [8, 16], strides = [1, 1]} : vector<8x48xf32> to vector<8x16xf32>
    %318 = vector.extract_strided_slice %311 {offsets = [0, 0], sizes = [8, 16], strides = [1, 1]} : vector<8x48xf32> to vector<8x16xf32>
    %319 = arith.addf %317, %318 : vector<8x16xf32>
    %320 = arith.negf %319 : vector<8x16xf32>
    %321 = math.exp %320 : vector<8x16xf32>
    %cst_96 = arith.constant 1.000000e+00 : f32
    %322 = vector.broadcast %cst_96 : f32 to vector<8x16xf32>
    %323 = arith.addf %322, %321 : vector<8x16xf32>
    %324 = arith.divf %322, %323 : vector<8x16xf32>
    %325 = vector.extract_strided_slice %316 {offsets = [0, 16], sizes = [8, 16], strides = [1, 1]} : vector<8x48xf32> to vector<8x16xf32>
    %326 = vector.extract_strided_slice %311 {offsets = [0, 16], sizes = [8, 16], strides = [1, 1]} : vector<8x48xf32> to vector<8x16xf32>
    %327 = arith.addf %325, %326 : vector<8x16xf32>
    %328 = arith.negf %327 : vector<8x16xf32>
    %329 = math.exp %328 : vector<8x16xf32>
    %cst_97 = arith.constant 1.000000e+00 : f32
    %330 = vector.broadcast %cst_97 : f32 to vector<8x16xf32>
    %331 = arith.addf %330, %329 : vector<8x16xf32>
    %332 = arith.divf %330, %331 : vector<8x16xf32>
    %333 = vector.extract_strided_slice %316 {offsets = [0, 32], sizes = [8, 16], strides = [1, 1]} : vector<8x48xf32> to vector<8x16xf32>
    %334 = vector.extract_strided_slice %311 {offsets = [0, 32], sizes = [8, 16], strides = [1, 1]} : vector<8x48xf32> to vector<8x16xf32>
    %335 = arith.mulf %324, %334 : vector<8x16xf32>
    %336 = arith.addf %333, %335 : vector<8x16xf32>
    %337 = math.tanh %336 : vector<8x16xf32>
    %cst_98 = arith.constant 1.000000e+00 : f32
    %338 = vector.broadcast %cst_98 : f32 to vector<8x16xf32>
    %339 = arith.subf %338, %332 : vector<8x16xf32>
    %340 = arith.mulf %339, %337 : vector<8x16xf32>
    %341 = arith.mulf %332, %271 : vector<8x16xf32>
    %342 = arith.addf %340, %341 : vector<8x16xf32>
    %343 = arith.index_cast %309 : i32 to index
    %c0_99 = arith.constant 0 : index
    %c0_100 = arith.constant 0 : index
    %344 = vector.load %arg16[%343, %c0_99, %c0_100] : memref<8x8x48xf32, #tpu.memory_space<vmem>>, vector<1x8x48xf32>
    %345 = vector.shape_cast %344 : vector<1x8x48xf32> to vector<8x48xf32>
    %346 = vector.extract_strided_slice %345 {offsets = [0, 0], sizes = [8, 16], strides = [1, 1]} : vector<8x48xf32> to vector<8x16xf32>
    %347 = vector.extract_strided_slice %313 {offsets = [0, 0], sizes = [8, 16], strides = [1, 1]} : vector<8x48xf32> to vector<8x16xf32>
    %348 = arith.addf %346, %347 : vector<8x16xf32>
    %349 = arith.negf %348 : vector<8x16xf32>
    %350 = math.exp %349 : vector<8x16xf32>
    %cst_101 = arith.constant 1.000000e+00 : f32
    %351 = vector.broadcast %cst_101 : f32 to vector<8x16xf32>
    %352 = arith.addf %351, %350 : vector<8x16xf32>
    %353 = arith.divf %351, %352 : vector<8x16xf32>
    %354 = vector.extract_strided_slice %345 {offsets = [0, 16], sizes = [8, 16], strides = [1, 1]} : vector<8x48xf32> to vector<8x16xf32>
    %355 = vector.extract_strided_slice %313 {offsets = [0, 16], sizes = [8, 16], strides = [1, 1]} : vector<8x48xf32> to vector<8x16xf32>
    %356 = arith.addf %354, %355 : vector<8x16xf32>
    %357 = arith.negf %356 : vector<8x16xf32>
    %358 = math.exp %357 : vector<8x16xf32>
    %cst_102 = arith.constant 1.000000e+00 : f32
    %359 = vector.broadcast %cst_102 : f32 to vector<8x16xf32>
    %360 = arith.addf %359, %358 : vector<8x16xf32>
    %361 = arith.divf %359, %360 : vector<8x16xf32>
    %362 = vector.extract_strided_slice %345 {offsets = [0, 32], sizes = [8, 16], strides = [1, 1]} : vector<8x48xf32> to vector<8x16xf32>
    %363 = vector.extract_strided_slice %313 {offsets = [0, 32], sizes = [8, 16], strides = [1, 1]} : vector<8x48xf32> to vector<8x16xf32>
    %364 = arith.mulf %353, %363 : vector<8x16xf32>
    %365 = arith.addf %362, %364 : vector<8x16xf32>
    %366 = math.tanh %365 : vector<8x16xf32>
    %cst_103 = arith.constant 1.000000e+00 : f32
    %367 = vector.broadcast %cst_103 : f32 to vector<8x16xf32>
    %368 = arith.subf %367, %361 : vector<8x16xf32>
    %369 = arith.mulf %368, %366 : vector<8x16xf32>
    %370 = arith.mulf %361, %300 : vector<8x16xf32>
    %371 = arith.addf %369, %370 : vector<8x16xf32>
    %372 = arith.index_cast %c4_i32 : i32 to index
    %c0_104 = arith.constant 0 : index
    %c0_105 = arith.constant 0 : index
    %373 = vector.load %arg17[%372, %c0_104, %c0_105] : memref<8x8x32xf32, #tpu.memory_space<vmem>>, vector<1x8x16xf32>
    %374 = vector.shape_cast %373 : vector<1x8x16xf32> to vector<8x16xf32>
    %375 = vector.shape_cast %342 : vector<8x16xf32> to vector<1x8x16xf32>
    tpu.vector_store %arg17[%372, %c0_104, %c0_105], %375 {strides = array<i32>} : memref<8x8x32xf32, #tpu.memory_space<vmem>>, vector<1x8x16xf32>,
    %376 = arith.index_cast %309 : i32 to index
    %c0_106 = arith.constant 0 : index
    %c16_107 = arith.constant 16 : index
    %377 = vector.load %arg17[%376, %c0_106, %c16_107] : memref<8x8x32xf32, #tpu.memory_space<vmem>>, vector<1x8x16xf32>
    %378 = vector.shape_cast %377 : vector<1x8x16xf32> to vector<8x16xf32>
    %379 = vector.shape_cast %371 : vector<8x16xf32> to vector<1x8x16xf32>
    tpu.vector_store %arg17[%376, %c0_106, %c16_107], %379 {strides = array<i32>} : memref<8x8x32xf32, #tpu.memory_space<vmem>>, vector<1x8x16xf32>,
    %c5_i32 = arith.constant 5 : i32
    %c7_i32_108 = arith.constant 7 : i32
    %380 = arith.subi %c7_i32_108, %c5_i32 : i32
    %cst_109 = arith.constant dense<0.000000e+00> : vector<8x48xf32>
    %381 = tpu.matmul %342, %13, %cst_109 {dimension_numbers = #tpu.dot_dimension_numbers<[1], [0], [0], [1], [0, 0, 1, 1], [], []>} : vector<8x16xf32>, vector<16x48xf32>, vector<8x48xf32> -> vector<8x48xf32>
    %382 = arith.addf %381, %17 : vector<8x48xf32>
    %cst_110 = arith.constant dense<0.000000e+00> : vector<8x48xf32>
    %383 = tpu.matmul %371, %14, %cst_110 {dimension_numbers = #tpu.dot_dimension_numbers<[1], [0], [0], [1], [0, 0, 1, 1], [], []>} : vector<8x16xf32>, vector<16x48xf32>, vector<8x48xf32> -> vector<8x48xf32>
    %384 = arith.addf %383, %20 : vector<8x48xf32>
    %385 = arith.index_cast %c5_i32 : i32 to index
    %c0_111 = arith.constant 0 : index
    %c0_112 = arith.constant 0 : index
    %386 = vector.load %arg15[%385, %c0_111, %c0_112] : memref<8x8x48xf32, #tpu.memory_space<vmem>>, vector<1x8x48xf32>
    %387 = vector.shape_cast %386 : vector<1x8x48xf32> to vector<8x48xf32>
    %388 = vector.extract_strided_slice %387 {offsets = [0, 0], sizes = [8, 16], strides = [1, 1]} : vector<8x48xf32> to vector<8x16xf32>
    %389 = vector.extract_strided_slice %382 {offsets = [0, 0], sizes = [8, 16], strides = [1, 1]} : vector<8x48xf32> to vector<8x16xf32>
    %390 = arith.addf %388, %389 : vector<8x16xf32>
    %391 = arith.negf %390 : vector<8x16xf32>
    %392 = math.exp %391 : vector<8x16xf32>
    %cst_113 = arith.constant 1.000000e+00 : f32
    %393 = vector.broadcast %cst_113 : f32 to vector<8x16xf32>
    %394 = arith.addf %393, %392 : vector<8x16xf32>
    %395 = arith.divf %393, %394 : vector<8x16xf32>
    %396 = vector.extract_strided_slice %387 {offsets = [0, 16], sizes = [8, 16], strides = [1, 1]} : vector<8x48xf32> to vector<8x16xf32>
    %397 = vector.extract_strided_slice %382 {offsets = [0, 16], sizes = [8, 16], strides = [1, 1]} : vector<8x48xf32> to vector<8x16xf32>
    %398 = arith.addf %396, %397 : vector<8x16xf32>
    %399 = arith.negf %398 : vector<8x16xf32>
    %400 = math.exp %399 : vector<8x16xf32>
    %cst_114 = arith.constant 1.000000e+00 : f32
    %401 = vector.broadcast %cst_114 : f32 to vector<8x16xf32>
    %402 = arith.addf %401, %400 : vector<8x16xf32>
    %403 = arith.divf %401, %402 : vector<8x16xf32>
    %404 = vector.extract_strided_slice %387 {offsets = [0, 32], sizes = [8, 16], strides = [1, 1]} : vector<8x48xf32> to vector<8x16xf32>
    %405 = vector.extract_strided_slice %382 {offsets = [0, 32], sizes = [8, 16], strides = [1, 1]} : vector<8x48xf32> to vector<8x16xf32>
    %406 = arith.mulf %395, %405 : vector<8x16xf32>
    %407 = arith.addf %404, %406 : vector<8x16xf32>
    %408 = math.tanh %407 : vector<8x16xf32>
    %cst_115 = arith.constant 1.000000e+00 : f32
    %409 = vector.broadcast %cst_115 : f32 to vector<8x16xf32>
    %410 = arith.subf %409, %403 : vector<8x16xf32>
    %411 = arith.mulf %410, %408 : vector<8x16xf32>
    %412 = arith.mulf %403, %342 : vector<8x16xf32>
    %413 = arith.addf %411, %412 : vector<8x16xf32>
    %414 = arith.index_cast %380 : i32 to index
    %c0_116 = arith.constant 0 : index
    %c0_117 = arith.constant 0 : index
    %415 = vector.load %arg16[%414, %c0_116, %c0_117] : memref<8x8x48xf32, #tpu.memory_space<vmem>>, vector<1x8x48xf32>
    %416 = vector.shape_cast %415 : vector<1x8x48xf32> to vector<8x48xf32>
    %417 = vector.extract_strided_slice %416 {offsets = [0, 0], sizes = [8, 16], strides = [1, 1]} : vector<8x48xf32> to vector<8x16xf32>
    %418 = vector.extract_strided_slice %384 {offsets = [0, 0], sizes = [8, 16], strides = [1, 1]} : vector<8x48xf32> to vector<8x16xf32>
    %419 = arith.addf %417, %418 : vector<8x16xf32>
    %420 = arith.negf %419 : vector<8x16xf32>
    %421 = math.exp %420 : vector<8x16xf32>
    %cst_118 = arith.constant 1.000000e+00 : f32
    %422 = vector.broadcast %cst_118 : f32 to vector<8x16xf32>
    %423 = arith.addf %422, %421 : vector<8x16xf32>
    %424 = arith.divf %422, %423 : vector<8x16xf32>
    %425 = vector.extract_strided_slice %416 {offsets = [0, 16], sizes = [8, 16], strides = [1, 1]} : vector<8x48xf32> to vector<8x16xf32>
    %426 = vector.extract_strided_slice %384 {offsets = [0, 16], sizes = [8, 16], strides = [1, 1]} : vector<8x48xf32> to vector<8x16xf32>
    %427 = arith.addf %425, %426 : vector<8x16xf32>
    %428 = arith.negf %427 : vector<8x16xf32>
    %429 = math.exp %428 : vector<8x16xf32>
    %cst_119 = arith.constant 1.000000e+00 : f32
    %430 = vector.broadcast %cst_119 : f32 to vector<8x16xf32>
    %431 = arith.addf %430, %429 : vector<8x16xf32>
    %432 = arith.divf %430, %431 : vector<8x16xf32>
    %433 = vector.extract_strided_slice %416 {offsets = [0, 32], sizes = [8, 16], strides = [1, 1]} : vector<8x48xf32> to vector<8x16xf32>
    %434 = vector.extract_strided_slice %384 {offsets = [0, 32], sizes = [8, 16], strides = [1, 1]} : vector<8x48xf32> to vector<8x16xf32>
    %435 = arith.mulf %424, %434 : vector<8x16xf32>
    %436 = arith.addf %433, %435 : vector<8x16xf32>
    %437 = math.tanh %436 : vector<8x16xf32>
    %cst_120 = arith.constant 1.000000e+00 : f32
    %438 = vector.broadcast %cst_120 : f32 to vector<8x16xf32>
    %439 = arith.subf %438, %432 : vector<8x16xf32>
    %440 = arith.mulf %439, %437 : vector<8x16xf32>
    %441 = arith.mulf %432, %371 : vector<8x16xf32>
    %442 = arith.addf %440, %441 : vector<8x16xf32>
    %443 = arith.index_cast %c5_i32 : i32 to index
    %c0_121 = arith.constant 0 : index
    %c0_122 = arith.constant 0 : index
    %444 = vector.load %arg17[%443, %c0_121, %c0_122] : memref<8x8x32xf32, #tpu.memory_space<vmem>>, vector<1x8x16xf32>
    %445 = vector.shape_cast %444 : vector<1x8x16xf32> to vector<8x16xf32>
    %446 = vector.shape_cast %413 : vector<8x16xf32> to vector<1x8x16xf32>
    tpu.vector_store %arg17[%443, %c0_121, %c0_122], %446 {strides = array<i32>} : memref<8x8x32xf32, #tpu.memory_space<vmem>>, vector<1x8x16xf32>,
    %447 = arith.index_cast %380 : i32 to index
    %c0_123 = arith.constant 0 : index
    %c16_124 = arith.constant 16 : index
    %448 = vector.load %arg17[%447, %c0_123, %c16_124] : memref<8x8x32xf32, #tpu.memory_space<vmem>>, vector<1x8x16xf32>
    %449 = vector.shape_cast %448 : vector<1x8x16xf32> to vector<8x16xf32>
    %450 = vector.shape_cast %442 : vector<8x16xf32> to vector<1x8x16xf32>
    tpu.vector_store %arg17[%447, %c0_123, %c16_124], %450 {strides = array<i32>} : memref<8x8x32xf32, #tpu.memory_space<vmem>>, vector<1x8x16xf32>,
    %c6_i32 = arith.constant 6 : i32
    %c7_i32_125 = arith.constant 7 : i32
    %451 = arith.subi %c7_i32_125, %c6_i32 : i32
    %cst_126 = arith.constant dense<0.000000e+00> : vector<8x48xf32>
    %452 = tpu.matmul %413, %13, %cst_126 {dimension_numbers = #tpu.dot_dimension_numbers<[1], [0], [0], [1], [0, 0, 1, 1], [], []>} : vector<8x16xf32>, vector<16x48xf32>, vector<8x48xf32> -> vector<8x48xf32>
    %453 = arith.addf %452, %17 : vector<8x48xf32>
    %cst_127 = arith.constant dense<0.000000e+00> : vector<8x48xf32>
    %454 = tpu.matmul %442, %14, %cst_127 {dimension_numbers = #tpu.dot_dimension_numbers<[1], [0], [0], [1], [0, 0, 1, 1], [], []>} : vector<8x16xf32>, vector<16x48xf32>, vector<8x48xf32> -> vector<8x48xf32>
    %455 = arith.addf %454, %20 : vector<8x48xf32>
    %456 = arith.index_cast %c6_i32 : i32 to index
    %c0_128 = arith.constant 0 : index
    %c0_129 = arith.constant 0 : index
    %457 = vector.load %arg15[%456, %c0_128, %c0_129] : memref<8x8x48xf32, #tpu.memory_space<vmem>>, vector<1x8x48xf32>
    %458 = vector.shape_cast %457 : vector<1x8x48xf32> to vector<8x48xf32>
    %459 = vector.extract_strided_slice %458 {offsets = [0, 0], sizes = [8, 16], strides = [1, 1]} : vector<8x48xf32> to vector<8x16xf32>
    %460 = vector.extract_strided_slice %453 {offsets = [0, 0], sizes = [8, 16], strides = [1, 1]} : vector<8x48xf32> to vector<8x16xf32>
    %461 = arith.addf %459, %460 : vector<8x16xf32>
    %462 = arith.negf %461 : vector<8x16xf32>
    %463 = math.exp %462 : vector<8x16xf32>
    %cst_130 = arith.constant 1.000000e+00 : f32
    %464 = vector.broadcast %cst_130 : f32 to vector<8x16xf32>
    %465 = arith.addf %464, %463 : vector<8x16xf32>
    %466 = arith.divf %464, %465 : vector<8x16xf32>
    %467 = vector.extract_strided_slice %458 {offsets = [0, 16], sizes = [8, 16], strides = [1, 1]} : vector<8x48xf32> to vector<8x16xf32>
    %468 = vector.extract_strided_slice %453 {offsets = [0, 16], sizes = [8, 16], strides = [1, 1]} : vector<8x48xf32> to vector<8x16xf32>
    %469 = arith.addf %467, %468 : vector<8x16xf32>
    %470 = arith.negf %469 : vector<8x16xf32>
    %471 = math.exp %470 : vector<8x16xf32>
    %cst_131 = arith.constant 1.000000e+00 : f32
    %472 = vector.broadcast %cst_131 : f32 to vector<8x16xf32>
    %473 = arith.addf %472, %471 : vector<8x16xf32>
    %474 = arith.divf %472, %473 : vector<8x16xf32>
    %475 = vector.extract_strided_slice %458 {offsets = [0, 32], sizes = [8, 16], strides = [1, 1]} : vector<8x48xf32> to vector<8x16xf32>
    %476 = vector.extract_strided_slice %453 {offsets = [0, 32], sizes = [8, 16], strides = [1, 1]} : vector<8x48xf32> to vector<8x16xf32>
    %477 = arith.mulf %466, %476 : vector<8x16xf32>
    %478 = arith.addf %475, %477 : vector<8x16xf32>
    %479 = math.tanh %478 : vector<8x16xf32>
    %cst_132 = arith.constant 1.000000e+00 : f32
    %480 = vector.broadcast %cst_132 : f32 to vector<8x16xf32>
    %481 = arith.subf %480, %474 : vector<8x16xf32>
    %482 = arith.mulf %481, %479 : vector<8x16xf32>
    %483 = arith.mulf %474, %413 : vector<8x16xf32>
    %484 = arith.addf %482, %483 : vector<8x16xf32>
    %485 = arith.index_cast %451 : i32 to index
    %c0_133 = arith.constant 0 : index
    %c0_134 = arith.constant 0 : index
    %486 = vector.load %arg16[%485, %c0_133, %c0_134] : memref<8x8x48xf32, #tpu.memory_space<vmem>>, vector<1x8x48xf32>
    %487 = vector.shape_cast %486 : vector<1x8x48xf32> to vector<8x48xf32>
    %488 = vector.extract_strided_slice %487 {offsets = [0, 0], sizes = [8, 16], strides = [1, 1]} : vector<8x48xf32> to vector<8x16xf32>
    %489 = vector.extract_strided_slice %455 {offsets = [0, 0], sizes = [8, 16], strides = [1, 1]} : vector<8x48xf32> to vector<8x16xf32>
    %490 = arith.addf %488, %489 : vector<8x16xf32>
    %491 = arith.negf %490 : vector<8x16xf32>
    %492 = math.exp %491 : vector<8x16xf32>
    %cst_135 = arith.constant 1.000000e+00 : f32
    %493 = vector.broadcast %cst_135 : f32 to vector<8x16xf32>
    %494 = arith.addf %493, %492 : vector<8x16xf32>
    %495 = arith.divf %493, %494 : vector<8x16xf32>
    %496 = vector.extract_strided_slice %487 {offsets = [0, 16], sizes = [8, 16], strides = [1, 1]} : vector<8x48xf32> to vector<8x16xf32>
    %497 = vector.extract_strided_slice %455 {offsets = [0, 16], sizes = [8, 16], strides = [1, 1]} : vector<8x48xf32> to vector<8x16xf32>
    %498 = arith.addf %496, %497 : vector<8x16xf32>
    %499 = arith.negf %498 : vector<8x16xf32>
    %500 = math.exp %499 : vector<8x16xf32>
    %cst_136 = arith.constant 1.000000e+00 : f32
    %501 = vector.broadcast %cst_136 : f32 to vector<8x16xf32>
    %502 = arith.addf %501, %500 : vector<8x16xf32>
    %503 = arith.divf %501, %502 : vector<8x16xf32>
    %504 = vector.extract_strided_slice %487 {offsets = [0, 32], sizes = [8, 16], strides = [1, 1]} : vector<8x48xf32> to vector<8x16xf32>
    %505 = vector.extract_strided_slice %455 {offsets = [0, 32], sizes = [8, 16], strides = [1, 1]} : vector<8x48xf32> to vector<8x16xf32>
    %506 = arith.mulf %495, %505 : vector<8x16xf32>
    %507 = arith.addf %504, %506 : vector<8x16xf32>
    %508 = math.tanh %507 : vector<8x16xf32>
    %cst_137 = arith.constant 1.000000e+00 : f32
    %509 = vector.broadcast %cst_137 : f32 to vector<8x16xf32>
    %510 = arith.subf %509, %503 : vector<8x16xf32>
    %511 = arith.mulf %510, %508 : vector<8x16xf32>
    %512 = arith.mulf %503, %442 : vector<8x16xf32>
    %513 = arith.addf %511, %512 : vector<8x16xf32>
    %514 = arith.index_cast %c6_i32 : i32 to index
    %c0_138 = arith.constant 0 : index
    %c0_139 = arith.constant 0 : index
    %515 = vector.load %arg17[%514, %c0_138, %c0_139] : memref<8x8x32xf32, #tpu.memory_space<vmem>>, vector<1x8x16xf32>
    %516 = vector.shape_cast %515 : vector<1x8x16xf32> to vector<8x16xf32>
    %517 = vector.shape_cast %484 : vector<8x16xf32> to vector<1x8x16xf32>
    tpu.vector_store %arg17[%514, %c0_138, %c0_139], %517 {strides = array<i32>} : memref<8x8x32xf32, #tpu.memory_space<vmem>>, vector<1x8x16xf32>,
    %518 = arith.index_cast %451 : i32 to index
    %c0_140 = arith.constant 0 : index
    %c16_141 = arith.constant 16 : index
    %519 = vector.load %arg17[%518, %c0_140, %c16_141] : memref<8x8x32xf32, #tpu.memory_space<vmem>>, vector<1x8x16xf32>
    %520 = vector.shape_cast %519 : vector<1x8x16xf32> to vector<8x16xf32>
    %521 = vector.shape_cast %513 : vector<8x16xf32> to vector<1x8x16xf32>
    tpu.vector_store %arg17[%518, %c0_140, %c16_141], %521 {strides = array<i32>} : memref<8x8x32xf32, #tpu.memory_space<vmem>>, vector<1x8x16xf32>,
    %c7_i32_142 = arith.constant 7 : i32
    %c7_i32_143 = arith.constant 7 : i32
    %522 = arith.subi %c7_i32_143, %c7_i32_142 : i32
    %cst_144 = arith.constant dense<0.000000e+00> : vector<8x48xf32>
    %523 = tpu.matmul %484, %13, %cst_144 {dimension_numbers = #tpu.dot_dimension_numbers<[1], [0], [0], [1], [0, 0, 1, 1], [], []>} : vector<8x16xf32>, vector<16x48xf32>, vector<8x48xf32> -> vector<8x48xf32>
    %524 = arith.addf %523, %17 : vector<8x48xf32>
    %cst_145 = arith.constant dense<0.000000e+00> : vector<8x48xf32>
    %525 = tpu.matmul %513, %14, %cst_145 {dimension_numbers = #tpu.dot_dimension_numbers<[1], [0], [0], [1], [0, 0, 1, 1], [], []>} : vector<8x16xf32>, vector<16x48xf32>, vector<8x48xf32> -> vector<8x48xf32>
    %526 = arith.addf %525, %20 : vector<8x48xf32>
    %527 = arith.index_cast %c7_i32_142 : i32 to index
    %c0_146 = arith.constant 0 : index
    %c0_147 = arith.constant 0 : index
    %528 = vector.load %arg15[%527, %c0_146, %c0_147] : memref<8x8x48xf32, #tpu.memory_space<vmem>>, vector<1x8x48xf32>
    %529 = vector.shape_cast %528 : vector<1x8x48xf32> to vector<8x48xf32>
    %530 = vector.extract_strided_slice %529 {offsets = [0, 0], sizes = [8, 16], strides = [1, 1]} : vector<8x48xf32> to vector<8x16xf32>
    %531 = vector.extract_strided_slice %524 {offsets = [0, 0], sizes = [8, 16], strides = [1, 1]} : vector<8x48xf32> to vector<8x16xf32>
    %532 = arith.addf %530, %531 : vector<8x16xf32>
    %533 = arith.negf %532 : vector<8x16xf32>
    %534 = math.exp %533 : vector<8x16xf32>
    %cst_148 = arith.constant 1.000000e+00 : f32
    %535 = vector.broadcast %cst_148 : f32 to vector<8x16xf32>
    %536 = arith.addf %535, %534 : vector<8x16xf32>
    %537 = arith.divf %535, %536 : vector<8x16xf32>
    %538 = vector.extract_strided_slice %529 {offsets = [0, 16], sizes = [8, 16], strides = [1, 1]} : vector<8x48xf32> to vector<8x16xf32>
    %539 = vector.extract_strided_slice %524 {offsets = [0, 16], sizes = [8, 16], strides = [1, 1]} : vector<8x48xf32> to vector<8x16xf32>
    %540 = arith.addf %538, %539 : vector<8x16xf32>
    %541 = arith.negf %540 : vector<8x16xf32>
    %542 = math.exp %541 : vector<8x16xf32>
    %cst_149 = arith.constant 1.000000e+00 : f32
    %543 = vector.broadcast %cst_149 : f32 to vector<8x16xf32>
    %544 = arith.addf %543, %542 : vector<8x16xf32>
    %545 = arith.divf %543, %544 : vector<8x16xf32>
    %546 = vector.extract_strided_slice %529 {offsets = [0, 32], sizes = [8, 16], strides = [1, 1]} : vector<8x48xf32> to vector<8x16xf32>
    %547 = vector.extract_strided_slice %524 {offsets = [0, 32], sizes = [8, 16], strides = [1, 1]} : vector<8x48xf32> to vector<8x16xf32>
    %548 = arith.mulf %537, %547 : vector<8x16xf32>
    %549 = arith.addf %546, %548 : vector<8x16xf32>
    %550 = math.tanh %549 : vector<8x16xf32>
    %cst_150 = arith.constant 1.000000e+00 : f32
    %551 = vector.broadcast %cst_150 : f32 to vector<8x16xf32>
    %552 = arith.subf %551, %545 : vector<8x16xf32>
    %553 = arith.mulf %552, %550 : vector<8x16xf32>
    %554 = arith.mulf %545, %484 : vector<8x16xf32>
    %555 = arith.addf %553, %554 : vector<8x16xf32>
    %556 = arith.index_cast %522 : i32 to index
    %c0_151 = arith.constant 0 : index
    %c0_152 = arith.constant 0 : index
    %557 = vector.load %arg16[%556, %c0_151, %c0_152] : memref<8x8x48xf32, #tpu.memory_space<vmem>>, vector<1x8x48xf32>
    %558 = vector.shape_cast %557 : vector<1x8x48xf32> to vector<8x48xf32>
    %559 = vector.extract_strided_slice %558 {offsets = [0, 0], sizes = [8, 16], strides = [1, 1]} : vector<8x48xf32> to vector<8x16xf32>
    %560 = vector.extract_strided_slice %526 {offsets = [0, 0], sizes = [8, 16], strides = [1, 1]} : vector<8x48xf32> to vector<8x16xf32>
    %561 = arith.addf %559, %560 : vector<8x16xf32>
    %562 = arith.negf %561 : vector<8x16xf32>
    %563 = math.exp %562 : vector<8x16xf32>
    %cst_153 = arith.constant 1.000000e+00 : f32
    %564 = vector.broadcast %cst_153 : f32 to vector<8x16xf32>
    %565 = arith.addf %564, %563 : vector<8x16xf32>
    %566 = arith.divf %564, %565 : vector<8x16xf32>
    %567 = vector.extract_strided_slice %558 {offsets = [0, 16], sizes = [8, 16], strides = [1, 1]} : vector<8x48xf32> to vector<8x16xf32>
    %568 = vector.extract_strided_slice %526 {offsets = [0, 16], sizes = [8, 16], strides = [1, 1]} : vector<8x48xf32> to vector<8x16xf32>
    %569 = arith.addf %567, %568 : vector<8x16xf32>
    %570 = arith.negf %569 : vector<8x16xf32>
    %571 = math.exp %570 : vector<8x16xf32>
    %cst_154 = arith.constant 1.000000e+00 : f32
    %572 = vector.broadcast %cst_154 : f32 to vector<8x16xf32>
    %573 = arith.addf %572, %571 : vector<8x16xf32>
    %574 = arith.divf %572, %573 : vector<8x16xf32>
    %575 = vector.extract_strided_slice %558 {offsets = [0, 32], sizes = [8, 16], strides = [1, 1]} : vector<8x48xf32> to vector<8x16xf32>
    %576 = vector.extract_strided_slice %526 {offsets = [0, 32], sizes = [8, 16], strides = [1, 1]} : vector<8x48xf32> to vector<8x16xf32>
    %577 = arith.mulf %566, %576 : vector<8x16xf32>
    %578 = arith.addf %575, %577 : vector<8x16xf32>
    %579 = math.tanh %578 : vector<8x16xf32>
    %cst_155 = arith.constant 1.000000e+00 : f32
    %580 = vector.broadcast %cst_155 : f32 to vector<8x16xf32>
    %581 = arith.subf %580, %574 : vector<8x16xf32>
    %582 = arith.mulf %581, %579 : vector<8x16xf32>
    %583 = arith.mulf %574, %513 : vector<8x16xf32>
    %584 = arith.addf %582, %583 : vector<8x16xf32>
    %585 = arith.index_cast %c7_i32_142 : i32 to index
    %c0_156 = arith.constant 0 : index
    %c0_157 = arith.constant 0 : index
    %586 = vector.load %arg17[%585, %c0_156, %c0_157] : memref<8x8x32xf32, #tpu.memory_space<vmem>>, vector<1x8x16xf32>
    %587 = vector.shape_cast %586 : vector<1x8x16xf32> to vector<8x16xf32>
    %588 = vector.shape_cast %555 : vector<8x16xf32> to vector<1x8x16xf32>
    tpu.vector_store %arg17[%585, %c0_156, %c0_157], %588 {strides = array<i32>} : memref<8x8x32xf32, #tpu.memory_space<vmem>>, vector<1x8x16xf32>,
    %589 = arith.index_cast %522 : i32 to index
    %c0_158 = arith.constant 0 : index
    %c16_159 = arith.constant 16 : index
    %590 = vector.load %arg17[%589, %c0_158, %c16_159] : memref<8x8x32xf32, #tpu.memory_space<vmem>>, vector<1x8x16xf32>
    %591 = vector.shape_cast %590 : vector<1x8x16xf32> to vector<8x16xf32>
    %592 = vector.shape_cast %584 : vector<8x16xf32> to vector<1x8x16xf32>
    tpu.vector_store %arg17[%589, %c0_158, %c16_159], %592 {strides = array<i32>} : memref<8x8x32xf32, #tpu.memory_space<vmem>>, vector<1x8x16xf32>,
    %c8_i32 = arith.constant 8 : i32
    %c0_160 = arith.constant 0 : index
    %c0_161 = arith.constant 0 : index
    %c0_162 = arith.constant 0 : index
    %593 = vector.load %arg13[%c0_160, %c0_161, %c0_162] : memref<2x8x16xf32, #tpu.memory_space<vmem>>, vector<1x8x16xf32>
    %594 = vector.shape_cast %593 : vector<1x8x16xf32> to vector<8x16xf32>
    %595 = vector.shape_cast %555 : vector<8x16xf32> to vector<1x8x16xf32>
    tpu.vector_store %arg13[%c0_160, %c0_161, %c0_162], %595 {strides = array<i32>} : memref<2x8x16xf32, #tpu.memory_space<vmem>>, vector<1x8x16xf32>,
    %c1_163 = arith.constant 1 : index
    %c0_164 = arith.constant 0 : index
    %c0_165 = arith.constant 0 : index
    %596 = vector.load %arg13[%c1_163, %c0_164, %c0_165] : memref<2x8x16xf32, #tpu.memory_space<vmem>>, vector<1x8x16xf32>
    %597 = vector.shape_cast %596 : vector<1x8x16xf32> to vector<8x16xf32>
    %598 = vector.shape_cast %584 : vector<8x16xf32> to vector<1x8x16xf32>
    tpu.vector_store %arg13[%c1_163, %c0_164, %c0_165], %598 {strides = array<i32>} : memref<2x8x16xf32, #tpu.memory_space<vmem>>, vector<1x8x16xf32>,
    %c0_166 = arith.constant 0 : index
    %c0_167 = arith.constant 0 : index
    %c0_168 = arith.constant 0 : index
    %599 = vector.load %arg17[%c0_166, %c0_167, %c0_168] : memref<8x8x32xf32, #tpu.memory_space<vmem>>, vector<8x8x32xf32>
    %600 = vector.shape_cast %599 : vector<8x8x32xf32> to vector<64x32xf32>
    %c0_169 = arith.constant 0 : index
    %c0_170 = arith.constant 0 : index
    %601 = vector.load %arg9[%c0_169, %c0_170] : memref<32x32xf32, #tpu.memory_space<vmem>>, vector<32x32xf32>
    %cst_171 = arith.constant dense<0.000000e+00> : vector<64x32xf32>
    %602 = tpu.matmul %600, %601, %cst_171 {dimension_numbers = #tpu.dot_dimension_numbers<[1], [0], [0], [1], [0, 0, 1, 1], [], []>} : vector<64x32xf32>, vector<32x32xf32>, vector<64x32xf32> -> vector<64x32xf32>
    %c0_172 = arith.constant 0 : index
    %c0_173 = arith.constant 0 : index
    %603 = vector.load %arg10[%c0_172, %c0_173] : memref<1x32xf32, #tpu.memory_space<vmem>>, vector<1x32xf32>
    %604 = vector.broadcast %603 : vector<1x32xf32> to vector<64x32xf32>
    %605 = arith.addf %602, %604 : vector<64x32xf32>
    %606 = math.tanh %605 : vector<64x32xf32>
    %607 = vector.shape_cast %606 : vector<64x32xf32> to vector<8x8x32xf32>
    %c0_174 = arith.constant 0 : index
    %c0_175 = arith.constant 0 : index
    %608 = vector.load %arg11[%c0_174, %c0_175] : memref<1x32xf32, #tpu.memory_space<vmem>>, vector<1x32xf32>
    %609 = vector.shape_cast %608 : vector<1x32xf32> to vector<1x1x32xf32>
    %610 = vector.broadcast %609 : vector<1x1x32xf32> to vector<8x8x32xf32>
    %611 = arith.mulf %607, %610 : vector<8x8x32xf32>
    %cst_176 = arith.constant dense<0.000000e+00> : vector<8x8xf32>
    %612 = vector.multi_reduction <add>, %611, %cst_176 [2] : vector<8x8x32xf32> to vector<8x8xf32>
    %613 = tpu.transpose %612, [1, 0] : vector<8x8xf32> -> vector<8x8xf32>
    %cst_177 = arith.constant dense<0xFF800000> : vector<8xf32>
    %614 = vector.multi_reduction <maximumf>, %613, %cst_177 [1] : vector<8x8xf32> to vector<8xf32>
    %615 = vector.shape_cast %614 : vector<8xf32> to vector<8x1xf32>
    %616 = vector.broadcast %615 : vector<8x1xf32> to vector<8x8xf32>
    %617 = arith.subf %613, %616 : vector<8x8xf32>
    %618 = math.exp %617 : vector<8x8xf32>
    %cst_178 = arith.constant dense<0.000000e+00> : vector<8xf32>
    %619 = vector.multi_reduction <add>, %618, %cst_178 [1] : vector<8x8xf32> to vector<8xf32>
    %620 = vector.shape_cast %619 : vector<8xf32> to vector<8x1xf32>
    %621 = vector.broadcast %620 : vector<8x1xf32> to vector<8x8xf32>
    %622 = arith.divf %618, %621 : vector<8x8xf32>
    %c0_179 = arith.constant 0 : index
    %c0_180 = arith.constant 0 : index
    %623 = vector.load %arg14[%c0_179, %c0_180] : memref<8x8xf32, #tpu.memory_space<vmem>>, vector<8x8xf32>
    tpu.vector_store %arg14[%c0_179, %c0_180], %622 {strides = array<i32>} : memref<8x8xf32, #tpu.memory_space<vmem>>, vector<8x8xf32>,
    %624 = tpu.transpose %622, [1, 0] : vector<8x8xf32> -> vector<8x8xf32>
    %625 = vector.shape_cast %624 : vector<8x8xf32> to vector<8x8x1xf32>
    %626 = vector.broadcast %625 : vector<8x8x1xf32> to vector<8x8x32xf32>
    %627 = arith.mulf %626, %599 : vector<8x8x32xf32>
    %cst_181 = arith.constant dense<0.000000e+00> : vector<8x32xf32>
    %628 = vector.multi_reduction <add>, %627, %cst_181 [0] : vector<8x8x32xf32> to vector<8x32xf32>
    %c0_182 = arith.constant 0 : index
    %c0_183 = arith.constant 0 : index
    %629 = vector.load %arg12[%c0_182, %c0_183] : memref<8x32xf32, #tpu.memory_space<vmem>>, vector<8x32xf32>
    tpu.vector_store %arg12[%c0_182, %c0_183], %628 {strides = array<i32>} : memref<8x32xf32, #tpu.memory_space<vmem>>, vector<8x32xf32>,
    return
  }
  func.func @transform_0(%arg0: i32) -> (i32, i32, i32) {
    %c0_i32 = arith.constant 0 : i32
    %c0_i32_0 = arith.constant 0 : i32
    %c0_i32_1 = arith.constant 0 : i32
    return %c0_i32, %arg0, %c0_i32_0 : i32, i32, i32
  }
  func.func @transform_1(%arg0: i32) -> (i32, i32, i32) {
    %c0_i32 = arith.constant 0 : i32
    %c0_i32_0 = arith.constant 0 : i32
    %c0_i32_1 = arith.constant 0 : i32
    return %c0_i32, %arg0, %c0_i32_0 : i32, i32, i32
  }
  func.func @transform_2(%arg0: i32) -> (i32, i32) {
    %c0_i32 = arith.constant 0 : i32
    %c0_i32_0 = arith.constant 0 : i32
    %c0_i32_1 = arith.constant 0 : i32
    return %c0_i32, %c0_i32_0 : i32, i32
  }
  func.func @transform_3(%arg0: i32) -> (i32, i32) {
    %c0_i32 = arith.constant 0 : i32
    %c0_i32_0 = arith.constant 0 : i32
    %c0_i32_1 = arith.constant 0 : i32
    return %c0_i32, %c0_i32_0 : i32, i32
  }
  func.func @transform_4(%arg0: i32) -> (i32, i32) {
    %c0_i32 = arith.constant 0 : i32
    %c0_i32_0 = arith.constant 0 : i32
    %c0_i32_1 = arith.constant 0 : i32
    return %c0_i32, %c0_i32_0 : i32, i32
  }
  func.func @transform_5(%arg0: i32) -> (i32, i32) {
    %c0_i32 = arith.constant 0 : i32
    %c0_i32_0 = arith.constant 0 : i32
    %c0_i32_1 = arith.constant 0 : i32
    return %c0_i32, %c0_i32_0 : i32, i32
  }
  func.func @transform_6(%arg0: i32) -> (i32, i32) {
    %c0_i32 = arith.constant 0 : i32
    %c0_i32_0 = arith.constant 0 : i32
    %c0_i32_1 = arith.constant 0 : i32
    return %c0_i32, %c0_i32_0 : i32, i32
  }
  func.func @transform_7(%arg0: i32) -> (i32, i32) {
    %c0_i32 = arith.constant 0 : i32
    %c0_i32_0 = arith.constant 0 : i32
    %c0_i32_1 = arith.constant 0 : i32
    return %c0_i32, %c0_i32_0 : i32, i32
  }
  func.func @transform_8(%arg0: i32) -> (i32, i32) {
    %c0_i32 = arith.constant 0 : i32
    %c0_i32_0 = arith.constant 0 : i32
    %c0_i32_1 = arith.constant 0 : i32
    return %c0_i32, %c0_i32_0 : i32, i32
  }
  func.func @transform_9(%arg0: i32) -> (i32, i32) {
    %c0_i32 = arith.constant 0 : i32
    %c0_i32_0 = arith.constant 0 : i32
    %c0_i32_1 = arith.constant 0 : i32
    return %c0_i32, %c0_i32_0 : i32, i32
  }
  func.func @transform_10(%arg0: i32) -> (i32, i32) {
    %c0_i32 = arith.constant 0 : i32
    %c0_i32_0 = arith.constant 0 : i32
    %c0_i32_1 = arith.constant 0 : i32
    return %c0_i32, %c0_i32_0 : i32, i32
  }
  func.func @transform_11(%arg0: i32) -> (i32, i32) {
    %c0_i32 = arith.constant 0 : i32
    %c0_i32_0 = arith.constant 0 : i32
    return %arg0, %c0_i32 : i32, i32
  }
  func.func @transform_12(%arg0: i32) -> (i32, i32, i32) {
    %c0_i32 = arith.constant 0 : i32
    %c0_i32_0 = arith.constant 0 : i32
    %c0_i32_1 = arith.constant 0 : i32
    return %c0_i32, %arg0, %c0_i32_0 : i32, i32, i32
  }
  func.func @transform_13(%arg0: i32) -> (i32, i32) {
    %c0_i32 = arith.constant 0 : i32
    %c0_i32_0 = arith.constant 0 : i32
    return %arg0, %c0_i32 : i32, i32
  }
}

</mosaic_0001>

<llo_original>
// kernel: tpu_custom_call.1
$region0: #{tpu_custom_call.1}
  #allocation0 [shape = 'u32[]', space=smem, size = 0x4, offset = 0x4, fixed_abs, tag = 'smem constant byte address 0x4 - core index']
  #allocation1 [shape = 'u32[144,128]{1,0:T(1,128)}', space=vmem, size = 0x12000, scoped, tag = 'internal scratch']
  #allocation2 [shape = 'f32[8,8,48]{2,1,0:T(8,128)}', space=vmem, size = 0x8000, scoped, tag = 'scratch operand']
  #allocation3 [shape = 'f32[8,8,48]{2,1,0:T(8,128)}', space=vmem, size = 0x8000, scoped, tag = 'scratch operand']
  #allocation4 [shape = 'f32[8,8,32]{2,1,0:T(8,128)}', space=vmem, size = 0x8000, scoped, tag = 'scratch operand']
  %s0 = inlined_call_operand.hbm [shape: f32[8,8,32], index: 0, kind: input, shape index: {}]
  %s1 = inlined_call_operand.hbm [shape: f32[2,8,16], index: 1, kind: input, shape index: {}]
  %s2 = inlined_call_operand.hbm [shape: f32[32,96], index: 2, kind: input, shape index: {}]
  %s3 = inlined_call_operand.vmem [shape: f32[1,96], index: 3, kind: input, shape index: {}]
  %s4 = inlined_call_operand.hbm [shape: f32[16,48], index: 4, kind: input, shape index: {}]
  %s5 = inlined_call_operand.vmem [shape: f32[1,48], index: 5, kind: input, shape index: {}]
  %s6 = inlined_call_operand.vmem [shape: f32[16,48], index: 6, kind: input, shape index: {}]
  %s7 = inlined_call_operand.vmem [shape: f32[1,48], index: 7, kind: input, shape index: {}]
  %s8 = inlined_call_operand.hbm [shape: f32[32,32], index: 8, kind: input, shape index: {}]
  %s9 = inlined_call_operand.vmem [shape: f32[1,32], index: 9, kind: input, shape index: {}]
  %s10 = inlined_call_operand.vmem [shape: f32[1,32], index: 10, kind: input, shape index: {}]
  %s11 = inlined_call_operand.hbm [shape: f32[8,32], index: 11, kind: output, shape index: {0}]
  %s12 = inlined_call_operand.hbm [shape: f32[2,8,16], index: 12, kind: output, shape index: {1}]
  %s13 = inlined_call_operand.hbm [shape: f32[8,8], index: 13, kind: output, shape index: {2}]
  %14 = xla_tuple %s11, %s12, %s13
  %s15 = sld [smem:[#allocation0]]
  $region90: #{tpu_custom_call.1} parent=0
    _
  %s17 = ssub.s32 1, %s15
  %s18 = scalar_select 0, %s17, %s15
  $region1: #{tpu_custom_call.1} parent=0
    #allocation5 [shape = 'u8[32768]{0}', space=vmem, size = 0x8000, scoped, tag = 'input window, operand 0, single buffered']
    #allocation6 [shape = 's32[1]{0}', space=sflag, size = 0x4, scoped, tag = 'scoped memory for tpu_custom_call.1']
    #allocation7 [shape = 's32[1]{0}', space=sflag, size = 0x4, scoped, tag = 'scoped memory for tpu_custom_call.1']
    #allocation8 [shape = 'u8[8192]{0}', space=vmem, size = 0x2000, scoped, tag = 'input window, operand 1, single buffered']
    #allocation9 [shape = 's32[1]{0}', space=sflag, size = 0x4, scoped, tag = 'scoped memory for tpu_custom_call.1']
    #allocation10 [shape = 'u8[16384]{0}', space=vmem, size = 0x4000, scoped, tag = 'input window, operand 2, single buffered']
    #allocation11 [shape = 'u8[8192]{0}', space=vmem, size = 0x2000, scoped, tag = 'input window, operand 4, single buffered']
    #allocation12 [shape = 's32[1]{0}', space=sflag, size = 0x4, scoped, tag = 'scoped memory for tpu_custom_call.1']
    #allocation13 [shape = 'u8[16384]{0}', space=vmem, size = 0x4000, scoped, tag = 'input window, operand 8, single buffered']
    #allocation14 [shape = 'u8[4096]{0}', space=vmem, size = 0x1000, scoped, tag = 'output window, operand 0, single buffered']
    #allocation15 [shape = 'u8[8192]{0}', space=vmem, size = 0x2000, scoped, tag = 'output window, operand 1, single buffered']
    #allocation16 [shape = 's32[1]{0}', space=sflag, size = 0x4, scoped, tag = 'scoped memory for tpu_custom_call.1']
    #allocation17 [shape = 'u8[4096]{0}', space=vmem, size = 0x1000, scoped, tag = 'output window, operand 2, single buffered']
    %19 = vsyncpa [#allocation6], 0
    %20 = vsyncpa [#allocation9], 0
    %21 = vsyncpa [#allocation12], 0
    %22 = vsyncpa [#allocation7], 0
    %23 = vsyncpa [#allocation16], 0
    // Predicated region
    $region2: #{tpu_custom_call.1} parent=1 // pred_check
      _
    $region3: #{tpu_custom_call.1} parent=1 // pred_check_branch
      %25 = sbr.rel (0) target = $region5
    $region4: #{tpu_custom_call.1} parent=1 // pred_region
      %s27 = ssub.s32 1024, 1024
      %28 = vsyncadd [#allocation6], %s27
      %s29 = sshll.u32 [#allocation5], 4
      %s30 = int_to_ptr.vmem [resolvable:$true] %s29
      %35 = dma.hbm_to_vmem [thread:$0]  %s0, 1024, %s30, [#allocation6], 128, 128, 8
    $region5: #{tpu_custom_call.1} parent=1 // pred_fallthru
      _
    // Predicated region
    $region6: #{tpu_custom_call.1} parent=1 // pred_check
      _
    $region7: #{tpu_custom_call.1} parent=1 // pred_check_branch
      %37 = sbr.rel (0) target = $region9
    $region8: #{tpu_custom_call.1} parent=1 // pred_region
      %s39 = ssub.s32 256, 256
      %40 = vsyncadd [#allocation9], %s39
      %s41 = sshll.u32 [#allocation8], 4
      %s42 = int_to_ptr.vmem [resolvable:$true] %s41
      %47 = dma.hbm_to_vmem [thread:$0]  %s1, 256, %s42, [#allocation9], 128, 128, 8
    $region9: #{tpu_custom_call.1} parent=1 // pred_fallthru
      _
    // Predicated region
    $region10: #{tpu_custom_call.1} parent=1 // pred_check
      _
    $region11: #{tpu_custom_call.1} parent=1 // pred_check_branch
      %49 = sbr.rel (0) target = $region13
    $region12: #{tpu_custom_call.1} parent=1 // pred_region
      %s51 = ssub.s32 512, 512
      %52 = vsyncadd [#allocation9], %s51
      %s53 = sshll.u32 [#allocation10], 4
      %s54 = int_to_ptr.vmem [resolvable:$true] %s53
      %59 = dma.hbm_to_vmem [thread:$0]  %s2, 512, %s54, [#allocation9], 128, 128, 8
    $region13: #{tpu_custom_call.1} parent=1 // pred_fallthru
      _
    // Predicated region
    $region14: #{tpu_custom_call.1} parent=1 // pred_check
      _
    $region15: #{tpu_custom_call.1} parent=1 // pred_check_branch
      %61 = sbr.rel (0) target = $region17
    $region16: #{tpu_custom_call.1} parent=1 // pred_region
      _
    $region17: #{tpu_custom_call.1} parent=1 // pred_fallthru
      _
    // Predicated region
    $region18: #{tpu_custom_call.1} parent=1 // pred_check
      _
    $region19: #{tpu_custom_call.1} parent=1 // pred_check_branch
      %63 = sbr.rel (0) target = $region21
    $region20: #{tpu_custom_call.1} parent=1 // pred_region
      %s65 = ssub.s32 256, 256
      %66 = vsyncadd [#allocation12], %s65
      %s67 = sshll.u32 [#allocation11], 4
      %s68 = int_to_ptr.vmem [resolvable:$true] %s67
      %73 = dma.hbm_to_vmem [thread:$0]  %s4, 256, %s68, [#allocation12], 128, 128, 8
    $region21: #{tpu_custom_call.1} parent=1 // pred_fallthru
      _
    // Predicated region
    $region22: #{tpu_custom_call.1} parent=1 // pred_check
      _
    $region23: #{tpu_custom_call.1} parent=1 // pred_check_branch
      %75 = sbr.rel (0) target = $region25
    $region24: #{tpu_custom_call.1} parent=1 // pred_region
      _
    $region25: #{tpu_custom_call.1} parent=1 // pred_fallthru
      _
    // Predicated region
    $region26: #{tpu_custom_call.1} parent=1 // pred_check
      _
    $region27: #{tpu_custom_call.1} parent=1 // pred_check_branch
      %77 = sbr.rel (0) target = $region29
    $region28: #{tpu_custom_call.1} parent=1 // pred_region
      _
    $region29: #{tpu_custom_call.1} parent=1 // pred_fallthru
      _
    // Predicated region
    $region30: #{tpu_custom_call.1} parent=1 // pred_check
      _
    $region31: #{tpu_custom_call.1} parent=1 // pred_check_branch
      %79 = sbr.rel (0) target = $region33
    $region32: #{tpu_custom_call.1} parent=1 // pred_region
      _
    $region33: #{tpu_custom_call.1} parent=1 // pred_fallthru
      _
    // Predicated region
    $region34: #{tpu_custom_call.1} parent=1 // pred_check
      _
    $region35: #{tpu_custom_call.1} parent=1 // pred_check_branch
      %81 = sbr.rel (0) target = $region37
    $region36: #{tpu_custom_call.1} parent=1 // pred_region
      %s83 = ssub.s32 512, 512
      %84 = vsyncadd [#allocation12], %s83
      %s85 = sshll.u32 [#allocation13], 4
      %s86 = int_to_ptr.vmem [resolvable:$true] %s85
      %91 = dma.hbm_to_vmem [thread:$0]  %s8, 512, %s86, [#allocation12], 128, 128, 8
    $region37: #{tpu_custom_call.1} parent=1 // pred_fallthru
      _
    // Predicated region
    $region38: #{tpu_custom_call.1} parent=1 // pred_check
      _
    $region39: #{tpu_custom_call.1} parent=1 // pred_check_branch
      %93 = sbr.rel (0) target = $region41
    $region40: #{tpu_custom_call.1} parent=1 // pred_region
      _
    $region41: #{tpu_custom_call.1} parent=1 // pred_fallthru
      _
    // Predicated region
    $region42: #{tpu_custom_call.1} parent=1 // pred_check
      _
    $region43: #{tpu_custom_call.1} parent=1 // pred_check_branch
      %95 = sbr.rel (0) target = $region45
    $region44: #{tpu_custom_call.1} parent=1 // pred_region
      _
    $region45: #{tpu_custom_call.1} parent=1 // pred_fallthru
      _
    // Predicated region
    $region46: #{tpu_custom_call.1} parent=1 // pred_check
      _
    $region47: #{tpu_custom_call.1} parent=1 // pred_check_branch
      %97 = sbr.rel (0) target = $region49
    $region48: #{tpu_custom_call.1} parent=1 // pred_region
      %98 = dma.done [#allocation6], 1024
    $region49: #{tpu_custom_call.1} parent=1 // pred_fallthru
      _
    // Predicated region
    $region50: #{tpu_custom_call.1} parent=1 // pred_check
      _
    $region51: #{tpu_custom_call.1} parent=1 // pred_check_branch
      %100 = sbr.rel (0) target = $region53
    $region52: #{tpu_custom_call.1} parent=1 // pred_region
      %101 = dma.done [#allocation9], 256
    $region53: #{tpu_custom_call.1} parent=1 // pred_fallthru
      _
    // Predicated region
    $region54: #{tpu_custom_call.1} parent=1 // pred_check
      _
    $region55: #{tpu_custom_call.1} parent=1 // pred_check_branch
      %103 = sbr.rel (0) target = $region57
    $region56: #{tpu_custom_call.1} parent=1 // pred_region
      %104 = dma.done [#allocation9], 512
    $region57: #{tpu_custom_call.1} parent=1 // pred_fallthru
      _
    // Predicated region
    $region58: #{tpu_custom_call.1} parent=1 // pred_check
      _
    $region59: #{tpu_custom_call.1} parent=1 // pred_check_branch
      %106 = sbr.rel (0) target = $region61
    $region60: #{tpu_custom_call.1} parent=1 // pred_region
      %107 = dma.done [#allocation12], 256
    $region61: #{tpu_custom_call.1} parent=1 // pred_fallthru
      _
    // Predicated region
    $region62: #{tpu_custom_call.1} parent=1 // pred_check
      _
    $region63: #{tpu_custom_call.1} parent=1 // pred_check_branch
      %109 = sbr.rel (0) target = $region65
    $region64: #{tpu_custom_call.1} parent=1 // pred_region
      %110 = dma.done [#allocation12], 512
    $region65: #{tpu_custom_call.1} parent=1 // pred_fallthru
      _
    %v111 = vld [vmem:[#allocation5] sm:$0xff]
    %v112 = vld [vmem:[#allocation5 + $0x8] sm:$0xff]
    %v113 = vld [vmem:[#allocation5 + $0x10] sm:$0xff]
    %v114 = vld [vmem:[#allocation5 + $0x18] sm:$0xff]
    %v115 = vld [vmem:[#allocation5 + $0x20] sm:$0xff]
    %v116 = vld [vmem:[#allocation5 + $0x28] sm:$0xff]
    %v117 = vld [vmem:[#allocation5 + $0x30] sm:$0xff]
    %v118 = vld [vmem:[#allocation5 + $0x38] sm:$0xff]
    %v119 = vld [vmem:[#allocation10] sm:$0xff]
    %v120 = vld [vmem:[#allocation10 + $0x8] sm:$0xff]
    %v121 = vld [vmem:[#allocation10 + $0x10] sm:$0xff]
    %v122 = vld [vmem:[#allocation10 + $0x18] sm:$0xff]
    %v123 = vld [vmem:[%s3] sm:$0x1]
    %v125 = vlaneseq
    %v126 = vshrl.u32 %v125, 7
    %v127 = vsub.s32 0, %v126
    %v128 = vrot.slane %v123, %v127
    %vm130 = vcmask 261120
    %v132 = vsel %vm130, %v111, 0
    %v135 = vsel %vm130, %v112, 0
    %v138 = vsel %vm130, %v113, 0
    %v141 = vsel %vm130, %v114, 0
    %v144 = vsel %vm130, %v115, 0
    %v147 = vsel %vm130, %v116, 0
    %v150 = vsel %vm130, %v117, 0
    %v153 = vsel %vm130, %v118, 0
    %155 = vmatprep.subr.mxu0 0.0
    %156 = vmatpush1.msra.mxu0 %v119
    %157 = vmatprep.subr.mxu0 0.0
    %158 = vmatpush1.msra.mxu0 %v120
    %159 = vmatprep.subr.mxu0 0.0
    %160 = vmatpush1.msra.mxu0 %v121
    %161 = vmatprep.subr.mxu0 0.0
    %162 = vmatpush1.msra.mxu0 %v122
    %163 = vmatprep.subr.mxu0 0.0
    %164 = vmatpush1.msra.mxu0 0.0
    %165 = vmatprep.subr.mxu0 0.0
    %166 = vmatpush1.msra.mxu0 0.0
    %167 = vmatprep.subr.mxu0 0.0
    %168 = vmatpush1.msra.mxu0 0.0
    %169 = vmatprep.subr.mxu0 0.0
    %170 = vmatpush1.msra.mxu0 0.0
    %171 = vmatprep.subr.mxu0 0.0
    %172 = vmatpush1.msra.mxu0 0.0
    %173 = vmatprep.subr.mxu0 0.0
    %174 = vmatpush1.msra.mxu0 0.0
    %175 = vmatprep.subr.mxu0 0.0
    %176 = vmatpush1.msra.mxu0 0.0
    %177 = vmatprep.subr.mxu0 0.0
    %178 = vmatpush1.msra.mxu0 0.0
    %179 = vmatprep.subr.mxu0 0.0
    %180 = vmatpush1.msra.mxu0 0.0
    %181 = vmatprep.subr.mxu0 0.0
    %182 = vmatpush1.msra.mxu0 0.0
    %183 = vmatprep.subr.mxu0 0.0
    %184 = vmatpush1.msra.mxu0 0.0
    %185 = vmatprep.subr.mxu0 0.0
    %186 = vmatpush1.msra.mxu0 0.0
    %187 = vmatprep.subr.mxu0 0.0
    %188 = vmatpush1.msra.mxu0 0.0
    %189 = vmatprep.subr.mxu0 0.0
    %190 = vmatpush1.msra.mxu0 0.0
    %191 = vmatprep.subr.mxu0 0.0
    %192 = vmatpush1.msra.mxu0 0.0
    %193 = vmatprep.subr.mxu0 0.0
    %194 = vmatpush1.msra.mxu0 0.0
    %195 = vmatprep.subr.mxu0 0.0
    %196 = vmatpush1.msra.mxu0 0.0
    %197 = vmatprep.subr.mxu0 0.0
    %198 = vmatpush1.msra.mxu0 0.0
    %199 = vmatprep.subr.mxu0 0.0
    %200 = vmatpush1.msra.mxu0 0.0
    %201 = vmatprep.subr.mxu0 0.0
    %202 = vmatpush1.msra.mxu0 0.0
    %203 = vmatprep.subr.mxu0 0.0
    %204 = vmatpush1.msra.mxu0 0.0
    %205 = vmatprep.subr.mxu0 0.0
    %206 = vmatpush1.msra.mxu0 0.0
    %207 = vmatprep.subr.mxu0 0.0
    %208 = vmatpush1.msra.mxu0 0.0
    %209 = vmatprep.subr.mxu0 0.0
    %210 = vmatpush1.msra.mxu0 0.0
    %211 = vmatprep.subr.mxu0 0.0
    %212 = vmatpush1.msra.mxu0 0.0
    %213 = vmatprep.subr.mxu0 0.0
    %214 = vmatpush1.msra.mxu0 0.0
    %215 = vmatprep.subr.mxu0 0.0
    %216 = vmatpush1.msra.mxu0 0.0
    %217 = vmatprep.subr.mxu0 0.0
    %218 = vmatpush1.msra.mxu0 0.0
    %219 = vmatprep.mubr.f32.mxu0 0.0
    %220 = vmatmul.mubr.f32.gmra.mrb[0].mxu0 %v132
    %v221 = vpop.f32.mrb[0].mxu0
    %v222 = vadd.f32 %v128, %v221
    %v223 = vpop.f32.mrb[0].mxu0
    %224 = vmatprep.mubr.f32.mxu0 0.0
    %225 = vmatmul.mubr.f32.gmra.mrb[0].mxu0 %v135
    %v226 = vpop.f32.mrb[0].mxu0
    %v227 = vadd.f32 %v128, %v226
    %v228 = vpop.f32.mrb[0].mxu0
    %229 = vmatprep.mubr.f32.mxu0 0.0
    %230 = vmatmul.mubr.f32.gmra.mrb[0].mxu0 %v138
    %v231 = vpop.f32.mrb[0].mxu0
    %v232 = vadd.f32 %v128, %v231
    %v233 = vpop.f32.mrb[0].mxu0
    %234 = vmatprep.mubr.f32.mxu0 0.0
    %235 = vmatmul.mubr.f32.gmra.mrb[0].mxu0 %v141
    %v236 = vpop.f32.mrb[0].mxu0
    %v237 = vadd.f32 %v128, %v236
    %v238 = vpop.f32.mrb[0].mxu0
    %239 = vmatprep.mubr.f32.mxu0 0.0
    %240 = vmatmul.mubr.f32.gmra.mrb[0].mxu0 %v144
    %v241 = vpop.f32.mrb[0].mxu0
    %v242 = vadd.f32 %v128, %v241
    %v243 = vpop.f32.mrb[0].mxu0
    %244 = vmatprep.mubr.f32.mxu0 0.0
    %245 = vmatmul.mubr.f32.gmra.mrb[0].mxu0 %v147
    %v246 = vpop.f32.mrb[0].mxu0
    %v247 = vadd.f32 %v128, %v246
    %v248 = vpop.f32.mrb[0].mxu0
    %249 = vmatprep.mubr.f32.mxu0 0.0
    %250 = vmatmul.mubr.f32.gmra.mrb[0].mxu0 %v150
    %v251 = vpop.f32.mrb[0].mxu0
    %v252 = vadd.f32 %v128, %v251
    %v253 = vpop.f32.mrb[0].mxu0
    %254 = vmatprep.mubr.f32.mxu0 0.0
    %255 = vmatmul.mubr.f32.gmra.mrb[0].mxu0 %v153
    %v256 = vpop.f32.mrb[0].mxu0
    %v257 = vadd.f32 %v128, %v256
    %v258 = vpop.f32.mrb[0].mxu0
    %259 = vdwg.mxu0
    %vm260 = vcmask 392192
    %261 = vst.msk [vmem:[#allocation2] sm:$0xff] %vm260, %v222
    %262 = vst.msk [vmem:[#allocation2 + $0x8] sm:$0xff] %vm260, %v227
    %263 = vst.msk [vmem:[#allocation2 + $0x10] sm:$0xff] %vm260, %v232
    %264 = vst.msk [vmem:[#allocation2 + $0x18] sm:$0xff] %vm260, %v237
    %265 = vst.msk [vmem:[#allocation2 + $0x20] sm:$0xff] %vm260, %v242
    %266 = vst.msk [vmem:[#allocation2 + $0x28] sm:$0xff] %vm260, %v247
    %267 = vst.msk [vmem:[#allocation2 + $0x30] sm:$0xff] %vm260, %v252
    %268 = vst.msk [vmem:[#allocation2 + $0x38] sm:$0xff] %vm260, %v257
    %277 = vrot.lane.b32.xlu0 %v222, 80
    %v278 = vpop.permute.xlu0 %277
    %279 = vrot.lane.b32.xlu0 %v227, 80
    %v280 = vpop.permute.xlu0 %279
    %281 = vrot.lane.b32.xlu0 %v232, 80
    %v282 = vpop.permute.xlu0 %281
    %283 = vrot.lane.b32.xlu0 %v237, 80
    %v284 = vpop.permute.xlu0 %283
    %285 = vrot.lane.b32.xlu0 %v242, 80
    %v286 = vpop.permute.xlu0 %285
    %287 = vrot.lane.b32.xlu0 %v247, 80
    %v288 = vpop.permute.xlu0 %287
    %289 = vrot.lane.b32.xlu0 %v252, 80
    %v290 = vpop.permute.xlu0 %289
    %291 = vrot.lane.b32.xlu0 %v257, 80
    %v292 = vpop.permute.xlu0 %291
    %301 = vst.msk [vmem:[#allocation3] sm:$0xff] %vm260, %v278
    %302 = vst.msk [vmem:[#allocation3 + $0x8] sm:$0xff] %vm260, %v280
    %303 = vst.msk [vmem:[#allocation3 + $0x10] sm:$0xff] %vm260, %v282
    %304 = vst.msk [vmem:[#allocation3 + $0x18] sm:$0xff] %vm260, %v284
    %305 = vst.msk [vmem:[#allocation3 + $0x20] sm:$0xff] %vm260, %v286
    %306 = vst.msk [vmem:[#allocation3 + $0x28] sm:$0xff] %vm260, %v288
    %307 = vst.msk [vmem:[#allocation3 + $0x30] sm:$0xff] %vm260, %v290
    %308 = vst.msk [vmem:[#allocation3 + $0x38] sm:$0xff] %vm260, %v292
    %v309 = vld [vmem:[#allocation11] sm:$0xff]
    %v310 = vld [vmem:[#allocation11 + $0x8] sm:$0xff]
    %v311 = vld [vmem:[%s6] sm:$0xff]
    %v312 = vld [vmem:[%s6 + $0x8] sm:$0xff]
    %v313 = vld [vmem:[%s5] sm:$0x1]
    %v315 = vlaneseq
    %v316 = vshrl.u32 %v315, 7
    %v317 = vsub.s32 0, %v316
    %v318 = vrot.slane %v313, %v317
    %v320 = vld [vmem:[%s7] sm:$0x1]
    %v322 = vlaneseq
    %v323 = vshrl.u32 %v322, 7
    %v324 = vsub.s32 0, %v323
    %v325 = vrot.slane %v320, %v324
    %v327 = vld [vmem:[#allocation8] sm:$0xff]
    %s328 = scalar_lea.vmem [#allocation8], 8
    %v329 = vld [vmem:[%s328] sm:$0xff]
    %vm330 = vcmask 130048
    %v332 = vsel %vm330, %v327, 0
    %334 = vmatprep.subr.mxu0 0.0
    %335 = vmatpush1.msra.mxu0 %v309
    %336 = vmatprep.subr.mxu0 0.0
    %337 = vmatpush1.msra.mxu0 %v310
    %338 = vmatprep.subr.mxu0 0.0
    %339 = vmatpush1.msra.mxu0 0.0
    %340 = vmatprep.subr.mxu0 0.0
    %341 = vmatpush1.msra.mxu0 0.0
    %342 = vmatprep.subr.mxu0 0.0
    %343 = vmatpush1.msra.mxu0 0.0
    %344 = vmatprep.subr.mxu0 0.0
    %345 = vmatpush1.msra.mxu0 0.0
    %346 = vmatprep.subr.mxu0 0.0
    %347 = vmatpush1.msra.mxu0 0.0
    %348 = vmatprep.subr.mxu0 0.0
    %349 = vmatpush1.msra.mxu0 0.0
    %350 = vmatprep.subr.mxu0 0.0
    %351 = vmatpush1.msra.mxu0 0.0
    %352 = vmatprep.subr.mxu0 0.0
    %353 = vmatpush1.msra.mxu0 0.0
    %354 = vmatprep.subr.mxu0 0.0
    %355 = vmatpush1.msra.mxu0 0.0
    %356 = vmatprep.subr.mxu0 0.0
    %357 = vmatpush1.msra.mxu0 0.0
    %358 = vmatprep.subr.mxu0 0.0
    %359 = vmatpush1.msra.mxu0 0.0
    %360 = vmatprep.subr.mxu0 0.0
    %361 = vmatpush1.msra.mxu0 0.0
    %362 = vmatprep.subr.mxu0 0.0
    %363 = vmatpush1.msra.mxu0 0.0
    %364 = vmatprep.subr.mxu0 0.0
    %365 = vmatpush1.msra.mxu0 0.0
    %366 = vmatprep.subr.mxu0 0.0
    %367 = vmatpush1.msra.mxu0 0.0
    %368 = vmatprep.subr.mxu0 0.0
    %369 = vmatpush1.msra.mxu0 0.0
    %370 = vmatprep.subr.mxu0 0.0
    %371 = vmatpush1.msra.mxu0 0.0
    %372 = vmatprep.subr.mxu0 0.0
    %373 = vmatpush1.msra.mxu0 0.0
    %374 = vmatprep.subr.mxu0 0.0
    %375 = vmatpush1.msra.mxu0 0.0
    %376 = vmatprep.subr.mxu0 0.0
    %377 = vmatpush1.msra.mxu0 0.0
    %378 = vmatprep.subr.mxu0 0.0
    %379 = vmatpush1.msra.mxu0 0.0
    %380 = vmatprep.subr.mxu0 0.0
    %381 = vmatpush1.msra.mxu0 0.0
    %382 = vmatprep.subr.mxu0 0.0
    %383 = vmatpush1.msra.mxu0 0.0
    %384 = vmatprep.subr.mxu0 0.0
    %385 = vmatpush1.msra.mxu0 0.0
    %386 = vmatprep.subr.mxu0 0.0
    %387 = vmatpush1.msra.mxu0 0.0
    %388 = vmatprep.subr.mxu0 0.0
    %389 = vmatpush1.msra.mxu0 0.0
    %390 = vmatprep.subr.mxu0 0.0
    %391 = vmatpush1.msra.mxu0 0.0
    %392 = vmatprep.subr.mxu0 0.0
    %393 = vmatpush1.msra.mxu0 0.0
    %394 = vmatprep.subr.mxu0 0.0
    %395 = vmatpush1.msra.mxu0 0.0
    %396 = vmatprep.subr.mxu0 0.0
    %397 = vmatpush1.msra.mxu0 0.0
    %398 = vmatprep.mubr.f32.mxu0 0.0
    %399 = vmatmul.mubr.f32.gmra.mrb[0].mxu0 %v332
    %v400 = vpop.f32.mrb[0].mxu0
    %v401 = vadd.f32 %v318, %v400
    %v402 = vpop.f32.mrb[0].mxu0
    %403 = vdwg.mxu0
    %v405 = vsel %vm330, %v329, 0
    %407 = vmatprep.subr.mxu0 0.0
    %408 = vmatpush1.msra.mxu0 %v311
    %409 = vmatprep.subr.mxu0 0.0
    %410 = vmatpush1.msra.mxu0 %v312
    %411 = vmatprep.subr.mxu0 0.0
    %412 = vmatpush1.msra.mxu0 0.0
    %413 = vmatprep.subr.mxu0 0.0
    %414 = vmatpush1.msra.mxu0 0.0
    %415 = vmatprep.subr.mxu0 0.0
    %416 = vmatpush1.msra.mxu0 0.0
    %417 = vmatprep.subr.mxu0 0.0
    %418 = vmatpush1.msra.mxu0 0.0
    %419 = vmatprep.subr.mxu0 0.0
    %420 = vmatpush1.msra.mxu0 0.0
    %421 = vmatprep.subr.mxu0 0.0
    %422 = vmatpush1.msra.mxu0 0.0
    %423 = vmatprep.subr.mxu0 0.0
    %424 = vmatpush1.msra.mxu0 0.0
    %425 = vmatprep.subr.mxu0 0.0
    %426 = vmatpush1.msra.mxu0 0.0
    %427 = vmatprep.subr.mxu0 0.0
    %428 = vmatpush1.msra.mxu0 0.0
    %429 = vmatprep.subr.mxu0 0.0
    %430 = vmatpush1.msra.mxu0 0.0
    %431 = vmatprep.subr.mxu0 0.0
    %432 = vmatpush1.msra.mxu0 0.0
    %433 = vmatprep.subr.mxu0 0.0
    %434 = vmatpush1.msra.mxu0 0.0
    %435 = vmatprep.subr.mxu0 0.0
    %436 = vmatpush1.msra.mxu0 0.0
    %437 = vmatprep.subr.mxu0 0.0
    %438 = vmatpush1.msra.mxu0 0.0
    %439 = vmatprep.subr.mxu0 0.0
    %440 = vmatpush1.msra.mxu0 0.0
    %441 = vmatprep.subr.mxu0 0.0
    %442 = vmatpush1.msra.mxu0 0.0
    %443 = vmatprep.subr.mxu0 0.0
    %444 = vmatpush1.msra.mxu0 0.0
    %445 = vmatprep.subr.mxu0 0.0
    %446 = vmatpush1.msra.mxu0 0.0
    %447 = vmatprep.subr.mxu0 0.0
    %448 = vmatpush1.msra.mxu0 0.0
    %449 = vmatprep.subr.mxu0 0.0
    %450 = vmatpush1.msra.mxu0 0.0
    %451 = vmatprep.subr.mxu0 0.0
    %452 = vmatpush1.msra.mxu0 0.0
    %453 = vmatprep.subr.mxu0 0.0
    %454 = vmatpush1.msra.mxu0 0.0
    %455 = vmatprep.subr.mxu0 0.0
    %456 = vmatpush1.msra.mxu0 0.0
    %457 = vmatprep.subr.mxu0 0.0
    %458 = vmatpush1.msra.mxu0 0.0
    %459 = vmatprep.subr.mxu0 0.0
    %460 = vmatpush1.msra.mxu0 0.0
    %461 = vmatprep.subr.mxu0 0.0
    %462 = vmatpush1.msra.mxu0 0.0
    %463 = vmatprep.subr.mxu0 0.0
    %464 = vmatpush1.msra.mxu0 0.0
    %465 = vmatprep.subr.mxu0 0.0
    %466 = vmatpush1.msra.mxu0 0.0
    %467 = vmatprep.subr.mxu0 0.0
    %468 = vmatpush1.msra.mxu0 0.0
    %469 = vmatprep.subr.mxu0 0.0
    %470 = vmatpush1.msra.mxu0 0.0
    %471 = vmatprep.mubr.f32.mxu0 0.0
    %472 = vmatmul.mubr.f32.gmra.mrb[0].mxu0 %v405
    %v473 = vpop.f32.mrb[0].mxu0
    %v474 = vadd.f32 %v325, %v473
    %v475 = vpop.f32.mrb[0].mxu0
    %476 = vdwg.mxu0
    %v477 = vld [vmem:[#allocation2] sm:$0xff]
    %v478 = vadd.f32 %v477, %v401
    %v479 = vxor.u32 %v478, 2147483648
    %v480 = vmul.f32 %v479, 1.442695
    %v481 = vpow.pop %v480
    %v482 = vadd.f32 %v481, 1.0
    %v483 = vrcp.pop %v482
    %v484 = vmul.f32 1.0, %v483
    %486 = vrot.lane.b32.xlu0 %v401, 96
    %v487 = vpop.permute.xlu0 %486
    %v489 = vmul.f32 %v484, %v487
    %491 = vrot.lane.b32.xlu0 %v489, 32
    %v492 = vpop.permute.xlu0 %491
    %v494 = vadd.f32 %v477, %v492
    %v495 = vtanh.pop %v494
    %v496 = vsub.f32 1.0, %v484
    %498 = vrot.lane.b32.xlu0 %v495, 112
    %v499 = vpop.permute.xlu0 %498
    %v501 = vmul.f32 %v496, %v499
    %502 = vrot.lane.b32.xlu0 %v327, 16
    %v503 = vpop.permute.xlu0 %502
    %v505 = vmul.f32 %v484, %v503
    %v506 = vadd.f32 %v501, %v505
    %s507 = scalar_lea.vmem [#allocation3], 56
    %v508 = vld [vmem:[%s507] sm:$0xff]
    %v509 = vadd.f32 %v508, %v474
    %v510 = vxor.u32 %v509, 2147483648
    %v511 = vmul.f32 %v510, 1.442695
    %v512 = vpow.pop %v511
    %v513 = vadd.f32 %v512, 1.0
    %v514 = vrcp.pop %v513
    %v515 = vmul.f32 1.0, %v514
    %517 = vrot.lane.b32.xlu0 %v474, 96
    %v518 = vpop.permute.xlu0 %517
    %v520 = vmul.f32 %v515, %v518
    %522 = vrot.lane.b32.xlu0 %v520, 32
    %v523 = vpop.permute.xlu0 %522
    %v525 = vadd.f32 %v508, %v523
    %v526 = vtanh.pop %v525
    %v527 = vsub.f32 1.0, %v515
    %529 = vrot.lane.b32.xlu0 %v526, 112
    %v530 = vpop.permute.xlu0 %529
    %v532 = vmul.f32 %v527, %v530
    %533 = vrot.lane.b32.xlu0 %v329, 16
    %v534 = vpop.permute.xlu0 %533
    %v536 = vmul.f32 %v515, %v534
    %v537 = vadd.f32 %v532, %v536
    %539 = vrot.lane.b32.xlu0 %v506, 112
    %v540 = vpop.permute.xlu0 %539
    %542 = vst.msk [vmem:[#allocation4] sm:$0xff] %vm330, %v540
    %s543 = scalar_lea.vmem [#allocation4], 56
    %vm544 = vcmask 261248
    %545 = vst.msk [vmem:[%s543] sm:$0xff] %vm544, %v537
    %v546 = vsel %vm330, %v540, 0
    %548 = vmatprep.subr.mxu0 0.0
    %549 = vmatpush1.msra.mxu0 %v309
    %550 = vmatprep.subr.mxu0 0.0
    %551 = vmatpush1.msra.mxu0 %v310
    %552 = vmatprep.subr.mxu0 0.0
    %553 = vmatpush1.msra.mxu0 0.0
    %554 = vmatprep.subr.mxu0 0.0
    %555 = vmatpush1.msra.mxu0 0.0
    %556 = vmatprep.subr.mxu0 0.0
    %557 = vmatpush1.msra.mxu0 0.0
    %558 = vmatprep.subr.mxu0 0.0
    %559 = vmatpush1.msra.mxu0 0.0
    %560 = vmatprep.subr.mxu0 0.0
    %561 = vmatpush1.msra.mxu0 0.0
    %562 = vmatprep.subr.mxu0 0.0
    %563 = vmatpush1.msra.mxu0 0.0
    %564 = vmatprep.subr.mxu0 0.0
    %565 = vmatpush1.msra.mxu0 0.0
    %566 = vmatprep.subr.mxu0 0.0
    %567 = vmatpush1.msra.mxu0 0.0
    %568 = vmatprep.subr.mxu0 0.0
    %569 = vmatpush1.msra.mxu0 0.0
    %570 = vmatprep.subr.mxu0 0.0
    %571 = vmatpush1.msra.mxu0 0.0
    %572 = vmatprep.subr.mxu0 0.0
    %573 = vmatpush1.msra.mxu0 0.0
    %574 = vmatprep.subr.mxu0 0.0
    %575 = vmatpush1.msra.mxu0 0.0
    %576 = vmatprep.subr.mxu0 0.0
    %577 = vmatpush1.msra.mxu0 0.0
    %578 = vmatprep.subr.mxu0 0.0
    %579 = vmatpush1.msra.mxu0 0.0
    %580 = vmatprep.subr.mxu0 0.0
    %581 = vmatpush1.msra.mxu0 0.0
    %582 = vmatprep.subr.mxu0 0.0
    %583 = vmatpush1.msra.mxu0 0.0
    %584 = vmatprep.subr.mxu0 0.0
    %585 = vmatpush1.msra.mxu0 0.0
    %586 = vmatprep.subr.mxu0 0.0
    %587 = vmatpush1.msra.mxu0 0.0
    %588 = vmatprep.subr.mxu0 0.0
    %589 = vmatpush1.msra.mxu0 0.0
    %590 = vmatprep.subr.mxu0 0.0
    %591 = vmatpush1.msra.mxu0 0.0
    %592 = vmatprep.subr.mxu0 0.0
    %593 = vmatpush1.msra.mxu0 0.0
    %594 = vmatprep.subr.mxu0 0.0
    %595 = vmatpush1.msra.mxu0 0.0
    %596 = vmatprep.subr.mxu0 0.0
    %597 = vmatpush1.msra.mxu0 0.0
    %598 = vmatprep.subr.mxu0 0.0
    %599 = vmatpush1.msra.mxu0 0.0
    %600 = vmatprep.subr.mxu0 0.0
    %601 = vmatpush1.msra.mxu0 0.0
    %602 = vmatprep.subr.mxu0 0.0
    %603 = vmatpush1.msra.mxu0 0.0
    %604 = vmatprep.subr.mxu0 0.0
    %605 = vmatpush1.msra.mxu0 0.0
    %606 = vmatprep.subr.mxu0 0.0
    %607 = vmatpush1.msra.mxu0 0.0
    %608 = vmatprep.subr.mxu0 0.0
    %609 = vmatpush1.msra.mxu0 0.0
    %610 = vmatprep.subr.mxu0 0.0
    %611 = vmatpush1.msra.mxu0 0.0
    %612 = vmatprep.mubr.f32.mxu0 0.0
    %613 = vmatmul.mubr.f32.gmra.mrb[0].mxu0 %v546
    %v614 = vpop.f32.mrb[0].mxu0
    %v615 = vadd.f32 %v318, %v614
    %v616 = vpop.f32.mrb[0].mxu0
    %617 = vdwg.mxu0
    %619 = vrot.lane.b32.xlu0 %v537, 112
    %v620 = vpop.permute.xlu0 %619
    %v621 = vsel %vm330, %v620, 0
    %623 = vmatprep.subr.mxu0 0.0
    %624 = vmatpush1.msra.mxu0 %v311
    %625 = vmatprep.subr.mxu0 0.0
    %626 = vmatpush1.msra.mxu0 %v312
    %627 = vmatprep.subr.mxu0 0.0
    %628 = vmatpush1.msra.mxu0 0.0
    %629 = vmatprep.subr.mxu0 0.0
    %630 = vmatpush1.msra.mxu0 0.0
    %631 = vmatprep.subr.mxu0 0.0
    %632 = vmatpush1.msra.mxu0 0.0
    %633 = vmatprep.subr.mxu0 0.0
    %634 = vmatpush1.msra.mxu0 0.0
    %635 = vmatprep.subr.mxu0 0.0
    %636 = vmatpush1.msra.mxu0 0.0
    %637 = vmatprep.subr.mxu0 0.0
    %638 = vmatpush1.msra.mxu0 0.0
    %639 = vmatprep.subr.mxu0 0.0
    %640 = vmatpush1.msra.mxu0 0.0
    %641 = vmatprep.subr.mxu0 0.0
    %642 = vmatpush1.msra.mxu0 0.0
    %643 = vmatprep.subr.mxu0 0.0
    %644 = vmatpush1.msra.mxu0 0.0
    %645 = vmatprep.subr.mxu0 0.0
    %646 = vmatpush1.msra.mxu0 0.0
    %647 = vmatprep.subr.mxu0 0.0
    %648 = vmatpush1.msra.mxu0 0.0
    %649 = vmatprep.subr.mxu0 0.0
    %650 = vmatpush1.msra.mxu0 0.0
    %651 = vmatprep.subr.mxu0 0.0
    %652 = vmatpush1.msra.mxu0 0.0
    %653 = vmatprep.subr.mxu0 0.0
    %654 = vmatpush1.msra.mxu0 0.0
    %655 = vmatprep.subr.mxu0 0.0
    %656 = vmatpush1.msra.mxu0 0.0
    %657 = vmatprep.subr.mxu0 0.0
    %658 = vmatpush1.msra.mxu0 0.0
    %659 = vmatprep.subr.mxu0 0.0
    %660 = vmatpush1.msra.mxu0 0.0
    %661 = vmatprep.subr.mxu0 0.0
    %662 = vmatpush1.msra.mxu0 0.0
    %663 = vmatprep.subr.mxu0 0.0
    %664 = vmatpush1.msra.mxu0 0.0
    %665 = vmatprep.subr.mxu0 0.0
    %666 = vmatpush1.msra.mxu0 0.0
    %667 = vmatprep.subr.mxu0 0.0
    %668 = vmatpush1.msra.mxu0 0.0
    %669 = vmatprep.subr.mxu0 0.0
    %670 = vmatpush1.msra.mxu0 0.0
    %671 = vmatprep.subr.mxu0 0.0
    %672 = vmatpush1.msra.mxu0 0.0
    %673 = vmatprep.subr.mxu0 0.0
    %674 = vmatpush1.msra.mxu0 0.0
    %675 = vmatprep.subr.mxu0 0.0
    %676 = vmatpush1.msra.mxu0 0.0
    %677 = vmatprep.subr.mxu0 0.0
    %678 = vmatpush1.msra.mxu0 0.0
    %679 = vmatprep.subr.mxu0 0.0
    %680 = vmatpush1.msra.mxu0 0.0
    %681 = vmatprep.subr.mxu0 0.0
    %682 = vmatpush1.msra.mxu0 0.0
    %683 = vmatprep.subr.mxu0 0.0
    %684 = vmatpush1.msra.mxu0 0.0
    %685 = vmatprep.subr.mxu0 0.0
    %686 = vmatpush1.msra.mxu0 0.0
    %687 = vmatprep.mubr.f32.mxu0 0.0
    %688 = vmatmul.mubr.f32.gmra.mrb[0].mxu0 %v621
    %v689 = vpop.f32.mrb[0].mxu0
    %v690 = vadd.f32 %v325, %v689
    %v691 = vpop.f32.mrb[0].mxu0
    %692 = vdwg.mxu0
    %s693 = scalar_lea.vmem [#allocation2], 8
    %v694 = vld [vmem:[%s693] sm:$0xff]
    %v695 = vadd.f32 %v694, %v615
    %v696 = vxor.u32 %v695, 2147483648
    %v697 = vmul.f32 %v696, 1.442695
    %v698 = vpow.pop %v697
    %v699 = vadd.f32 %v698, 1.0
    %v700 = vrcp.pop %v699
    %v701 = vmul.f32 1.0, %v700
    %703 = vrot.lane.b32.xlu0 %v615, 96
    %v704 = vpop.permute.xlu0 %703
    %v706 = vmul.f32 %v701, %v704
    %708 = vrot.lane.b32.xlu0 %v706, 32
    %v709 = vpop.permute.xlu0 %708
    %v711 = vadd.f32 %v694, %v709
    %v712 = vtanh.pop %v711
    %v713 = vsub.f32 1.0, %v701
    %715 = vrot.lane.b32.xlu0 %v712, 112
    %v716 = vpop.permute.xlu0 %715
    %v718 = vmul.f32 %v713, %v716
    %v719 = vmul.f32 %v701, %v506
    %v720 = vadd.f32 %v718, %v719
    %s721 = scalar_lea.vmem [#allocation3], 48
    %v722 = vld [vmem:[%s721] sm:$0xff]
    %v723 = vadd.f32 %v722, %v690
    %v724 = vxor.u32 %v723, 2147483648
    %v725 = vmul.f32 %v724, 1.442695
    %v726 = vpow.pop %v725
    %v727 = vadd.f32 %v726, 1.0
    %v728 = vrcp.pop %v727
    %v729 = vmul.f32 1.0, %v728
    %731 = vrot.lane.b32.xlu0 %v690, 96
    %v732 = vpop.permute.xlu0 %731
    %v734 = vmul.f32 %v729, %v732
    %736 = vrot.lane.b32.xlu0 %v734, 32
    %v737 = vpop.permute.xlu0 %736
    %v739 = vadd.f32 %v722, %v737
    %v740 = vtanh.pop %v739
    %v741 = vsub.f32 1.0, %v729
    %743 = vrot.lane.b32.xlu0 %v740, 112
    %v744 = vpop.permute.xlu0 %743
    %v746 = vmul.f32 %v741, %v744
    %v747 = vmul.f32 %v729, %v537
    %v748 = vadd.f32 %v746, %v747
    %750 = vrot.lane.b32.xlu0 %v720, 112
    %v751 = vpop.permute.xlu0 %750
    %s753 = scalar_lea.vmem [#allocation4], 8
    %754 = vst.msk [vmem:[%s753] sm:$0xff] %vm330, %v751
    %s755 = scalar_lea.vmem [#allocation4], 48
    %756 = vst.msk [vmem:[%s755] sm:$0xff] %vm544, %v748
    %v757 = vsel %vm330, %v751, 0
    %759 = vmatprep.subr.mxu0 0.0
    %760 = vmatpush1.msra.mxu0 %v309
    %761 = vmatprep.subr.mxu0 0.0
    %762 = vmatpush1.msra.mxu0 %v310
    %763 = vmatprep.subr.mxu0 0.0
    %764 = vmatpush1.msra.mxu0 0.0
    %765 = vmatprep.subr.mxu0 0.0
    %766 = vmatpush1.msra.mxu0 0.0
    %767 = vmatprep.subr.mxu0 0.0
    %768 = vmatpush1.msra.mxu0 0.0
    %769 = vmatprep.subr.mxu0 0.0
    %770 = vmatpush1.msra.mxu0 0.0
    %771 = vmatprep.subr.mxu0 0.0
    %772 = vmatpush1.msra.mxu0 0.0
    %773 = vmatprep.subr.mxu0 0.0
    %774 = vmatpush1.msra.mxu0 0.0
    %775 = vmatprep.subr.mxu0 0.0
    %776 = vmatpush1.msra.mxu0 0.0
    %777 = vmatprep.subr.mxu0 0.0
    %778 = vmatpush1.msra.mxu0 0.0
    %779 = vmatprep.subr.mxu0 0.0
    %780 = vmatpush1.msra.mxu0 0.0
    %781 = vmatprep.subr.mxu0 0.0
    %782 = vmatpush1.msra.mxu0 0.0
    %783 = vmatprep.subr.mxu0 0.0
    %784 = vmatpush1.msra.mxu0 0.0
    %785 = vmatprep.subr.mxu0 0.0
    %786 = vmatpush1.msra.mxu0 0.0
    %787 = vmatprep.subr.mxu0 0.0
    %788 = vmatpush1.msra.mxu0 0.0
    %789 = vmatprep.subr.mxu0 0.0
    %790 = vmatpush1.msra.mxu0 0.0
    %791 = vmatprep.subr.mxu0 0.0
    %792 = vmatpush1.msra.mxu0 0.0
    %793 = vmatprep.subr.mxu0 0.0
    %794 = vmatpush1.msra.mxu0 0.0
    %795 = vmatprep.subr.mxu0 0.0
    %796 = vmatpush1.msra.mxu0 0.0
    %797 = vmatprep.subr.mxu0 0.0
    %798 = vmatpush1.msra.mxu0 0.0
    %799 = vmatprep.subr.mxu0 0.0
    %800 = vmatpush1.msra.mxu0 0.0
    %801 = vmatprep.subr.mxu0 0.0
    %802 = vmatpush1.msra.mxu0 0.0
    %803 = vmatprep.subr.mxu0 0.0
    %804 = vmatpush1.msra.mxu0 0.0
    %805 = vmatprep.subr.mxu0 0.0
    %806 = vmatpush1.msra.mxu0 0.0
    %807 = vmatprep.subr.mxu0 0.0
    %808 = vmatpush1.msra.mxu0 0.0
    %809 = vmatprep.subr.mxu0 0.0
    %810 = vmatpush1.msra.mxu0 0.0
    %811 = vmatprep.subr.mxu0 0.0
    %812 = vmatpush1.msra.mxu0 0.0
    %813 = vmatprep.subr.mxu0 0.0
    %814 = vmatpush1.msra.mxu0 0.0
    %815 = vmatprep.subr.mxu0 0.0
    %816 = vmatpush1.msra.mxu0 0.0
    %817 = vmatprep.subr.mxu0 0.0
    %818 = vmatpush1.msra.mxu0 0.0
    %819 = vmatprep.subr.mxu0 0.0
    %820 = vmatpush1.msra.mxu0 0.0
    %821 = vmatprep.subr.mxu0 0.0
    %822 = vmatpush1.msra.mxu0 0.0
    %823 = vmatprep.mubr.f32.mxu0 0.0
    %824 = vmatmul.mubr.f32.gmra.mrb[0].mxu0 %v757
    %v825 = vpop.f32.mrb[0].mxu0
    %v826 = vadd.f32 %v318, %v825
    %v827 = vpop.f32.mrb[0].mxu0
    %828 = vdwg.mxu0
    %830 = vrot.lane.b32.xlu0 %v748, 112
    %v831 = vpop.permute.xlu0 %830
    %v832 = vsel %vm330, %v831, 0
    %834 = vmatprep.subr.mxu0 0.0
    %835 = vmatpush1.msra.mxu0 %v311
    %836 = vmatprep.subr.mxu0 0.0
    %837 = vmatpush1.msra.mxu0 %v312
    %838 = vmatprep.subr.mxu0 0.0
    %839 = vmatpush1.msra.mxu0 0.0
    %840 = vmatprep.subr.mxu0 0.0
    %841 = vmatpush1.msra.mxu0 0.0
    %842 = vmatprep.subr.mxu0 0.0
    %843 = vmatpush1.msra.mxu0 0.0
    %844 = vmatprep.subr.mxu0 0.0
    %845 = vmatpush1.msra.mxu0 0.0
    %846 = vmatprep.subr.mxu0 0.0
    %847 = vmatpush1.msra.mxu0 0.0
    %848 = vmatprep.subr.mxu0 0.0
    %849 = vmatpush1.msra.mxu0 0.0
    %850 = vmatprep.subr.mxu0 0.0
    %851 = vmatpush1.msra.mxu0 0.0
    %852 = vmatprep.subr.mxu0 0.0
    %853 = vmatpush1.msra.mxu0 0.0
    %854 = vmatprep.subr.mxu0 0.0
    %855 = vmatpush1.msra.mxu0 0.0
    %856 = vmatprep.subr.mxu0 0.0
    %857 = vmatpush1.msra.mxu0 0.0
    %858 = vmatprep.subr.mxu0 0.0
    %859 = vmatpush1.msra.mxu0 0.0
    %860 = vmatprep.subr.mxu0 0.0
    %861 = vmatpush1.msra.mxu0 0.0
    %862 = vmatprep.subr.mxu0 0.0
    %863 = vmatpush1.msra.mxu0 0.0
    %864 = vmatprep.subr.mxu0 0.0
    %865 = vmatpush1.msra.mxu0 0.0
    %866 = vmatprep.subr.mxu0 0.0
    %867 = vmatpush1.msra.mxu0 0.0
    %868 = vmatprep.subr.mxu0 0.0
    %869 = vmatpush1.msra.mxu0 0.0
    %870 = vmatprep.subr.mxu0 0.0
    %871 = vmatpush1.msra.mxu0 0.0
    %872 = vmatprep.subr.mxu0 0.0
    %873 = vmatpush1.msra.mxu0 0.0
    %874 = vmatprep.subr.mxu0 0.0
    %875 = vmatpush1.msra.mxu0 0.0
    %876 = vmatprep.subr.mxu0 0.0
    %877 = vmatpush1.msra.mxu0 0.0
    %878 = vmatprep.subr.mxu0 0.0
    %879 = vmatpush1.msra.mxu0 0.0
    %880 = vmatprep.subr.mxu0 0.0
    %881 = vmatpush1.msra.mxu0 0.0
    %882 = vmatprep.subr.mxu0 0.0
    %883 = vmatpush1.msra.mxu0 0.0
    %884 = vmatprep.subr.mxu0 0.0
    %885 = vmatpush1.msra.mxu0 0.0
    %886 = vmatprep.subr.mxu0 0.0
    %887 = vmatpush1.msra.mxu0 0.0
    %888 = vmatprep.subr.mxu0 0.0
    %889 = vmatpush1.msra.mxu0 0.0
    %890 = vmatprep.subr.mxu0 0.0
    %891 = vmatpush1.msra.mxu0 0.0
    %892 = vmatprep.subr.mxu0 0.0
    %893 = vmatpush1.msra.mxu0 0.0
    %894 = vmatprep.subr.mxu0 0.0
    %895 = vmatpush1.msra.mxu0 0.0
    %896 = vmatprep.subr.mxu0 0.0
    %897 = vmatpush1.msra.mxu0 0.0
    %898 = vmatprep.mubr.f32.mxu0 0.0
    %899 = vmatmul.mubr.f32.gmra.mrb[0].mxu0 %v832
    %v900 = vpop.f32.mrb[0].mxu0
    %v901 = vadd.f32 %v325, %v900
    %v902 = vpop.f32.mrb[0].mxu0
    %903 = vdwg.mxu0
    %s904 = scalar_lea.vmem [#allocation2], 16
    %v905 = vld [vmem:[%s904] sm:$0xff]
    %v906 = vadd.f32 %v905, %v826
    %v907 = vxor.u32 %v906, 2147483648
    %v908 = vmul.f32 %v907, 1.442695
    %v909 = vpow.pop %v908
    %v910 = vadd.f32 %v909, 1.0
    %v911 = vrcp.pop %v910
    %v912 = vmul.f32 1.0, %v911
    %914 = vrot.lane.b32.xlu0 %v826, 96
    %v915 = vpop.permute.xlu0 %914
    %v917 = vmul.f32 %v912, %v915
    %919 = vrot.lane.b32.xlu0 %v917, 32
    %v920 = vpop.permute.xlu0 %919
    %v922 = vadd.f32 %v905, %v920
    %v923 = vtanh.pop %v922
    %v924 = vsub.f32 1.0, %v912
    %926 = vrot.lane.b32.xlu0 %v923, 112
    %v927 = vpop.permute.xlu0 %926
    %v929 = vmul.f32 %v924, %v927
    %v930 = vmul.f32 %v912, %v720
    %v931 = vadd.f32 %v929, %v930
    %s932 = scalar_lea.vmem [#allocation3], 40
    %v933 = vld [vmem:[%s932] sm:$0xff]
    %v934 = vadd.f32 %v933, %v901
    %v935 = vxor.u32 %v934, 2147483648
    %v936 = vmul.f32 %v935, 1.442695
    %v937 = vpow.pop %v936
    %v938 = vadd.f32 %v937, 1.0
    %v939 = vrcp.pop %v938
    %v940 = vmul.f32 1.0, %v939
    %942 = vrot.lane.b32.xlu0 %v901, 96
    %v943 = vpop.permute.xlu0 %942
    %v945 = vmul.f32 %v940, %v943
    %947 = vrot.lane.b32.xlu0 %v945, 32
    %v948 = vpop.permute.xlu0 %947
    %v950 = vadd.f32 %v933, %v948
    %v951 = vtanh.pop %v950
    %v952 = vsub.f32 1.0, %v940
    %954 = vrot.lane.b32.xlu0 %v951, 112
    %v955 = vpop.permute.xlu0 %954
    %v957 = vmul.f32 %v952, %v955
    %v958 = vmul.f32 %v940, %v748
    %v959 = vadd.f32 %v957, %v958
    %961 = vrot.lane.b32.xlu0 %v931, 112
    %v962 = vpop.permute.xlu0 %961
    %s964 = scalar_lea.vmem [#allocation4], 16
    %965 = vst.msk [vmem:[%s964] sm:$0xff] %vm330, %v962
    %s966 = scalar_lea.vmem [#allocation4], 40
    %967 = vst.msk [vmem:[%s966] sm:$0xff] %vm544, %v959
    %v968 = vsel %vm330, %v962, 0
    %970 = vmatprep.subr.mxu0 0.0
    %971 = vmatpush1.msra.mxu0 %v309
    %972 = vmatprep.subr.mxu0 0.0
    %973 = vmatpush1.msra.mxu0 %v310
    %974 = vmatprep.subr.mxu0 0.0
    %975 = vmatpush1.msra.mxu0 0.0
    %976 = vmatprep.subr.mxu0 0.0
    %977 = vmatpush1.msra.mxu0 0.0
    %978 = vmatprep.subr.mxu0 0.0
    %979 = vmatpush1.msra.mxu0 0.0
    %980 = vmatprep.subr.mxu0 0.0
    %981 = vmatpush1.msra.mxu0 0.0
    %982 = vmatprep.subr.mxu0 0.0
    %983 = vmatpush1.msra.mxu0 0.0
    %984 = vmatprep.subr.mxu0 0.0
    %985 = vmatpush1.msra.mxu0 0.0
    %986 = vmatprep.subr.mxu0 0.0
    %987 = vmatpush1.msra.mxu0 0.0
    %988 = vmatprep.subr.mxu0 0.0
    %989 = vmatpush1.msra.mxu0 0.0
    %990 = vmatprep.subr.mxu0 0.0
    %991 = vmatpush1.msra.mxu0 0.0
    %992 = vmatprep.subr.mxu0 0.0
    %993 = vmatpush1.msra.mxu0 0.0
    %994 = vmatprep.subr.mxu0 0.0
    %995 = vmatpush1.msra.mxu0 0.0
    %996 = vmatprep.subr.mxu0 0.0
    %997 = vmatpush1.msra.mxu0 0.0
    %998 = vmatprep.subr.mxu0 0.0
    %999 = vmatpush1.msra.mxu0 0.0
    %1000 = vmatprep.subr.mxu0 0.0
    %1001 = vmatpush1.msra.mxu0 0.0
    %1002 = vmatprep.subr.mxu0 0.0
    %1003 = vmatpush1.msra.mxu0 0.0
    %1004 = vmatprep.subr.mxu0 0.0
    %1005 = vmatpush1.msra.mxu0 0.0
    %1006 = vmatprep.subr.mxu0 0.0
    %1007 = vmatpush1.msra.mxu0 0.0
    %1008 = vmatprep.subr.mxu0 0.0
    %1009 = vmatpush1.msra.mxu0 0.0
    %1010 = vmatprep.subr.mxu0 0.0
    %1011 = vmatpush1.msra.mxu0 0.0
    %1012 = vmatprep.subr.mxu0 0.0
    %1013 = vmatpush1.msra.mxu0 0.0
    %1014 = vmatprep.subr.mxu0 0.0
    %1015 = vmatpush1.msra.mxu0 0.0
    %1016 = vmatprep.subr.mxu0 0.0
    %1017 = vmatpush1.msra.mxu0 0.0
    %1018 = vmatprep.subr.mxu0 0.0
    %1019 = vmatpush1.msra.mxu0 0.0
    %1020 = vmatprep.subr.mxu0 0.0
    %1021 = vmatpush1.msra.mxu0 0.0
    %1022 = vmatprep.subr.mxu0 0.0
    %1023 = vmatpush1.msra.mxu0 0.0
    %1024 = vmatprep.subr.mxu0 0.0
    %1025 = vmatpush1.msra.mxu0 0.0
    %1026 = vmatprep.subr.mxu0 0.0
    %1027 = vmatpush1.msra.mxu0 0.0
    %1028 = vmatprep.subr.mxu0 0.0
    %1029 = vmatpush1.msra.mxu0 0.0
    %1030 = vmatprep.subr.mxu0 0.0
    %1031 = vmatpush1.msra.mxu0 0.0
    %1032 = vmatprep.subr.mxu0 0.0
    %1033 = vmatpush1.msra.mxu0 0.0
    %1034 = vmatprep.mubr.f32.mxu0 0.0
    %1035 = vmatmul.mubr.f32.gmra.mrb[0].mxu0 %v968
    %v1036 = vpop.f32.mrb[0].mxu0
    %v1037 = vadd.f32 %v318, %v1036
    %v1038 = vpop.f32.mrb[0].mxu0
    %1039 = vdwg.mxu0
    %1041 = vrot.lane.b32.xlu0 %v959, 112
    %v1042 = vpop.permute.xlu0 %1041
    %v1043 = vsel %vm330, %v1042, 0
    %1045 = vmatprep.subr.mxu0 0.0
    %1046 = vmatpush1.msra.mxu0 %v311
    %1047 = vmatprep.subr.mxu0 0.0
    %1048 = vmatpush1.msra.mxu0 %v312
    %1049 = vmatprep.subr.mxu0 0.0
    %1050 = vmatpush1.msra.mxu0 0.0
    %1051 = vmatprep.subr.mxu0 0.0
    %1052 = vmatpush1.msra.mxu0 0.0
    %1053 = vmatprep.subr.mxu0 0.0
    %1054 = vmatpush1.msra.mxu0 0.0
    %1055 = vmatprep.subr.mxu0 0.0
    %1056 = vmatpush1.msra.mxu0 0.0
    %1057 = vmatprep.subr.mxu0 0.0
    %1058 = vmatpush1.msra.mxu0 0.0
    %1059 = vmatprep.subr.mxu0 0.0
    %1060 = vmatpush1.msra.mxu0 0.0
    %1061 = vmatprep.subr.mxu0 0.0
    %1062 = vmatpush1.msra.mxu0 0.0
    %1063 = vmatprep.subr.mxu0 0.0
    %1064 = vmatpush1.msra.mxu0 0.0
    %1065 = vmatprep.subr.mxu0 0.0
    %1066 = vmatpush1.msra.mxu0 0.0
    %1067 = vmatprep.subr.mxu0 0.0
    %1068 = vmatpush1.msra.mxu0 0.0
    %1069 = vmatprep.subr.mxu0 0.0
    %1070 = vmatpush1.msra.mxu0 0.0
    %1071 = vmatprep.subr.mxu0 0.0
    %1072 = vmatpush1.msra.mxu0 0.0
    %1073 = vmatprep.subr.mxu0 0.0
    %1074 = vmatpush1.msra.mxu0 0.0
    %1075 = vmatprep.subr.mxu0 0.0
    %1076 = vmatpush1.msra.mxu0 0.0
    %1077 = vmatprep.subr.mxu0 0.0
    %1078 = vmatpush1.msra.mxu0 0.0
    %1079 = vmatprep.subr.mxu0 0.0
    %1080 = vmatpush1.msra.mxu0 0.0
    %1081 = vmatprep.subr.mxu0 0.0
    %1082 = vmatpush1.msra.mxu0 0.0
    %1083 = vmatprep.subr.mxu0 0.0
    %1084 = vmatpush1.msra.mxu0 0.0
    %1085 = vmatprep.subr.mxu0 0.0
    %1086 = vmatpush1.msra.mxu0 0.0
    %1087 = vmatprep.subr.mxu0 0.0
    %1088 = vmatpush1.msra.mxu0 0.0
    %1089 = vmatprep.subr.mxu0 0.0
    %1090 = vmatpush1.msra.mxu0 0.0
    %1091 = vmatprep.subr.mxu0 0.0
    %1092 = vmatpush1.msra.mxu0 0.0
    %1093 = vmatprep.subr.mxu0 0.0
    %1094 = vmatpush1.msra.mxu0 0.0
    %1095 = vmatprep.subr.mxu0 0.0
    %1096 = vmatpush1.msra.mxu0 0.0
    %1097 = vmatprep.subr.mxu0 0.0
    %1098 = vmatpush1.msra.mxu0 0.0
    %1099 = vmatprep.subr.mxu0 0.0
    %1100 = vmatpush1.msra.mxu0 0.0
    %1101 = vmatprep.subr.mxu0 0.0
    %1102 = vmatpush1.msra.mxu0 0.0
    %1103 = vmatprep.subr.mxu0 0.0
    %1104 = vmatpush1.msra.mxu0 0.0
    %1105 = vmatprep.subr.mxu0 0.0
    %1106 = vmatpush1.msra.mxu0 0.0
    %1107 = vmatprep.subr.mxu0 0.0
    %1108 = vmatpush1.msra.mxu0 0.0
    %1109 = vmatprep.mubr.f32.mxu0 0.0
    %1110 = vmatmul.mubr.f32.gmra.mrb[0].mxu0 %v1043
    %v1111 = vpop.f32.mrb[0].mxu0
    %v1112 = vadd.f32 %v325, %v1111
    %v1113 = vpop.f32.mrb[0].mxu0
    %1114 = vdwg.mxu0
    %s1115 = scalar_lea.vmem [#allocation2], 24
    %v1116 = vld [vmem:[%s1115] sm:$0xff]
    %v1117 = vadd.f32 %v1116, %v1037
    %v1118 = vxor.u32 %v1117, 2147483648
    %v1119 = vmul.f32 %v1118, 1.442695
    %v1120 = vpow.pop %v1119
    %v1121 = vadd.f32 %v1120, 1.0
    %v1122 = vrcp.pop %v1121
    %v1123 = vmul.f32 1.0, %v1122
    %1125 = vrot.lane.b32.xlu0 %v1037, 96
    %v1126 = vpop.permute.xlu0 %1125
    %v1128 = vmul.f32 %v1123, %v1126
    %1130 = vrot.lane.b32.xlu0 %v1128, 32
    %v1131 = vpop.permute.xlu0 %1130
    %v1133 = vadd.f32 %v1116, %v1131
    %v1134 = vtanh.pop %v1133
    %v1135 = vsub.f32 1.0, %v1123
    %1137 = vrot.lane.b32.xlu0 %v1134, 112
    %v1138 = vpop.permute.xlu0 %1137
    %v1140 = vmul.f32 %v1135, %v1138
    %v1141 = vmul.f32 %v1123, %v931
    %v1142 = vadd.f32 %v1140, %v1141
    %s1143 = scalar_lea.vmem [#allocation3], 32
    %v1144 = vld [vmem:[%s1143] sm:$0xff]
    %v1145 = vadd.f32 %v1144, %v1112
    %v1146 = vxor.u32 %v1145, 2147483648
    %v1147 = vmul.f32 %v1146, 1.442695
    %v1148 = vpow.pop %v1147
    %v1149 = vadd.f32 %v1148, 1.0
    %v1150 = vrcp.pop %v1149
    %v1151 = vmul.f32 1.0, %v1150
    %1153 = vrot.lane.b32.xlu0 %v1112, 96
    %v1154 = vpop.permute.xlu0 %1153
    %v1156 = vmul.f32 %v1151, %v1154
    %1158 = vrot.lane.b32.xlu0 %v1156, 32
    %v1159 = vpop.permute.xlu0 %1158
    %v1161 = vadd.f32 %v1144, %v1159
    %v1162 = vtanh.pop %v1161
    %v1163 = vsub.f32 1.0, %v1151
    %1165 = vrot.lane.b32.xlu0 %v1162, 112
    %v1166 = vpop.permute.xlu0 %1165
    %v1168 = vmul.f32 %v1163, %v1166
    %v1169 = vmul.f32 %v1151, %v959
    %v1170 = vadd.f32 %v1168, %v1169
    %1172 = vrot.lane.b32.xlu0 %v1142, 112
    %v1173 = vpop.permute.xlu0 %1172
    %s1175 = scalar_lea.vmem [#allocation4], 24
    %1176 = vst.msk [vmem:[%s1175] sm:$0xff] %vm330, %v1173
    %s1177 = scalar_lea.vmem [#allocation4], 32
    %1178 = vst.msk [vmem:[%s1177] sm:$0xff] %vm544, %v1170
    %v1179 = vsel %vm330, %v1173, 0
    %1181 = vmatprep.subr.mxu0 0.0
    %1182 = vmatpush1.msra.mxu0 %v309
    %1183 = vmatprep.subr.mxu0 0.0
    %1184 = vmatpush1.msra.mxu0 %v310
    %1185 = vmatprep.subr.mxu0 0.0
    %1186 = vmatpush1.msra.mxu0 0.0
    %1187 = vmatprep.subr.mxu0 0.0
    %1188 = vmatpush1.msra.mxu0 0.0
    %1189 = vmatprep.subr.mxu0 0.0
    %1190 = vmatpush1.msra.mxu0 0.0
    %1191 = vmatprep.subr.mxu0 0.0
    %1192 = vmatpush1.msra.mxu0 0.0
    %1193 = vmatprep.subr.mxu0 0.0
    %1194 = vmatpush1.msra.mxu0 0.0
    %1195 = vmatprep.subr.mxu0 0.0
    %1196 = vmatpush1.msra.mxu0 0.0
    %1197 = vmatprep.subr.mxu0 0.0
    %1198 = vmatpush1.msra.mxu0 0.0
    %1199 = vmatprep.subr.mxu0 0.0
    %1200 = vmatpush1.msra.mxu0 0.0
    %1201 = vmatprep.subr.mxu0 0.0
    %1202 = vmatpush1.msra.mxu0 0.0
    %1203 = vmatprep.subr.mxu0 0.0
    %1204 = vmatpush1.msra.mxu0 0.0
    %1205 = vmatprep.subr.mxu0 0.0
    %1206 = vmatpush1.msra.mxu0 0.0
    %1207 = vmatprep.subr.mxu0 0.0
    %1208 = vmatpush1.msra.mxu0 0.0
    %1209 = vmatprep.subr.mxu0 0.0
    %1210 = vmatpush1.msra.mxu0 0.0
    %1211 = vmatprep.subr.mxu0 0.0
    %1212 = vmatpush1.msra.mxu0 0.0
    %1213 = vmatprep.subr.mxu0 0.0
    %1214 = vmatpush1.msra.mxu0 0.0
    %1215 = vmatprep.subr.mxu0 0.0
    %1216 = vmatpush1.msra.mxu0 0.0
    %1217 = vmatprep.subr.mxu0 0.0
    %1218 = vmatpush1.msra.mxu0 0.0
    %1219 = vmatprep.subr.mxu0 0.0
    %1220 = vmatpush1.msra.mxu0 0.0
    %1221 = vmatprep.subr.mxu0 0.0
    %1222 = vmatpush1.msra.mxu0 0.0
    %1223 = vmatprep.subr.mxu0 0.0
    %1224 = vmatpush1.msra.mxu0 0.0
    %1225 = vmatprep.subr.mxu0 0.0
    %1226 = vmatpush1.msra.mxu0 0.0
    %1227 = vmatprep.subr.mxu0 0.0
    %1228 = vmatpush1.msra.mxu0 0.0
    %1229 = vmatprep.subr.mxu0 0.0
    %1230 = vmatpush1.msra.mxu0 0.0
    %1231 = vmatprep.subr.mxu0 0.0
    %1232 = vmatpush1.msra.mxu0 0.0
    %1233 = vmatprep.subr.mxu0 0.0
    %1234 = vmatpush1.msra.mxu0 0.0
    %1235 = vmatprep.subr.mxu0 0.0
    %1236 = vmatpush1.msra.mxu0 0.0
    %1237 = vmatprep.subr.mxu0 0.0
    %1238 = vmatpush1.msra.mxu0 0.0
    %1239 = vmatprep.subr.mxu0 0.0
    %1240 = vmatpush1.msra.mxu0 0.0
    %1241 = vmatprep.subr.mxu0 0.0
    %1242 = vmatpush1.msra.mxu0 0.0
    %1243 = vmatprep.subr.mxu0 0.0
    %1244 = vmatpush1.msra.mxu0 0.0
    %1245 = vmatprep.mubr.f32.mxu0 0.0
    %1246 = vmatmul.mubr.f32.gmra.mrb[0].mxu0 %v1179
    %v1247 = vpop.f32.mrb[0].mxu0
    %v1248 = vadd.f32 %v318, %v1247
    %v1249 = vpop.f32.mrb[0].mxu0
    %1250 = vdwg.mxu0
    %1252 = vrot.lane.b32.xlu0 %v1170, 112
    %v1253 = vpop.permute.xlu0 %1252
    %v1254 = vsel %vm330, %v1253, 0
    %1256 = vmatprep.subr.mxu0 0.0
    %1257 = vmatpush1.msra.mxu0 %v311
    %1258 = vmatprep.subr.mxu0 0.0
    %1259 = vmatpush1.msra.mxu0 %v312
    %1260 = vmatprep.subr.mxu0 0.0
    %1261 = vmatpush1.msra.mxu0 0.0
    %1262 = vmatprep.subr.mxu0 0.0
    %1263 = vmatpush1.msra.mxu0 0.0
    %1264 = vmatprep.subr.mxu0 0.0
    %1265 = vmatpush1.msra.mxu0 0.0
    %1266 = vmatprep.subr.mxu0 0.0
    %1267 = vmatpush1.msra.mxu0 0.0
    %1268 = vmatprep.subr.mxu0 0.0
    %1269 = vmatpush1.msra.mxu0 0.0
    %1270 = vmatprep.subr.mxu0 0.0
    %1271 = vmatpush1.msra.mxu0 0.0
    %1272 = vmatprep.subr.mxu0 0.0
    %1273 = vmatpush1.msra.mxu0 0.0
    %1274 = vmatprep.subr.mxu0 0.0
    %1275 = vmatpush1.msra.mxu0 0.0
    %1276 = vmatprep.subr.mxu0 0.0
    %1277 = vmatpush1.msra.mxu0 0.0
    %1278 = vmatprep.subr.mxu0 0.0
    %1279 = vmatpush1.msra.mxu0 0.0
    %1280 = vmatprep.subr.mxu0 0.0
    %1281 = vmatpush1.msra.mxu0 0.0
    %1282 = vmatprep.subr.mxu0 0.0
    %1283 = vmatpush1.msra.mxu0 0.0
    %1284 = vmatprep.subr.mxu0 0.0
    %1285 = vmatpush1.msra.mxu0 0.0
    %1286 = vmatprep.subr.mxu0 0.0
    %1287 = vmatpush1.msra.mxu0 0.0
    %1288 = vmatprep.subr.mxu0 0.0
    %1289 = vmatpush1.msra.mxu0 0.0
    %1290 = vmatprep.subr.mxu0 0.0
    %1291 = vmatpush1.msra.mxu0 0.0
    %1292 = vmatprep.subr.mxu0 0.0
    %1293 = vmatpush1.msra.mxu0 0.0
    %1294 = vmatprep.subr.mxu0 0.0
    %1295 = vmatpush1.msra.mxu0 0.0
    %1296 = vmatprep.subr.mxu0 0.0
    %1297 = vmatpush1.msra.mxu0 0.0
    %1298 = vmatprep.subr.mxu0 0.0
    %1299 = vmatpush1.msra.mxu0 0.0
    %1300 = vmatprep.subr.mxu0 0.0
    %1301 = vmatpush1.msra.mxu0 0.0
    %1302 = vmatprep.subr.mxu0 0.0
    %1303 = vmatpush1.msra.mxu0 0.0
    %1304 = vmatprep.subr.mxu0 0.0
    %1305 = vmatpush1.msra.mxu0 0.0
    %1306 = vmatprep.subr.mxu0 0.0
    %1307 = vmatpush1.msra.mxu0 0.0
    %1308 = vmatprep.subr.mxu0 0.0
    %1309 = vmatpush1.msra.mxu0 0.0
    %1310 = vmatprep.subr.mxu0 0.0
    %1311 = vmatpush1.msra.mxu0 0.0
    %1312 = vmatprep.subr.mxu0 0.0
    %1313 = vmatpush1.msra.mxu0 0.0
    %1314 = vmatprep.subr.mxu0 0.0
    %1315 = vmatpush1.msra.mxu0 0.0
    %1316 = vmatprep.subr.mxu0 0.0
    %1317 = vmatpush1.msra.mxu0 0.0
    %1318 = vmatprep.subr.mxu0 0.0
    %1319 = vmatpush1.msra.mxu0 0.0
    %1320 = vmatprep.mubr.f32.mxu0 0.0
    %1321 = vmatmul.mubr.f32.gmra.mrb[0].mxu0 %v1254
    %v1322 = vpop.f32.mrb[0].mxu0
    %v1323 = vadd.f32 %v325, %v1322
    %v1324 = vpop.f32.mrb[0].mxu0
    %1325 = vdwg.mxu0
    %s1326 = scalar_lea.vmem [#allocation2], 32
    %v1327 = vld [vmem:[%s1326] sm:$0xff]
    %v1328 = vadd.f32 %v1327, %v1248
    %v1329 = vxor.u32 %v1328, 2147483648
    %v1330 = vmul.f32 %v1329, 1.442695
    %v1331 = vpow.pop %v1330
    %v1332 = vadd.f32 %v1331, 1.0
    %v1333 = vrcp.pop %v1332
    %v1334 = vmul.f32 1.0, %v1333
    %1336 = vrot.lane.b32.xlu0 %v1248, 96
    %v1337 = vpop.permute.xlu0 %1336
    %v1339 = vmul.f32 %v1334, %v1337
    %1341 = vrot.lane.b32.xlu0 %v1339, 32
    %v1342 = vpop.permute.xlu0 %1341
    %v1344 = vadd.f32 %v1327, %v1342
    %v1345 = vtanh.pop %v1344
    %v1346 = vsub.f32 1.0, %v1334
    %1348 = vrot.lane.b32.xlu0 %v1345, 112
    %v1349 = vpop.permute.xlu0 %1348
    %v1351 = vmul.f32 %v1346, %v1349
    %v1352 = vmul.f32 %v1334, %v1142
    %v1353 = vadd.f32 %v1351, %v1352
    %s1354 = scalar_lea.vmem [#allocation3], 24
    %v1355 = vld [vmem:[%s1354] sm:$0xff]
    %v1356 = vadd.f32 %v1355, %v1323
    %v1357 = vxor.u32 %v1356, 2147483648
    %v1358 = vmul.f32 %v1357, 1.442695
    %v1359 = vpow.pop %v1358
    %v1360 = vadd.f32 %v1359, 1.0
    %v1361 = vrcp.pop %v1360
    %v1362 = vmul.f32 1.0, %v1361
    %1364 = vrot.lane.b32.xlu0 %v1323, 96
    %v1365 = vpop.permute.xlu0 %1364
    %v1367 = vmul.f32 %v1362, %v1365
    %1369 = vrot.lane.b32.xlu0 %v1367, 32
    %v1370 = vpop.permute.xlu0 %1369
    %v1372 = vadd.f32 %v1355, %v1370
    %v1373 = vtanh.pop %v1372
    %v1374 = vsub.f32 1.0, %v1362
    %1376 = vrot.lane.b32.xlu0 %v1373, 112
    %v1377 = vpop.permute.xlu0 %1376
    %v1379 = vmul.f32 %v1374, %v1377
    %v1380 = vmul.f32 %v1362, %v1170
    %v1381 = vadd.f32 %v1379, %v1380
    %1383 = vrot.lane.b32.xlu0 %v1353, 112
    %v1384 = vpop.permute.xlu0 %1383
    %1386 = vst.msk [vmem:[%s1177] sm:$0xff] %vm330, %v1384
    %1387 = vst.msk [vmem:[%s1175] sm:$0xff] %vm544, %v1381
    %v1388 = vsel %vm330, %v1384, 0
    %1390 = vmatprep.subr.mxu0 0.0
    %1391 = vmatpush1.msra.mxu0 %v309
    %1392 = vmatprep.subr.mxu0 0.0
    %1393 = vmatpush1.msra.mxu0 %v310
    %1394 = vmatprep.subr.mxu0 0.0
    %1395 = vmatpush1.msra.mxu0 0.0
    %1396 = vmatprep.subr.mxu0 0.0
    %1397 = vmatpush1.msra.mxu0 0.0
    %1398 = vmatprep.subr.mxu0 0.0
    %1399 = vmatpush1.msra.mxu0 0.0
    %1400 = vmatprep.subr.mxu0 0.0
    %1401 = vmatpush1.msra.mxu0 0.0
    %1402 = vmatprep.subr.mxu0 0.0
    %1403 = vmatpush1.msra.mxu0 0.0
    %1404 = vmatprep.subr.mxu0 0.0
    %1405 = vmatpush1.msra.mxu0 0.0
    %1406 = vmatprep.subr.mxu0 0.0
    %1407 = vmatpush1.msra.mxu0 0.0
    %1408 = vmatprep.subr.mxu0 0.0
    %1409 = vmatpush1.msra.mxu0 0.0
    %1410 = vmatprep.subr.mxu0 0.0
    %1411 = vmatpush1.msra.mxu0 0.0
    %1412 = vmatprep.subr.mxu0 0.0
    %1413 = vmatpush1.msra.mxu0 0.0
    %1414 = vmatprep.subr.mxu0 0.0
    %1415 = vmatpush1.msra.mxu0 0.0
    %1416 = vmatprep.subr.mxu0 0.0
    %1417 = vmatpush1.msra.mxu0 0.0
    %1418 = vmatprep.subr.mxu0 0.0
    %1419 = vmatpush1.msra.mxu0 0.0
    %1420 = vmatprep.subr.mxu0 0.0
    %1421 = vmatpush1.msra.mxu0 0.0
    %1422 = vmatprep.subr.mxu0 0.0
    %1423 = vmatpush1.msra.mxu0 0.0
    %1424 = vmatprep.subr.mxu0 0.0
    %1425 = vmatpush1.msra.mxu0 0.0
    %1426 = vmatprep.subr.mxu0 0.0
    %1427 = vmatpush1.msra.mxu0 0.0
    %1428 = vmatprep.subr.mxu0 0.0
    %1429 = vmatpush1.msra.mxu0 0.0
    %1430 = vmatprep.subr.mxu0 0.0
    %1431 = vmatpush1.msra.mxu0 0.0
    %1432 = vmatprep.subr.mxu0 0.0
    %1433 = vmatpush1.msra.mxu0 0.0
    %1434 = vmatprep.subr.mxu0 0.0
    %1435 = vmatpush1.msra.mxu0 0.0
    %1436 = vmatprep.subr.mxu0 0.0
    %1437 = vmatpush1.msra.mxu0 0.0
    %1438 = vmatprep.subr.mxu0 0.0
    %1439 = vmatpush1.msra.mxu0 0.0
    %1440 = vmatprep.subr.mxu0 0.0
    %1441 = vmatpush1.msra.mxu0 0.0
    %1442 = vmatprep.subr.mxu0 0.0
    %1443 = vmatpush1.msra.mxu0 0.0
    %1444 = vmatprep.subr.mxu0 0.0
    %1445 = vmatpush1.msra.mxu0 0.0
    %1446 = vmatprep.subr.mxu0 0.0
    %1447 = vmatpush1.msra.mxu0 0.0
    %1448 = vmatprep.subr.mxu0 0.0
    %1449 = vmatpush1.msra.mxu0 0.0
    %1450 = vmatprep.subr.mxu0 0.0
    %1451 = vmatpush1.msra.mxu0 0.0
    %1452 = vmatprep.subr.mxu0 0.0
    %1453 = vmatpush1.msra.mxu0 0.0
    %1454 = vmatprep.mubr.f32.mxu0 0.0
    %1455 = vmatmul.mubr.f32.gmra.mrb[0].mxu0 %v1388
    %v1456 = vpop.f32.mrb[0].mxu0
    %v1457 = vadd.f32 %v318, %v1456
    %v1458 = vpop.f32.mrb[0].mxu0
    %1459 = vdwg.mxu0
    %1461 = vrot.lane.b32.xlu0 %v1381, 112
    %v1462 = vpop.permute.xlu0 %1461
    %v1463 = vsel %vm330, %v1462, 0
    %1465 = vmatprep.subr.mxu0 0.0
    %1466 = vmatpush1.msra.mxu0 %v311
    %1467 = vmatprep.subr.mxu0 0.0
    %1468 = vmatpush1.msra.mxu0 %v312
    %1469 = vmatprep.subr.mxu0 0.0
    %1470 = vmatpush1.msra.mxu0 0.0
    %1471 = vmatprep.subr.mxu0 0.0
    %1472 = vmatpush1.msra.mxu0 0.0
    %1473 = vmatprep.subr.mxu0 0.0
    %1474 = vmatpush1.msra.mxu0 0.0
    %1475 = vmatprep.subr.mxu0 0.0
    %1476 = vmatpush1.msra.mxu0 0.0
    %1477 = vmatprep.subr.mxu0 0.0
    %1478 = vmatpush1.msra.mxu0 0.0
    %1479 = vmatprep.subr.mxu0 0.0
    %1480 = vmatpush1.msra.mxu0 0.0
    %1481 = vmatprep.subr.mxu0 0.0
    %1482 = vmatpush1.msra.mxu0 0.0
    %1483 = vmatprep.subr.mxu0 0.0
    %1484 = vmatpush1.msra.mxu0 0.0
    %1485 = vmatprep.subr.mxu0 0.0
    %1486 = vmatpush1.msra.mxu0 0.0
    %1487 = vmatprep.subr.mxu0 0.0
    %1488 = vmatpush1.msra.mxu0 0.0
    %1489 = vmatprep.subr.mxu0 0.0
    %1490 = vmatpush1.msra.mxu0 0.0
    %1491 = vmatprep.subr.mxu0 0.0
    %1492 = vmatpush1.msra.mxu0 0.0
    %1493 = vmatprep.subr.mxu0 0.0
    %1494 = vmatpush1.msra.mxu0 0.0
    %1495 = vmatprep.subr.mxu0 0.0
    %1496 = vmatpush1.msra.mxu0 0.0
    %1497 = vmatprep.subr.mxu0 0.0
    %1498 = vmatpush1.msra.mxu0 0.0
    %1499 = vmatprep.subr.mxu0 0.0
    %1500 = vmatpush1.msra.mxu0 0.0
    %1501 = vmatprep.subr.mxu0 0.0
    %1502 = vmatpush1.msra.mxu0 0.0
    %1503 = vmatprep.subr.mxu0 0.0
    %1504 = vmatpush1.msra.mxu0 0.0
    %1505 = vmatprep.subr.mxu0 0.0
    %1506 = vmatpush1.msra.mxu0 0.0
    %1507 = vmatprep.subr.mxu0 0.0
    %1508 = vmatpush1.msra.mxu0 0.0
    %1509 = vmatprep.subr.mxu0 0.0
    %1510 = vmatpush1.msra.mxu0 0.0
    %1511 = vmatprep.subr.mxu0 0.0
    %1512 = vmatpush1.msra.mxu0 0.0
    %1513 = vmatprep.subr.mxu0 0.0
    %1514 = vmatpush1.msra.mxu0 0.0
    %1515 = vmatprep.subr.mxu0 0.0
    %1516 = vmatpush1.msra.mxu0 0.0
    %1517 = vmatprep.subr.mxu0 0.0
    %1518 = vmatpush1.msra.mxu0 0.0
    %1519 = vmatprep.subr.mxu0 0.0
    %1520 = vmatpush1.msra.mxu0 0.0
    %1521 = vmatprep.subr.mxu0 0.0
    %1522 = vmatpush1.msra.mxu0 0.0
    %1523 = vmatprep.subr.mxu0 0.0
    %1524 = vmatpush1.msra.mxu0 0.0
    %1525 = vmatprep.subr.mxu0 0.0
    %1526 = vmatpush1.msra.mxu0 0.0
    %1527 = vmatprep.subr.mxu0 0.0
    %1528 = vmatpush1.msra.mxu0 0.0
    %1529 = vmatprep.mubr.f32.mxu0 0.0
    %1530 = vmatmul.mubr.f32.gmra.mrb[0].mxu0 %v1463
    %v1531 = vpop.f32.mrb[0].mxu0
    %v1532 = vadd.f32 %v325, %v1531
    %v1533 = vpop.f32.mrb[0].mxu0
    %1534 = vdwg.mxu0
    %s1535 = scalar_lea.vmem [#allocation2], 40
    %v1536 = vld [vmem:[%s1535] sm:$0xff]
    %v1537 = vadd.f32 %v1536, %v1457
    %v1538 = vxor.u32 %v1537, 2147483648
    %v1539 = vmul.f32 %v1538, 1.442695
    %v1540 = vpow.pop %v1539
    %v1541 = vadd.f32 %v1540, 1.0
    %v1542 = vrcp.pop %v1541
    %v1543 = vmul.f32 1.0, %v1542
    %1545 = vrot.lane.b32.xlu0 %v1457, 96
    %v1546 = vpop.permute.xlu0 %1545
    %v1548 = vmul.f32 %v1543, %v1546
    %1550 = vrot.lane.b32.xlu0 %v1548, 32
    %v1551 = vpop.permute.xlu0 %1550
    %v1553 = vadd.f32 %v1536, %v1551
    %v1554 = vtanh.pop %v1553
    %v1555 = vsub.f32 1.0, %v1543
    %1557 = vrot.lane.b32.xlu0 %v1554, 112
    %v1558 = vpop.permute.xlu0 %1557
    %v1560 = vmul.f32 %v1555, %v1558
    %v1561 = vmul.f32 %v1543, %v1353
    %v1562 = vadd.f32 %v1560, %v1561
    %s1563 = scalar_lea.vmem [#allocation3], 16
    %v1564 = vld [vmem:[%s1563] sm:$0xff]
    %v1565 = vadd.f32 %v1564, %v1532
    %v1566 = vxor.u32 %v1565, 2147483648
    %v1567 = vmul.f32 %v1566, 1.442695
    %v1568 = vpow.pop %v1567
    %v1569 = vadd.f32 %v1568, 1.0
    %v1570 = vrcp.pop %v1569
    %v1571 = vmul.f32 1.0, %v1570
    %1573 = vrot.lane.b32.xlu0 %v1532, 96
    %v1574 = vpop.permute.xlu0 %1573
    %v1576 = vmul.f32 %v1571, %v1574
    %1578 = vrot.lane.b32.xlu0 %v1576, 32
    %v1579 = vpop.permute.xlu0 %1578
    %v1581 = vadd.f32 %v1564, %v1579
    %v1582 = vtanh.pop %v1581
    %v1583 = vsub.f32 1.0, %v1571
    %1585 = vrot.lane.b32.xlu0 %v1582, 112
    %v1586 = vpop.permute.xlu0 %1585
    %v1588 = vmul.f32 %v1583, %v1586
    %v1589 = vmul.f32 %v1571, %v1381
    %v1590 = vadd.f32 %v1588, %v1589
    %1592 = vrot.lane.b32.xlu0 %v1562, 112
    %v1593 = vpop.permute.xlu0 %1592
    %1595 = vst.msk [vmem:[%s966] sm:$0xff] %vm330, %v1593
    %1596 = vst.msk [vmem:[%s964] sm:$0xff] %vm544, %v1590
    %v1597 = vsel %vm330, %v1593, 0
    %1599 = vmatprep.subr.mxu0 0.0
    %1600 = vmatpush1.msra.mxu0 %v309
    %1601 = vmatprep.subr.mxu0 0.0
    %1602 = vmatpush1.msra.mxu0 %v310
    %1603 = vmatprep.subr.mxu0 0.0
    %1604 = vmatpush1.msra.mxu0 0.0
    %1605 = vmatprep.subr.mxu0 0.0
    %1606 = vmatpush1.msra.mxu0 0.0
    %1607 = vmatprep.subr.mxu0 0.0
    %1608 = vmatpush1.msra.mxu0 0.0
    %1609 = vmatprep.subr.mxu0 0.0
    %1610 = vmatpush1.msra.mxu0 0.0
    %1611 = vmatprep.subr.mxu0 0.0
    %1612 = vmatpush1.msra.mxu0 0.0
    %1613 = vmatprep.subr.mxu0 0.0
    %1614 = vmatpush1.msra.mxu0 0.0
    %1615 = vmatprep.subr.mxu0 0.0
    %1616 = vmatpush1.msra.mxu0 0.0
    %1617 = vmatprep.subr.mxu0 0.0
    %1618 = vmatpush1.msra.mxu0 0.0
    %1619 = vmatprep.subr.mxu0 0.0
    %1620 = vmatpush1.msra.mxu0 0.0
    %1621 = vmatprep.subr.mxu0 0.0
    %1622 = vmatpush1.msra.mxu0 0.0
    %1623 = vmatprep.subr.mxu0 0.0
    %1624 = vmatpush1.msra.mxu0 0.0
    %1625 = vmatprep.subr.mxu0 0.0
    %1626 = vmatpush1.msra.mxu0 0.0
    %1627 = vmatprep.subr.mxu0 0.0
    %1628 = vmatpush1.msra.mxu0 0.0
    %1629 = vmatprep.subr.mxu0 0.0
    %1630 = vmatpush1.msra.mxu0 0.0
    %1631 = vmatprep.subr.mxu0 0.0
    %1632 = vmatpush1.msra.mxu0 0.0
    %1633 = vmatprep.subr.mxu0 0.0
    %1634 = vmatpush1.msra.mxu0 0.0
    %1635 = vmatprep.subr.mxu0 0.0
    %1636 = vmatpush1.msra.mxu0 0.0
    %1637 = vmatprep.subr.mxu0 0.0
    %1638 = vmatpush1.msra.mxu0 0.0
    %1639 = vmatprep.subr.mxu0 0.0
    %1640 = vmatpush1.msra.mxu0 0.0
    %1641 = vmatprep.subr.mxu0 0.0
    %1642 = vmatpush1.msra.mxu0 0.0
    %1643 = vmatprep.subr.mxu0 0.0
    %1644 = vmatpush1.msra.mxu0 0.0
    %1645 = vmatprep.subr.mxu0 0.0
    %1646 = vmatpush1.msra.mxu0 0.0
    %1647 = vmatprep.subr.mxu0 0.0
    %1648 = vmatpush1.msra.mxu0 0.0
    %1649 = vmatprep.subr.mxu0 0.0
    %1650 = vmatpush1.msra.mxu0 0.0
    %1651 = vmatprep.subr.mxu0 0.0
    %1652 = vmatpush1.msra.mxu0 0.0
    %1653 = vmatprep.subr.mxu0 0.0
    %1654 = vmatpush1.msra.mxu0 0.0
    %1655 = vmatprep.subr.mxu0 0.0
    %1656 = vmatpush1.msra.mxu0 0.0
    %1657 = vmatprep.subr.mxu0 0.0
    %1658 = vmatpush1.msra.mxu0 0.0
    %1659 = vmatprep.subr.mxu0 0.0
    %1660 = vmatpush1.msra.mxu0 0.0
    %1661 = vmatprep.subr.mxu0 0.0
    %1662 = vmatpush1.msra.mxu0 0.0
    %1663 = vmatprep.mubr.f32.mxu0 0.0
    %1664 = vmatmul.mubr.f32.gmra.mrb[0].mxu0 %v1597
    %v1665 = vpop.f32.mrb[0].mxu0
    %v1666 = vadd.f32 %v318, %v1665
    %v1667 = vpop.f32.mrb[0].mxu0
    %1668 = vdwg.mxu0
    %1670 = vrot.lane.b32.xlu0 %v1590, 112
    %v1671 = vpop.permute.xlu0 %1670
    %v1672 = vsel %vm330, %v1671, 0
    %1674 = vmatprep.subr.mxu0 0.0
    %1675 = vmatpush1.msra.mxu0 %v311
    %1676 = vmatprep.subr.mxu0 0.0
    %1677 = vmatpush1.msra.mxu0 %v312
    %1678 = vmatprep.subr.mxu0 0.0
    %1679 = vmatpush1.msra.mxu0 0.0
    %1680 = vmatprep.subr.mxu0 0.0
    %1681 = vmatpush1.msra.mxu0 0.0
    %1682 = vmatprep.subr.mxu0 0.0
    %1683 = vmatpush1.msra.mxu0 0.0
    %1684 = vmatprep.subr.mxu0 0.0
    %1685 = vmatpush1.msra.mxu0 0.0
    %1686 = vmatprep.subr.mxu0 0.0
    %1687 = vmatpush1.msra.mxu0 0.0
    %1688 = vmatprep.subr.mxu0 0.0
    %1689 = vmatpush1.msra.mxu0 0.0
    %1690 = vmatprep.subr.mxu0 0.0
    %1691 = vmatpush1.msra.mxu0 0.0
    %1692 = vmatprep.subr.mxu0 0.0
    %1693 = vmatpush1.msra.mxu0 0.0
    %1694 = vmatprep.subr.mxu0 0.0
    %1695 = vmatpush1.msra.mxu0 0.0
    %1696 = vmatprep.subr.mxu0 0.0
    %1697 = vmatpush1.msra.mxu0 0.0
    %1698 = vmatprep.subr.mxu0 0.0
    %1699 = vmatpush1.msra.mxu0 0.0
    %1700 = vmatprep.subr.mxu0 0.0
    %1701 = vmatpush1.msra.mxu0 0.0
    %1702 = vmatprep.subr.mxu0 0.0
    %1703 = vmatpush1.msra.mxu0 0.0
    %1704 = vmatprep.subr.mxu0 0.0
    %1705 = vmatpush1.msra.mxu0 0.0
    %1706 = vmatprep.subr.mxu0 0.0
    %1707 = vmatpush1.msra.mxu0 0.0
    %1708 = vmatprep.subr.mxu0 0.0
    %1709 = vmatpush1.msra.mxu0 0.0
    %1710 = vmatprep.subr.mxu0 0.0
    %1711 = vmatpush1.msra.mxu0 0.0
    %1712 = vmatprep.subr.mxu0 0.0
    %1713 = vmatpush1.msra.mxu0 0.0
    %1714 = vmatprep.subr.mxu0 0.0
    %1715 = vmatpush1.msra.mxu0 0.0
    %1716 = vmatprep.subr.mxu0 0.0
    %1717 = vmatpush1.msra.mxu0 0.0
    %1718 = vmatprep.subr.mxu0 0.0
    %1719 = vmatpush1.msra.mxu0 0.0
    %1720 = vmatprep.subr.mxu0 0.0
    %1721 = vmatpush1.msra.mxu0 0.0
    %1722 = vmatprep.subr.mxu0 0.0
    %1723 = vmatpush1.msra.mxu0 0.0
    %1724 = vmatprep.subr.mxu0 0.0
    %1725 = vmatpush1.msra.mxu0 0.0
    %1726 = vmatprep.subr.mxu0 0.0
    %1727 = vmatpush1.msra.mxu0 0.0
    %1728 = vmatprep.subr.mxu0 0.0
    %1729 = vmatpush1.msra.mxu0 0.0
    %1730 = vmatprep.subr.mxu0 0.0
    %1731 = vmatpush1.msra.mxu0 0.0
    %1732 = vmatprep.subr.mxu0 0.0
    %1733 = vmatpush1.msra.mxu0 0.0
    %1734 = vmatprep.subr.mxu0 0.0
    %1735 = vmatpush1.msra.mxu0 0.0
    %1736 = vmatprep.subr.mxu0 0.0
    %1737 = vmatpush1.msra.mxu0 0.0
    %1738 = vmatprep.mubr.f32.mxu0 0.0
    %1739 = vmatmul.mubr.f32.gmra.mrb[0].mxu0 %v1672
    %v1740 = vpop.f32.mrb[0].mxu0
    %v1741 = vadd.f32 %v325, %v1740
    %v1742 = vpop.f32.mrb[0].mxu0
    %1743 = vdwg.mxu0
    %s1744 = scalar_lea.vmem [#allocation2], 48
    %v1745 = vld [vmem:[%s1744] sm:$0xff]
    %v1746 = vadd.f32 %v1745, %v1666
    %v1747 = vxor.u32 %v1746, 2147483648
    %v1748 = vmul.f32 %v1747, 1.442695
    %v1749 = vpow.pop %v1748
    %v1750 = vadd.f32 %v1749, 1.0
    %v1751 = vrcp.pop %v1750
    %v1752 = vmul.f32 1.0, %v1751
    %1754 = vrot.lane.b32.xlu0 %v1666, 96
    %v1755 = vpop.permute.xlu0 %1754
    %v1757 = vmul.f32 %v1752, %v1755
    %1759 = vrot.lane.b32.xlu0 %v1757, 32
    %v1760 = vpop.permute.xlu0 %1759
    %v1762 = vadd.f32 %v1745, %v1760
    %v1763 = vtanh.pop %v1762
    %v1764 = vsub.f32 1.0, %v1752
    %1766 = vrot.lane.b32.xlu0 %v1763, 112
    %v1767 = vpop.permute.xlu0 %1766
    %v1769 = vmul.f32 %v1764, %v1767
    %v1770 = vmul.f32 %v1752, %v1562
    %v1771 = vadd.f32 %v1769, %v1770
    %s1772 = scalar_lea.vmem [#allocation3], 8
    %v1773 = vld [vmem:[%s1772] sm:$0xff]
    %v1774 = vadd.f32 %v1773, %v1741
    %v1775 = vxor.u32 %v1774, 2147483648
    %v1776 = vmul.f32 %v1775, 1.442695
    %v1777 = vpow.pop %v1776
    %v1778 = vadd.f32 %v1777, 1.0
    %v1779 = vrcp.pop %v1778
    %v1780 = vmul.f32 1.0, %v1779
    %1782 = vrot.lane.b32.xlu0 %v1741, 96
    %v1783 = vpop.permute.xlu0 %1782
    %v1785 = vmul.f32 %v1780, %v1783
    %1787 = vrot.lane.b32.xlu0 %v1785, 32
    %v1788 = vpop.permute.xlu0 %1787
    %v1790 = vadd.f32 %v1773, %v1788
    %v1791 = vtanh.pop %v1790
    %v1792 = vsub.f32 1.0, %v1780
    %1794 = vrot.lane.b32.xlu0 %v1791, 112
    %v1795 = vpop.permute.xlu0 %1794
    %v1797 = vmul.f32 %v1792, %v1795
    %v1798 = vmul.f32 %v1780, %v1590
    %v1799 = vadd.f32 %v1797, %v1798
    %1801 = vrot.lane.b32.xlu0 %v1771, 112
    %v1802 = vpop.permute.xlu0 %1801
    %1804 = vst.msk [vmem:[%s755] sm:$0xff] %vm330, %v1802
    %1805 = vst.msk [vmem:[%s753] sm:$0xff] %vm544, %v1799
    %v1806 = vsel %vm330, %v1802, 0
    %1808 = vmatprep.subr.mxu0 0.0
    %1809 = vmatpush1.msra.mxu0 %v309
    %1810 = vmatprep.subr.mxu0 0.0
    %1811 = vmatpush1.msra.mxu0 %v310
    %1812 = vmatprep.subr.mxu0 0.0
    %1813 = vmatpush1.msra.mxu0 0.0
    %1814 = vmatprep.subr.mxu0 0.0
    %1815 = vmatpush1.msra.mxu0 0.0
    %1816 = vmatprep.subr.mxu0 0.0
    %1817 = vmatpush1.msra.mxu0 0.0
    %1818 = vmatprep.subr.mxu0 0.0
    %1819 = vmatpush1.msra.mxu0 0.0
    %1820 = vmatprep.subr.mxu0 0.0
    %1821 = vmatpush1.msra.mxu0 0.0
    %1822 = vmatprep.subr.mxu0 0.0
    %1823 = vmatpush1.msra.mxu0 0.0
    %1824 = vmatprep.subr.mxu0 0.0
    %1825 = vmatpush1.msra.mxu0 0.0
    %1826 = vmatprep.subr.mxu0 0.0
    %1827 = vmatpush1.msra.mxu0 0.0
    %1828 = vmatprep.subr.mxu0 0.0
    %1829 = vmatpush1.msra.mxu0 0.0
    %1830 = vmatprep.subr.mxu0 0.0
    %1831 = vmatpush1.msra.mxu0 0.0
    %1832 = vmatprep.subr.mxu0 0.0
    %1833 = vmatpush1.msra.mxu0 0.0
    %1834 = vmatprep.subr.mxu0 0.0
    %1835 = vmatpush1.msra.mxu0 0.0
    %1836 = vmatprep.subr.mxu0 0.0
    %1837 = vmatpush1.msra.mxu0 0.0
    %1838 = vmatprep.subr.mxu0 0.0
    %1839 = vmatpush1.msra.mxu0 0.0
    %1840 = vmatprep.subr.mxu0 0.0
    %1841 = vmatpush1.msra.mxu0 0.0
    %1842 = vmatprep.subr.mxu0 0.0
    %1843 = vmatpush1.msra.mxu0 0.0
    %1844 = vmatprep.subr.mxu0 0.0
    %1845 = vmatpush1.msra.mxu0 0.0
    %1846 = vmatprep.subr.mxu0 0.0
    %1847 = vmatpush1.msra.mxu0 0.0
    %1848 = vmatprep.subr.mxu0 0.0
    %1849 = vmatpush1.msra.mxu0 0.0
    %1850 = vmatprep.subr.mxu0 0.0
    %1851 = vmatpush1.msra.mxu0 0.0
    %1852 = vmatprep.subr.mxu0 0.0
    %1853 = vmatpush1.msra.mxu0 0.0
    %1854 = vmatprep.subr.mxu0 0.0
    %1855 = vmatpush1.msra.mxu0 0.0
    %1856 = vmatprep.subr.mxu0 0.0
    %1857 = vmatpush1.msra.mxu0 0.0
    %1858 = vmatprep.subr.mxu0 0.0
    %1859 = vmatpush1.msra.mxu0 0.0
    %1860 = vmatprep.subr.mxu0 0.0
    %1861 = vmatpush1.msra.mxu0 0.0
    %1862 = vmatprep.subr.mxu0 0.0
    %1863 = vmatpush1.msra.mxu0 0.0
    %1864 = vmatprep.subr.mxu0 0.0
    %1865 = vmatpush1.msra.mxu0 0.0
    %1866 = vmatprep.subr.mxu0 0.0
    %1867 = vmatpush1.msra.mxu0 0.0
    %1868 = vmatprep.subr.mxu0 0.0
    %1869 = vmatpush1.msra.mxu0 0.0
    %1870 = vmatprep.subr.mxu0 0.0
    %1871 = vmatpush1.msra.mxu0 0.0
    %1872 = vmatprep.mubr.f32.mxu0 0.0
    %1873 = vmatmul.mubr.f32.gmra.mrb[0].mxu0 %v1806
    %v1874 = vpop.f32.mrb[0].mxu0
    %v1875 = vadd.f32 %v318, %v1874
    %v1876 = vpop.f32.mrb[0].mxu0
    %1877 = vdwg.mxu0
    %1879 = vrot.lane.b32.xlu0 %v1799, 112
    %v1880 = vpop.permute.xlu0 %1879
    %v1881 = vsel %vm330, %v1880, 0
    %1883 = vmatprep.subr.mxu0 0.0
    %1884 = vmatpush1.msra.mxu0 %v311
    %1885 = vmatprep.subr.mxu0 0.0
    %1886 = vmatpush1.msra.mxu0 %v312
    %1887 = vmatprep.subr.mxu0 0.0
    %1888 = vmatpush1.msra.mxu0 0.0
    %1889 = vmatprep.subr.mxu0 0.0
    %1890 = vmatpush1.msra.mxu0 0.0
    %1891 = vmatprep.subr.mxu0 0.0
    %1892 = vmatpush1.msra.mxu0 0.0
    %1893 = vmatprep.subr.mxu0 0.0
    %1894 = vmatpush1.msra.mxu0 0.0
    %1895 = vmatprep.subr.mxu0 0.0
    %1896 = vmatpush1.msra.mxu0 0.0
    %1897 = vmatprep.subr.mxu0 0.0
    %1898 = vmatpush1.msra.mxu0 0.0
    %1899 = vmatprep.subr.mxu0 0.0
    %1900 = vmatpush1.msra.mxu0 0.0
    %1901 = vmatprep.subr.mxu0 0.0
    %1902 = vmatpush1.msra.mxu0 0.0
    %1903 = vmatprep.subr.mxu0 0.0
    %1904 = vmatpush1.msra.mxu0 0.0
    %1905 = vmatprep.subr.mxu0 0.0
    %1906 = vmatpush1.msra.mxu0 0.0
    %1907 = vmatprep.subr.mxu0 0.0
    %1908 = vmatpush1.msra.mxu0 0.0
    %1909 = vmatprep.subr.mxu0 0.0
    %1910 = vmatpush1.msra.mxu0 0.0
    %1911 = vmatprep.subr.mxu0 0.0
    %1912 = vmatpush1.msra.mxu0 0.0
    %1913 = vmatprep.subr.mxu0 0.0
    %1914 = vmatpush1.msra.mxu0 0.0
    %1915 = vmatprep.subr.mxu0 0.0
    %1916 = vmatpush1.msra.mxu0 0.0
    %1917 = vmatprep.subr.mxu0 0.0
    %1918 = vmatpush1.msra.mxu0 0.0
    %1919 = vmatprep.subr.mxu0 0.0
    %1920 = vmatpush1.msra.mxu0 0.0
    %1921 = vmatprep.subr.mxu0 0.0
    %1922 = vmatpush1.msra.mxu0 0.0
    %1923 = vmatprep.subr.mxu0 0.0
    %1924 = vmatpush1.msra.mxu0 0.0
    %1925 = vmatprep.subr.mxu0 0.0
    %1926 = vmatpush1.msra.mxu0 0.0
    %1927 = vmatprep.subr.mxu0 0.0
    %1928 = vmatpush1.msra.mxu0 0.0
    %1929 = vmatprep.subr.mxu0 0.0
    %1930 = vmatpush1.msra.mxu0 0.0
    %1931 = vmatprep.subr.mxu0 0.0
    %1932 = vmatpush1.msra.mxu0 0.0
    %1933 = vmatprep.subr.mxu0 0.0
    %1934 = vmatpush1.msra.mxu0 0.0
    %1935 = vmatprep.subr.mxu0 0.0
    %1936 = vmatpush1.msra.mxu0 0.0
    %1937 = vmatprep.subr.mxu0 0.0
    %1938 = vmatpush1.msra.mxu0 0.0
    %1939 = vmatprep.subr.mxu0 0.0
    %1940 = vmatpush1.msra.mxu0 0.0
    %1941 = vmatprep.subr.mxu0 0.0
    %1942 = vmatpush1.msra.mxu0 0.0
    %1943 = vmatprep.subr.mxu0 0.0
    %1944 = vmatpush1.msra.mxu0 0.0
    %1945 = vmatprep.subr.mxu0 0.0
    %1946 = vmatpush1.msra.mxu0 0.0
    %1947 = vmatprep.mubr.f32.mxu0 0.0
    %1948 = vmatmul.mubr.f32.gmra.mrb[0].mxu0 %v1881
    %v1949 = vpop.f32.mrb[0].mxu0
    %v1950 = vadd.f32 %v325, %v1949
    %v1951 = vpop.f32.mrb[0].mxu0
    %1952 = vdwg.mxu0
    %s1953 = scalar_lea.vmem [#allocation2], 56
    %v1954 = vld [vmem:[%s1953] sm:$0xff]
    %v1955 = vadd.f32 %v1954, %v1875
    %v1956 = vxor.u32 %v1955, 2147483648
    %v1957 = vmul.f32 %v1956, 1.442695
    %v1958 = vpow.pop %v1957
    %v1959 = vadd.f32 %v1958, 1.0
    %v1960 = vrcp.pop %v1959
    %v1961 = vmul.f32 1.0, %v1960
    %1963 = vrot.lane.b32.xlu0 %v1875, 96
    %v1964 = vpop.permute.xlu0 %1963
    %v1966 = vmul.f32 %v1961, %v1964
    %1968 = vrot.lane.b32.xlu0 %v1966, 32
    %v1969 = vpop.permute.xlu0 %1968
    %v1971 = vadd.f32 %v1954, %v1969
    %v1972 = vtanh.pop %v1971
    %v1973 = vsub.f32 1.0, %v1961
    %1975 = vrot.lane.b32.xlu0 %v1972, 112
    %v1976 = vpop.permute.xlu0 %1975
    %v1978 = vmul.f32 %v1973, %v1976
    %v1979 = vmul.f32 %v1961, %v1771
    %v1980 = vadd.f32 %v1978, %v1979
    %v1981 = vld [vmem:[#allocation3] sm:$0xff]
    %v1982 = vadd.f32 %v1981, %v1950
    %v1983 = vxor.u32 %v1982, 2147483648
    %v1984 = vmul.f32 %v1983, 1.442695
    %v1985 = vpow.pop %v1984
    %v1986 = vadd.f32 %v1985, 1.0
    %v1987 = vrcp.pop %v1986
    %v1988 = vmul.f32 1.0, %v1987
    %1990 = vrot.lane.b32.xlu0 %v1950, 96
    %v1991 = vpop.permute.xlu0 %1990
    %v1993 = vmul.f32 %v1988, %v1991
    %1995 = vrot.lane.b32.xlu0 %v1993, 32
    %v1996 = vpop.permute.xlu0 %1995
    %v1998 = vadd.f32 %v1981, %v1996
    %v1999 = vtanh.pop %v1998
    %v2000 = vsub.f32 1.0, %v1988
    %2002 = vrot.lane.b32.xlu0 %v1999, 112
    %v2003 = vpop.permute.xlu0 %2002
    %v2005 = vmul.f32 %v2000, %v2003
    %v2006 = vmul.f32 %v1988, %v1799
    %v2007 = vadd.f32 %v2005, %v2006
    %2009 = vrot.lane.b32.xlu0 %v1980, 112
    %v2010 = vpop.permute.xlu0 %2009
    %2012 = vst.msk [vmem:[%s543] sm:$0xff] %vm330, %v2010
    %2013 = vst.msk [vmem:[#allocation4] sm:$0xff] %vm544, %v2007
    %2014 = vst.msk [vmem:[#allocation15] sm:$0xff] %vm330, %v2010
    %2016 = vrot.lane.b32.xlu0 %v2007, 112
    %v2017 = vpop.permute.xlu0 %2016
    %s2019 = scalar_lea.vmem [#allocation15], 8
    %2020 = vst.msk [vmem:[%s2019] sm:$0xff] %vm330, %v2017
    %v2021 = vld [vmem:[#allocation4] sm:$0xff]
    %v2022 = vld [vmem:[#allocation4 + $0x8] sm:$0xff]
    %v2023 = vld [vmem:[#allocation4 + $0x10] sm:$0xff]
    %v2024 = vld [vmem:[#allocation4 + $0x18] sm:$0xff]
    %v2025 = vld [vmem:[#allocation4 + $0x20] sm:$0xff]
    %v2026 = vld [vmem:[#allocation4 + $0x28] sm:$0xff]
    %v2027 = vld [vmem:[#allocation4 + $0x30] sm:$0xff]
    %v2028 = vld [vmem:[#allocation4 + $0x38] sm:$0xff]
    %v2029 = vld [vmem:[#allocation13] sm:$0xff]
    %v2030 = vld [vmem:[#allocation13 + $0x8] sm:$0xff]
    %v2031 = vld [vmem:[#allocation13 + $0x10] sm:$0xff]
    %v2032 = vld [vmem:[#allocation13 + $0x18] sm:$0xff]
    %v2033 = vld [vmem:[%s9] sm:$0x1]
    %v2035 = vlaneseq
    %v2036 = vshrl.u32 %v2035, 7
    %v2037 = vsub.s32 0, %v2036
    %v2038 = vrot.slane %v2033, %v2037
    %v2041 = vsel %vm130, %v2021, 0
    %v2044 = vsel %vm130, %v2022, 0
    %v2047 = vsel %vm130, %v2023, 0
    %v2050 = vsel %vm130, %v2024, 0
    %v2053 = vsel %vm130, %v2025, 0
    %v2056 = vsel %vm130, %v2026, 0
    %v2059 = vsel %vm130, %v2027, 0
    %v2062 = vsel %vm130, %v2028, 0
    %2064 = vmatprep.subr.mxu0 0.0
    %2065 = vmatpush1.msra.mxu0 %v2029
    %2066 = vmatprep.subr.mxu0 0.0
    %2067 = vmatpush1.msra.mxu0 %v2030
    %2068 = vmatprep.subr.mxu0 0.0
    %2069 = vmatpush1.msra.mxu0 %v2031
    %2070 = vmatprep.subr.mxu0 0.0
    %2071 = vmatpush1.msra.mxu0 %v2032
    %2072 = vmatprep.subr.mxu0 0.0
    %2073 = vmatpush1.msra.mxu0 0.0
    %2074 = vmatprep.subr.mxu0 0.0
    %2075 = vmatpush1.msra.mxu0 0.0
    %2076 = vmatprep.subr.mxu0 0.0
    %2077 = vmatpush1.msra.mxu0 0.0
    %2078 = vmatprep.subr.mxu0 0.0
    %2079 = vmatpush1.msra.mxu0 0.0
    %2080 = vmatprep.subr.mxu0 0.0
    %2081 = vmatpush1.msra.mxu0 0.0
    %2082 = vmatprep.subr.mxu0 0.0
    %2083 = vmatpush1.msra.mxu0 0.0
    %2084 = vmatprep.subr.mxu0 0.0
    %2085 = vmatpush1.msra.mxu0 0.0
    %2086 = vmatprep.subr.mxu0 0.0
    %2087 = vmatpush1.msra.mxu0 0.0
    %2088 = vmatprep.subr.mxu0 0.0
    %2089 = vmatpush1.msra.mxu0 0.0
    %2090 = vmatprep.subr.mxu0 0.0
    %2091 = vmatpush1.msra.mxu0 0.0
    %2092 = vmatprep.subr.mxu0 0.0
    %2093 = vmatpush1.msra.mxu0 0.0
    %2094 = vmatprep.subr.mxu0 0.0
    %2095 = vmatpush1.msra.mxu0 0.0
    %2096 = vmatprep.subr.mxu0 0.0
    %2097 = vmatpush1.msra.mxu0 0.0
    %2098 = vmatprep.subr.mxu0 0.0
    %2099 = vmatpush1.msra.mxu0 0.0
    %2100 = vmatprep.subr.mxu0 0.0
    %2101 = vmatpush1.msra.mxu0 0.0
    %2102 = vmatprep.subr.mxu0 0.0
    %2103 = vmatpush1.msra.mxu0 0.0
    %2104 = vmatprep.subr.mxu0 0.0
    %2105 = vmatpush1.msra.mxu0 0.0
    %2106 = vmatprep.subr.mxu0 0.0
    %2107 = vmatpush1.msra.mxu0 0.0
    %2108 = vmatprep.subr.mxu0 0.0
    %2109 = vmatpush1.msra.mxu0 0.0
    %2110 = vmatprep.subr.mxu0 0.0
    %2111 = vmatpush1.msra.mxu0 0.0
    %2112 = vmatprep.subr.mxu0 0.0
    %2113 = vmatpush1.msra.mxu0 0.0
    %2114 = vmatprep.subr.mxu0 0.0
    %2115 = vmatpush1.msra.mxu0 0.0
    %2116 = vmatprep.subr.mxu0 0.0
    %2117 = vmatpush1.msra.mxu0 0.0
    %2118 = vmatprep.subr.mxu0 0.0
    %2119 = vmatpush1.msra.mxu0 0.0
    %2120 = vmatprep.subr.mxu0 0.0
    %2121 = vmatpush1.msra.mxu0 0.0
    %2122 = vmatprep.subr.mxu0 0.0
    %2123 = vmatpush1.msra.mxu0 0.0
    %2124 = vmatprep.subr.mxu0 0.0
    %2125 = vmatpush1.msra.mxu0 0.0
    %2126 = vmatprep.subr.mxu0 0.0
    %2127 = vmatpush1.msra.mxu0 0.0
    %2128 = vmatprep.mubr.f32.mxu0 0.0
    %2129 = vmatmul.mubr.f32.gmra.mrb[0].mxu0 %v2041
    %v2130 = vpop.f32.mrb[0].mxu0
    %v2131 = vadd.f32 %v2038, %v2130
    %v2132 = vpop.f32.mrb[0].mxu0
    %2133 = vmatprep.mubr.f32.mxu0 0.0
    %2134 = vmatmul.mubr.f32.gmra.mrb[0].mxu0 %v2044
    %v2135 = vpop.f32.mrb[0].mxu0
    %v2136 = vadd.f32 %v2038, %v2135
    %v2137 = vpop.f32.mrb[0].mxu0
    %2138 = vmatprep.mubr.f32.mxu0 0.0
    %2139 = vmatmul.mubr.f32.gmra.mrb[0].mxu0 %v2047
    %v2140 = vpop.f32.mrb[0].mxu0
    %v2141 = vadd.f32 %v2038, %v2140
    %v2142 = vpop.f32.mrb[0].mxu0
    %2143 = vmatprep.mubr.f32.mxu0 0.0
    %2144 = vmatmul.mubr.f32.gmra.mrb[0].mxu0 %v2050
    %v2145 = vpop.f32.mrb[0].mxu0
    %v2146 = vadd.f32 %v2038, %v2145
    %v2147 = vpop.f32.mrb[0].mxu0
    %2148 = vmatprep.mubr.f32.mxu0 0.0
    %2149 = vmatmul.mubr.f32.gmra.mrb[0].mxu0 %v2053
    %v2150 = vpop.f32.mrb[0].mxu0
    %v2151 = vadd.f32 %v2038, %v2150
    %v2152 = vpop.f32.mrb[0].mxu0
    %2153 = vmatprep.mubr.f32.mxu0 0.0
    %2154 = vmatmul.mubr.f32.gmra.mrb[0].mxu0 %v2056
    %v2155 = vpop.f32.mrb[0].mxu0
    %v2156 = vadd.f32 %v2038, %v2155
    %v2157 = vpop.f32.mrb[0].mxu0
    %2158 = vmatprep.mubr.f32.mxu0 0.0
    %2159 = vmatmul.mubr.f32.gmra.mrb[0].mxu0 %v2059
    %v2160 = vpop.f32.mrb[0].mxu0
    %v2161 = vadd.f32 %v2038, %v2160
    %v2162 = vpop.f32.mrb[0].mxu0
    %2163 = vmatprep.mubr.f32.mxu0 0.0
    %2164 = vmatmul.mubr.f32.gmra.mrb[0].mxu0 %v2062
    %v2165 = vpop.f32.mrb[0].mxu0
    %v2166 = vadd.f32 %v2038, %v2165
    %v2167 = vpop.f32.mrb[0].mxu0
    %2168 = vdwg.mxu0
    %v2169 = vtanh.pop %v2131
    %v2170 = vtanh.pop %v2136
    %v2171 = vtanh.pop %v2141
    %v2172 = vtanh.pop %v2146
    %v2173 = vtanh.pop %v2151
    %v2174 = vtanh.pop %v2156
    %v2175 = vtanh.pop %v2161
    %v2176 = vtanh.pop %v2166
    %v2177 = vld [vmem:[%s10] sm:$0x1]
    %v2179 = vlaneseq
    %v2180 = vshrl.u32 %v2179, 7
    %v2181 = vsub.s32 0, %v2180
    %v2182 = vrot.slane %v2177, %v2181
    %v2184 = vmul.f32 %v2169, %v2182
    %v2185 = vmul.f32 %v2170, %v2182
    %v2186 = vmul.f32 %v2171, %v2182
    %v2187 = vmul.f32 %v2172, %v2182
    %v2188 = vmul.f32 %v2173, %v2182
    %v2189 = vmul.f32 %v2174, %v2182
    %v2190 = vmul.f32 %v2175, %v2182
    %v2191 = vmul.f32 %v2176, %v2182
    %v2192 = vsel %vm130, %v2184, 0.0
    %2193 = vadd.xlane.f32.xlu0 %v2192
    %v2194 = vpop.xlane.xlu0 %2193
    %v2195 = vsel %vm130, %v2185, 0.0
    %2196 = vadd.xlane.f32.xlu0 %v2195
    %v2197 = vpop.xlane.xlu0 %2196
    %v2198 = vsel %vm130, %v2186, 0.0
    %2199 = vadd.xlane.f32.xlu0 %v2198
    %v2200 = vpop.xlane.xlu0 %2199
    %v2201 = vsel %vm130, %v2187, 0.0
    %2202 = vadd.xlane.f32.xlu0 %v2201
    %v2203 = vpop.xlane.xlu0 %2202
    %v2204 = vsel %vm130, %v2188, 0.0
    %2205 = vadd.xlane.f32.xlu0 %v2204
    %v2206 = vpop.xlane.xlu0 %2205
    %v2207 = vsel %vm130, %v2189, 0.0
    %2208 = vadd.xlane.f32.xlu0 %v2207
    %v2209 = vpop.xlane.xlu0 %2208
    %v2210 = vsel %vm130, %v2190, 0.0
    %2211 = vadd.xlane.f32.xlu0 %v2210
    %v2212 = vpop.xlane.xlu0 %2211
    %v2213 = vsel %vm130, %v2191, 0.0
    %2214 = vadd.xlane.f32.xlu0 %v2213
    %v2215 = vpop.xlane.xlu0 %2214
    %v2224 = vlaneseq
    %v2225 = vand.u32 %v2224, 127
    %v2226 = vlaneseq
    %v2227 = vshrl.u32 %v2226, 7
    %v2228 = vsub.s32 %v2225, %v2227
    %v2229 = vrot.slane %v2194, %v2228
    %v2230 = vlaneseq
    %v2231 = vshrl.u32 %v2230, 7
    %v2232 = vsub.s32 %v2225, %v2231
    %v2233 = vrot.slane %v2197, %v2232
    %v2234 = vlaneseq
    %v2235 = vshrl.u32 %v2234, 7
    %v2236 = vsub.s32 %v2225, %v2235
    %v2237 = vrot.slane %v2200, %v2236
    %v2238 = vlaneseq
    %v2239 = vshrl.u32 %v2238, 7
    %v2240 = vsub.s32 %v2225, %v2239
    %v2241 = vrot.slane %v2203, %v2240
    %v2242 = vlaneseq
    %v2243 = vshrl.u32 %v2242, 7
    %v2244 = vsub.s32 %v2225, %v2243
    %v2245 = vrot.slane %v2206, %v2244
    %v2246 = vlaneseq
    %v2247 = vshrl.u32 %v2246, 7
    %v2248 = vsub.s32 %v2225, %v2247
    %v2249 = vrot.slane %v2209, %v2248
    %v2250 = vlaneseq
    %v2251 = vshrl.u32 %v2250, 7
    %v2252 = vsub.s32 %v2225, %v2251
    %v2253 = vrot.slane %v2212, %v2252
    %v2254 = vlaneseq
    %v2255 = vshrl.u32 %v2254, 7
    %v2256 = vsub.s32 %v2225, %v2255
    %v2257 = vrot.slane %v2215, %v2256
    %vm2258 = vcmask 1041409
    %v2259 = vsel %vm2258, %v2233, %v2229
    %vm2260 = vcmask 1042434
    %v2261 = vsel %vm2260, %v2237, %v2259
    %vm2262 = vcmask 1043459
    %v2263 = vsel %vm2262, %v2241, %v2261
    %vm2264 = vcmask 1044484
    %v2265 = vsel %vm2264, %v2245, %v2263
    %vm2266 = vcmask 1045509
    %v2267 = vsel %vm2266, %v2249, %v2265
    %vm2268 = vcmask 1046534
    %v2269 = vsel %vm2268, %v2253, %v2267
    %vm2270 = vcmask 1047559
    %v2271 = vsel %vm2270, %v2257, %v2269
    %2273 = vxpose.xlu0.b32.start [1/16] %v2271, 128
    %2274 = vxpose.xlu0.b32.cont [2/16] 0.0, 128
    %2275 = vxpose.xlu0.b32.cont [3/16] 0.0, 128
    %2276 = vxpose.xlu0.b32.cont [4/16] 0.0, 128
    %2277 = vxpose.xlu0.b32.cont [5/16] 0.0, 128
    %2278 = vxpose.xlu0.b32.cont [6/16] 0.0, 128
    %2279 = vxpose.xlu0.b32.cont [7/16] 0.0, 128
    %2280 = vxpose.xlu0.b32.cont [8/16] 0.0, 128
    %2281 = vxpose.xlu0.b32.cont [9/16] 0.0, 128
    %2282 = vxpose.xlu0.b32.cont [10/16] 0.0, 128
    %2283 = vxpose.xlu0.b32.cont [11/16] 0.0, 128
    %2284 = vxpose.xlu0.b32.cont [12/16] 0.0, 128
    %2285 = vxpose.xlu0.b32.cont [13/16] 0.0, 128
    %2286 = vxpose.xlu0.b32.cont [14/16] 0.0, 128
    %2287 = vxpose.xlu0.b32.cont [15/16] 0.0, 128
    %2288 = vxpose.xlu0.b32.end [16/16] 0.0, 128
    %v2289 = vpop.trf.xlu0
    %v2290 = vpop.trf.xlu0
    %v2291 = vpop.trf.xlu0
    %v2292 = vpop.trf.xlu0
    %v2293 = vpop.trf.xlu0
    %v2294 = vpop.trf.xlu0
    %v2295 = vpop.trf.xlu0
    %v2296 = vpop.trf.xlu0
    %v2297 = vpop.trf.xlu0
    %v2298 = vpop.trf.xlu0
    %v2299 = vpop.trf.xlu0
    %v2300 = vpop.trf.xlu0
    %v2301 = vpop.trf.xlu0
    %v2302 = vpop.trf.xlu0
    %v2303 = vpop.trf.xlu0
    %v2304 = vpop.trf.xlu0
    %vm2305 = vcmask 64512
    %v2306 = vsel %vm2305, %v2289, -inf
    %2307 = vmax.xlane.f32.xlu0 %v2306
    %v2308 = vpop.xlane.xlu0 %2307
    %v2309 = vsub.f32 %v2289, %v2308
    %v2310 = vmul.f32 %v2309, 1.442695
    %v2311 = vpow.pop %v2310
    %v2312 = vsel %vm2305, %v2311, 0.0
    %2313 = vadd.xlane.f32.xlu0 %v2312
    %v2314 = vpop.xlane.xlu0 %2313
    %v2315 = vrcp.pop %v2314
    %v2316 = vmul.f32 %v2311, %v2315
    %2317 = vst.msk [vmem:[#allocation17] sm:$0xff] %vm2305, %v2316
    %2318 = vxpose.xlu0.b32.start [1/16] %v2316, 128
    %2319 = vxpose.xlu0.b32.cont [2/16] 0.0, 128
    %2320 = vxpose.xlu0.b32.cont [3/16] 0.0, 128
    %2321 = vxpose.xlu0.b32.cont [4/16] 0.0, 128
    %2322 = vxpose.xlu0.b32.cont [5/16] 0.0, 128
    %2323 = vxpose.xlu0.b32.cont [6/16] 0.0, 128
    %2324 = vxpose.xlu0.b32.cont [7/16] 0.0, 128
    %2325 = vxpose.xlu0.b32.cont [8/16] 0.0, 128
    %2326 = vxpose.xlu0.b32.cont [9/16] 0.0, 128
    %2327 = vxpose.xlu0.b32.cont [10/16] 0.0, 128
    %2328 = vxpose.xlu0.b32.cont [11/16] 0.0, 128
    %2329 = vxpose.xlu0.b32.cont [12/16] 0.0, 128
    %2330 = vxpose.xlu0.b32.cont [13/16] 0.0, 128
    %2331 = vxpose.xlu0.b32.cont [14/16] 0.0, 128
    %2332 = vxpose.xlu0.b32.cont [15/16] 0.0, 128
    %2333 = vxpose.xlu0.b32.end [16/16] 0.0, 128
    %v2334 = vpop.trf.xlu0
    %v2335 = vpop.trf.xlu0
    %v2336 = vpop.trf.xlu0
    %v2337 = vpop.trf.xlu0
    %v2338 = vpop.trf.xlu0
    %v2339 = vpop.trf.xlu0
    %v2340 = vpop.trf.xlu0
    %v2341 = vpop.trf.xlu0
    %v2342 = vpop.trf.xlu0
    %v2343 = vpop.trf.xlu0
    %v2344 = vpop.trf.xlu0
    %v2345 = vpop.trf.xlu0
    %v2346 = vpop.trf.xlu0
    %v2347 = vpop.trf.xlu0
    %v2348 = vpop.trf.xlu0
    %v2349 = vpop.trf.xlu0
    %v2350 = vlaneseq
    %v2351 = vshrl.u32 %v2350, 7
    %v2352 = vsub.s32 0, %v2351
    %v2353 = vrot.slane %v2334, %v2352
    %2355 = vbcast.lane.b32.xlu0 %v2353, 256
    %v2356 = vpop.permute.xlu0 %2355
    %v2357 = vlaneseq
    %v2358 = vshrl.u32 %v2357, 7
    %v2359 = vsub.s32 1, %v2358
    %v2360 = vrot.slane %v2334, %v2359
    %2362 = vbcast.lane.b32.xlu0 %v2360, 256
    %v2363 = vpop.permute.xlu0 %2362
    %v2364 = vlaneseq
    %v2365 = vshrl.u32 %v2364, 7
    %v2366 = vsub.s32 2, %v2365
    %v2367 = vrot.slane %v2334, %v2366
    %2369 = vbcast.lane.b32.xlu0 %v2367, 256
    %v2370 = vpop.permute.xlu0 %2369
    %v2371 = vlaneseq
    %v2372 = vshrl.u32 %v2371, 7
    %v2373 = vsub.s32 3, %v2372
    %v2374 = vrot.slane %v2334, %v2373
    %2376 = vbcast.lane.b32.xlu0 %v2374, 256
    %v2377 = vpop.permute.xlu0 %2376
    %v2378 = vlaneseq
    %v2379 = vshrl.u32 %v2378, 7
    %v2380 = vsub.s32 4, %v2379
    %v2381 = vrot.slane %v2334, %v2380
    %2383 = vbcast.lane.b32.xlu0 %v2381, 256
    %v2384 = vpop.permute.xlu0 %2383
    %v2385 = vlaneseq
    %v2386 = vshrl.u32 %v2385, 7
    %v2387 = vsub.s32 5, %v2386
    %v2388 = vrot.slane %v2334, %v2387
    %2390 = vbcast.lane.b32.xlu0 %v2388, 256
    %v2391 = vpop.permute.xlu0 %2390
    %v2392 = vlaneseq
    %v2393 = vshrl.u32 %v2392, 7
    %v2394 = vsub.s32 6, %v2393
    %v2395 = vrot.slane %v2334, %v2394
    %2397 = vbcast.lane.b32.xlu0 %v2395, 256
    %v2398 = vpop.permute.xlu0 %2397
    %v2399 = vlaneseq
    %v2400 = vshrl.u32 %v2399, 7
    %v2401 = vsub.s32 7, %v2400
    %v2402 = vrot.slane %v2334, %v2401
    %2404 = vbcast.lane.b32.xlu0 %v2402, 256
    %v2405 = vpop.permute.xlu0 %2404
    %v2406 = vmul.f32 %v2356, %v2021
    %v2407 = vmul.f32 %v2363, %v2022
    %v2408 = vmul.f32 %v2370, %v2023
    %v2409 = vmul.f32 %v2377, %v2024
    %v2410 = vmul.f32 %v2384, %v2025
    %v2411 = vmul.f32 %v2391, %v2026
    %v2412 = vmul.f32 %v2398, %v2027
    %v2413 = vmul.f32 %v2405, %v2028
    %v2414 = vsel %vm130, %v2406, 0.0
    %v2415 = vsel %vm130, %v2407, 0.0
    %v2416 = vadd.f32 %v2414, %v2415
    %v2417 = vsel %vm130, %v2408, 0.0
    %v2418 = vadd.f32 %v2416, %v2417
    %v2419 = vsel %vm130, %v2409, 0.0
    %v2420 = vadd.f32 %v2418, %v2419
    %v2421 = vsel %vm130, %v2410, 0.0
    %v2422 = vadd.f32 %v2420, %v2421
    %v2423 = vsel %vm130, %v2411, 0.0
    %v2424 = vadd.f32 %v2422, %v2423
    %v2425 = vsel %vm130, %v2412, 0.0
    %v2426 = vadd.f32 %v2424, %v2425
    %v2427 = vsel %vm130, %v2413, 0.0
    %v2428 = vadd.f32 %v2426, %v2427
    %2429 = vst.msk [vmem:[#allocation14] sm:$0xff] %vm130, %v2428
    // Predicated region
    $region66: #{tpu_custom_call.1} parent=1 // pred_check
      _
    $region67: #{tpu_custom_call.1} parent=1 // pred_check_branch
      %2431 = sbr.rel (0) target = $region69
    $region68: #{tpu_custom_call.1} parent=1 // pred_region
      %s2433 = ssub.s32 128, 128
      %2434 = vsyncadd [#allocation7], %s2433
      %s2436 = sshll.u32 [#allocation14], 4
      %s2437 = int_to_ptr.vmem [resolvable:$true] %s2436
      %2439 = dma.vmem_to_hbm [thread:$0]  %s2437, 128, %s11, [#allocation7]
    $region69: #{tpu_custom_call.1} parent=1 // pred_fallthru
      _
    // Predicated region
    $region70: #{tpu_custom_call.1} parent=1 // pred_check
      _
    $region71: #{tpu_custom_call.1} parent=1 // pred_check_branch
      %2441 = sbr.rel (0) target = $region73
    $region72: #{tpu_custom_call.1} parent=1 // pred_region
      %s2443 = ssub.s32 256, 256
      %2444 = vsyncadd [#allocation16], %s2443
      %s2445 = sshll.u32 [#allocation15], 4
      %s2446 = int_to_ptr.vmem [resolvable:$true] %s2445
      %2451 = dma.vmem_to_hbm [thread:$0]  %s2446, 256, %s12, [#allocation16], 128, 128, 8
    $region73: #{tpu_custom_call.1} parent=1 // pred_fallthru
      _
    // Predicated region
    $region74: #{tpu_custom_call.1} parent=1 // pred_check
      _
    $region75: #{tpu_custom_call.1} parent=1 // pred_check_branch
      %2453 = sbr.rel (0) target = $region77
    $region76: #{tpu_custom_call.1} parent=1 // pred_region
      %s2455 = ssub.s32 128, 128
      %2456 = vsyncadd [#allocation16], %s2455
      %s2458 = sshll.u32 [#allocation17], 4
      %s2459 = int_to_ptr.vmem [resolvable:$true] %s2458
      %2461 = dma.vmem_to_hbm [thread:$0]  %s2459, 128, %s13, [#allocation16]
    $region77: #{tpu_custom_call.1} parent=1 // pred_fallthru
      _
    // Predicated region
    $region78: #{tpu_custom_call.1} parent=1 // pred_check
      _
    $region79: #{tpu_custom_call.1} parent=1 // pred_check_branch
      %2463 = sbr.rel (0) target = $region81
    $region80: #{tpu_custom_call.1} parent=1 // pred_region
      %2464 = dma.done [#allocation7], 128
    $region81: #{tpu_custom_call.1} parent=1 // pred_fallthru
      _
    // Predicated region
    $region82: #{tpu_custom_call.1} parent=1 // pred_check
      _
    $region83: #{tpu_custom_call.1} parent=1 // pred_check_branch
      %2466 = sbr.rel (0) target = $region85
    $region84: #{tpu_custom_call.1} parent=1 // pred_region
      %2467 = dma.done [#allocation16], 256
    $region85: #{tpu_custom_call.1} parent=1 // pred_fallthru
      _
    // Predicated region
    $region86: #{tpu_custom_call.1} parent=1 // pred_check
      _
    $region87: #{tpu_custom_call.1} parent=1 // pred_check_branch
      %2469 = sbr.rel (0) target = $region89
    $region88: #{tpu_custom_call.1} parent=1 // pred_region
      %2470 = dma.done [#allocation16], 128
    $region89: #{tpu_custom_call.1} parent=1 // pred_fallthru
      _
    %2471 = vsyncpa [#allocation6], 1
    %2472 = vsyncpa [#allocation9], 1
    %2473 = vsyncpa [#allocation12], 1
    %2474 = vsyncpa [#allocation7], 1
    %2475 = vsyncpa [#allocation16], 1

</llo_original>
